<compile_context>
chip_gen: v7x
topology: tpu7x:2x2x1
jax: 0.10.0
libtpu: 0.0.40
codegen_flags: <defaults>
</compile_context>

<pallas_src>
import jax
import jax.numpy as jnp
import numpy as np
from jax.experimental import pallas as pl
from jax.experimental.pallas import tpu as pltpu

ALPHA = 0.02                     # LeakyReLU negative slope (module's self.alpha)
LN_EPS = 1e-5                    # F.layer_norm default eps
MASK_VAL = -9000000000000000.0   # matches the PyTorch reference
P_HI = jax.lax.Precision.HIGHEST


def _leaky(x):
    # 0 < alpha < 1  ->  LeakyReLU == max(x, alpha * x)  (single vmax)
    return jnp.maximum(x, ALPHA * x)


def _layer_norm(x):
    mean = jnp.mean(x, axis=-1, keepdims=True)
    var = jnp.mean(jnp.square(x - mean), axis=-1, keepdims=True)
    return (x - mean) * jax.lax.rsqrt(var + LN_EPS)


def _gat_net_kernel(x_ref, adj_ref, w1t_ref, wge_ref, w2t_ref, bias_ref, out_ref):
    # x_ref:    (Bt, N, Fin)  padded node features (f32)
    # adj_ref:  (Bt*N, N)     0/1 adjacency, int8; row i is node i's adjacency
    #                         row inside its own graph (graph id = i // N)
    # w1t_ref:  (Fin, H)      fc_layer1 weight^T
    # wge_ref:  (H, H+2)      [ W^T | W^T a1 | W^T a2 ]  (GAT proj., a folded in)
    # w2t_ref:  (H, C)        fc_layer2 weight^T
    # bias_ref: (3, H+2)      row0=[b1,0,0] row1=[b_g, b_g.a1, b_g.a2] row2=[b2,0..]
    # out_ref:  (1, Bt, C)    per-graph log-probabilities
    Bt, N, Fin = x_ref.shape
    M = Bt * N
    H = w1t_ref.shape[1]
    C = w2t_ref.shape[1]

    # ---- fc_layer1 + LayerNorm + LeakyReLU: all M rows in one MXU pass ----
    x = x_ref[...].reshape(M, Fin)
    h = jnp.dot(x, w1t_ref[...], preferred_element_type=jnp.float32)
    h = _leaky(_layer_norm(h + bias_ref[0:1, :H]))

    # ---- GAT projection; attention vectors ride as 2 extra output columns ----
    whe = jnp.dot(h, wge_ref[...], preferred_element_type=jnp.float32)
    whe = whe + bias_ref[1:2, :]                        # (M, H+2)
    wh = whe[:, :H]                                     # (M, H)  = W h + b
    s1 = whe[:, H:H + 1]                                # (M, 1)  = Wh . a1
    s2t = jnp.transpose(whe[:, H + 1:H + 2])            # (1, M)  = (Wh . a2)^T

    # ---- supergraph attention: one lane-dense (M, M) pass for all Bt graphs ----
    e = _leaky(s1 + s2t)                                # (M, M) attention logits

    # Block-diagonal 0/1 adjacency assembled in-kernel; cross-graph entries
    # stay 0 and are masked below, so every supergraph row's softmax equals the
    # per-graph softmax padded with exact zeros.
    adj_rows = adj_ref[...].astype(jnp.float32)         # (M, N)
    if Bt == 1:
        adj_full = adj_rows
    else:
        zero_blk = jnp.zeros((N, N), jnp.float32)
        row_blocks = []
        for b in range(Bt):
            chunk = adj_rows[b * N:(b + 1) * N, :]
            row_blocks.append(jnp.concatenate(
                [chunk if c == b else zero_blk for c in range(Bt)], axis=1))
        adj_full = jnp.concatenate(row_blocks, axis=0)  # (M, M)

    # Replace-with-MASK semantics == PyTorch reference (requires >= 1 edge per
    # row, guaranteed by self-loops; otherwise a fully-masked row would also
    # attend across graphs).
    logits = jnp.where(adj_full != 0.0, e, MASK_VAL)
    logits = logits - jnp.max(logits, axis=-1, keepdims=True)
    p = jnp.exp(logits)
    att = p * pl.reciprocal(jnp.sum(p, axis=-1, keepdims=True), approx=True)

    # bf16 MXU inputs, f32 accumulation for the big aggregation matmul.
    hp = jnp.dot(att.astype(jnp.bfloat16), wh.astype(jnp.bfloat16),
                 preferred_element_type=jnp.float32)    # (M, H)
    hp = _leaky(_layer_norm(hp))

    # ---- per-graph node max-pool + fc_layer2 + log_softmax ----
    pooled = jnp.max(hp.reshape(Bt, N, H), axis=1)      # (Bt, H)
    out = jnp.dot(pooled, w2t_ref[...], preferred_element_type=jnp.float32)
    out = out + bias_ref[2:3, :C]
    out = out - jnp.max(out, axis=-1, keepdims=True)
    out = out - jnp.log(jnp.sum(jnp.exp(out), axis=-1, keepdims=True))
    out_ref[0] = out.astype(out_ref.dtype)


def _row_budget():
    """(max MXU rows per grid step, min # of 'parallel' grid steps) by TPU gen."""
    kind = ""
    try:
        kind = jax.devices()[0].device_kind.lower()
    except Exception:
        pass
    if "v5 lite" in kind or "v5e" in kind or "v5litepod" in kind:
        return 512, 1      # v5e: 4x128x128 MXU; win is fewer grid steps, big VMEM
    if "v7" in kind or "tpu7" in kind or "7x" in kind:
        return 256, 2      # v7x: 256-wide MXU, 2 TCs/chip, 64 MiB VMEM -> keep >=2 steps
    return 256, 1          # v6e and default: 2x256x256 MXU, 1 TC, 128 MiB VMEM


def _default_batch_tile(B, N, row_cap, min_steps):
    """Largest divisor bt of B with bt*N <= row_cap and B//bt >= min_steps."""
    best = 1
    for d in range(1, B + 1):
        if B % d:
            continue
        if d * N > row_cap:
            continue
        if B // d < min_steps:
            continue
        best = d
    return best


def graph_attention_forward(x, adj, params, *, batch_tile=None):
    """x: (B, N, Fin) padded node features; adj: (B, N, N) 0/1 adjacency."""
    B, N, Fin = x.shape
    w1, b1 = params["w1"], params["b1"]
    wg, bg = params["wg"], params["bg"]
    a_w = params["a"]
    w2, b2 = params["w2"], params["b2"]
    H = wg.shape[0]
    C = w2.shape[0]

    row_cap, min_steps = _row_budget()
    bt = batch_tile or _default_batch_tile(B, N, row_cap, min_steps)
    assert B % bt == 0, "batch must be divisible by batch_tile"
    steps = B // bt

    f32 = jnp.float32
    # fc1 / fc2 weights transposed so the kernel never transposes them.
    w1t = w1.T.astype(f32)                                        # (Fin, H)
    w2t = w2.T.astype(f32)                                        # (H, C)
    # Fold a1/a2 into the GAT projection:
    #   [Wh | Wh.a1 | Wh.a2] = h @ [W^T | W^T a1 | W^T a2] + [b | b.a1 | b.a2]
    a1 = a_w[0, :H].astype(f32)
    a2 = a_w[0, H:].astype(f32)
    wgt = wg.T.astype(f32)                                        # (H, H)
    wge = jnp.concatenate(
        [wgt,
         jnp.dot(wgt, a1, precision=P_HI)[:, None],
         jnp.dot(wgt, a2, precision=P_HI)[:, None]], axis=1)      # (H, H+2)
    bge = jnp.concatenate(
        [bg.astype(f32),
         jnp.dot(bg.astype(f32), a1, precision=P_HI)[None],
         jnp.dot(bg.astype(f32), a2, precision=P_HI)[None]])      # (H+2,)
    bias_pack = jnp.zeros((3, H + 2), f32)
    bias_pack = bias_pack.at[0, :H].set(b1.astype(f32))
    bias_pack = bias_pack.at[1, :].set(bge)
    bias_pack = bias_pack.at[2, :C].set(b2.astype(f32))

    # Adjacency goes to the kernel as raw 0/1 int8 rows (1/4 the f32 HBM
    # bytes); the mask is applied on the VPU inside the kernel.
    if adj.dtype != jnp.int8:
        adj = (adj != 0).astype(jnp.int8)
    adj_rows = adj.reshape(B * N, N)

    out = pl.pallas_call(
        _gat_net_kernel,
        out_shape=jax.ShapeDtypeStruct((steps, bt, C), f32),
        grid_spec=pltpu.PrefetchScalarGridSpec(
            num_scalar_prefetch=0,
            grid=(steps,),
            in_specs=[
                pl.BlockSpec((bt, N, Fin), lambda g: (g, 0, 0)),   # node features
                pl.BlockSpec((bt * N, N), lambda g: (g, 0)),       # adjacency rows (int8)
                pl.BlockSpec((Fin, H), lambda g: (0, 0)),          # fc1 weight^T
                pl.BlockSpec((H, H + 2), lambda g: (0, 0)),        # GAT weight^T (ext)
                pl.BlockSpec((H, C), lambda g: (0, 0)),            # fc2 weight^T
                pl.BlockSpec((3, H + 2), lambda g: (0, 0)),        # packed biases
            ],
            out_specs=pl.BlockSpec((1, bt, C), lambda g: (g, 0, 0)),
        ),
        compiler_params=pltpu.CompilerParams(
            dimension_semantics=("parallel",)),
    )(x.astype(f32), adj_rows, w1t, wge, w2t, bias_pack)
    return out.reshape(B, C)


def _reference(x, adj, params):
    """Pure-JAX (f32, HIGHEST precision) mirror of the PyTorch forward."""
    w1, b1 = params["w1"], params["b1"]
    wg, bg = params["wg"], params["bg"]
    a_w = params["a"]
    w2, b2 = params["w2"], params["b2"]
    H = wg.shape[0]

    def ln(v):
        m = jnp.mean(v, axis=-1, keepdims=True)
        var = jnp.mean((v - m) ** 2, axis=-1, keepdims=True)
        return (v - m) / jnp.sqrt(var + LN_EPS)

    def lrelu(v):
        return jnp.where(v > 0, v, ALPHA * v)

    h = jnp.einsum("bnf,hf->bnh", x, w1, precision=P_HI) + b1       # fc_layer1
    h = lrelu(ln(h))
    wh = jnp.einsum("bnf,hf->bnh", h, wg, precision=P_HI) + bg      # GAT.W
    a1, a2 = a_w[0, :H], a_w[0, H:]
    e = jnp.einsum("bnh,h->bn", wh, a1, precision=P_HI)[:, :, None] + \
        jnp.einsum("bnh,h->bn", wh, a2, precision=P_HI)[:, None, :]
    e = lrelu(e)
    att = jnp.where(adj != 0, e, MASK_VAL)
    att = jax.nn.softmax(att, axis=2)
    hp = jnp.einsum("bqk,bkh->bqh", att, wh, precision=P_HI)
    hp = lrelu(ln(hp))
    pooled = jnp.max(hp, axis=1)                                    # node max-pool
    out = jnp.dot(pooled, w2.T, precision=P_HI) + b2                # fc_layer2
    return jax.nn.log_softmax(out, axis=-1)


if __name__ == "__main__":
    # Shapes implied by the module: input_dim=10, GAT width 128, 2 classes.
    B, N = 4, 64
    FIN, H, C = 10, 128, 2

    key = jax.random.PRNGKey(0)
    ks = jax.random.split(key, 9)

    x = jax.random.normal(ks[0], (B, N, FIN), dtype=jnp.float32)
    adj = (jax.random.uniform(ks[1], (B, N, N)) > 0.7).astype(jnp.int8)
    adj = jnp.maximum(adj, jnp.eye(N, dtype=jnp.int8)[None])        # self-loops

    gain = 1.414

    def xavier(k, shape):
        bound = gain * np.sqrt(6.0 / (shape[0] + shape[1]))
        return jax.random.uniform(k, shape, minval=-bound, maxval=bound,
                                  dtype=jnp.float32)

    def lin_default(k, shape, fan_in):
        bound = 1.0 / np.sqrt(fan_in)
        return jax.random.uniform(k, shape, minval=-bound, maxval=bound,
                                  dtype=jnp.float32)

    params = {
        "w1": lin_default(ks[2], (H, FIN), FIN),   # fc_layer1.weight
        "b1": lin_default(ks[3], (H,), FIN),       # fc_layer1.bias
        "wg": xavier(ks[4], (H, H)),               # gats1.W.weight (xavier, gain 1.414)
        "bg": lin_default(ks[5], (H,), H),         # gats1.W.bias
        "a":  xavier(ks[6], (1, 2 * H)),           # gats1.a.weight (bias unused in fwd)
        "w2": lin_default(ks[7], (C, H), H),       # fc_layer2.weight
        "b2": lin_default(ks[8], (C,), H),         # fc_layer2.bias
    }

    out = jax.block_until_ready(graph_attention_forward(x, adj, params))
    ref = jax.block_until_ready(_reference(x, adj, params))

    assert out.shape == (B, C)
    # 1e-2 tolerance covers the bf16-input aggregation matmul and the approx
    # (EUP) softmax reciprocal; everything else in the kernel is f32.
    np.testing.assert_allclose(np.asarray(out), np.asarray(ref),
                               rtol=1e-2, atol=1e-2)
    print("KERNEL_OK")
</pallas_src>

<mosaic_0001>
module attributes {stable_mosaic.version = 11 : i64} {
  func.func @_gat_net_kernel(%arg0: i32, %arg1: memref<4x64x10xf32, #tpu.memory_space<vmem>>, %arg2: memref<256x64xi8, #tpu.memory_space<vmem>>, %arg3: memref<10x128xf32, #tpu.memory_space<vmem>>, %arg4: memref<128x130xf32, #tpu.memory_space<vmem>>, %arg5: memref<128x2xf32, #tpu.memory_space<vmem>>, %arg6: memref<3x130xf32, #tpu.memory_space<vmem>>, %arg7: memref<1x4x2xf32, #tpu.memory_space<vmem>>) attributes {dimension_semantics = [#tpu.dimension_semantics<parallel>], iteration_bounds = array<i64: 1>, scalar_prefetch = 0 : i64, scratch_operands = 0 : i64, tpu.core_type = #tpu.core_type<tc>, window_params = [{transform_indices = @transform_0, window_bounds = array<i64: 4, 64, 10>}, {transform_indices = @transform_1, window_bounds = array<i64: 256, 64>}, {pipeline_mode = #tpu.pipeline_mode<synchronous>, transform_indices = @transform_2, window_bounds = array<i64: 10, 128>}, {pipeline_mode = #tpu.pipeline_mode<synchronous>, transform_indices = @transform_3, window_bounds = array<i64: 128, 130>}, {pipeline_mode = #tpu.pipeline_mode<synchronous>, transform_indices = @transform_4, window_bounds = array<i64: 128, 2>}, {pipeline_mode = #tpu.pipeline_mode<synchronous>, transform_indices = @transform_5, window_bounds = array<i64: 3, 130>}, {transform_indices = @transform_6, window_bounds = array<i64: 1, 4, 2>}]} {
    %c0 = arith.constant 0 : index
    %c0_0 = arith.constant 0 : index
    %c0_1 = arith.constant 0 : index
    %0 = vector.load %arg1[%c0, %c0_0, %c0_1] : memref<4x64x10xf32, #tpu.memory_space<vmem>>, vector<4x64x10xf32>
    %1 = vector.shape_cast %0 : vector<4x64x10xf32> to vector<256x10xf32>
    %c0_2 = arith.constant 0 : index
    %c0_3 = arith.constant 0 : index
    %2 = vector.load %arg3[%c0_2, %c0_3] : memref<10x128xf32, #tpu.memory_space<vmem>>, vector<10x128xf32>
    %cst = arith.constant dense<0.000000e+00> : vector<256x128xf32>
    %3 = tpu.matmul %1, %2, %cst {dimension_numbers = #tpu.dot_dimension_numbers<[1], [0], [0], [1], [0, 0, 1, 1], [], []>} : vector<256x10xf32>, vector<10x128xf32>, vector<256x128xf32> -> vector<256x128xf32>
    %c0_4 = arith.constant 0 : index
    %c0_5 = arith.constant 0 : index
    %4 = vector.load %arg6[%c0_4, %c0_5] : memref<3x130xf32, #tpu.memory_space<vmem>>, vector<1x128xf32>
    %5 = vector.broadcast %4 : vector<1x128xf32> to vector<256x128xf32>
    %6 = arith.addf %3, %5 : vector<256x128xf32>
    %cst_6 = arith.constant dense<0.000000e+00> : vector<256xf32>
    %7 = vector.multi_reduction <add>, %6, %cst_6 [1] : vector<256x128xf32> to vector<256xf32>
    %8 = vector.shape_cast %7 : vector<256xf32> to vector<256x1xf32>
    %cst_7 = arith.constant 1.280000e+02 : f32
    %9 = vector.broadcast %cst_7 : f32 to vector<256x1xf32>
    %10 = arith.divf %8, %9 : vector<256x1xf32>
    %11 = vector.broadcast %10 : vector<256x1xf32> to vector<256x128xf32>
    %12 = arith.subf %6, %11 : vector<256x128xf32>
    %13 = arith.mulf %12, %12 : vector<256x128xf32>
    %cst_8 = arith.constant dense<0.000000e+00> : vector<256xf32>
    %14 = vector.multi_reduction <add>, %13, %cst_8 [1] : vector<256x128xf32> to vector<256xf32>
    %15 = vector.shape_cast %14 : vector<256xf32> to vector<256x1xf32>
    %cst_9 = arith.constant 1.280000e+02 : f32
    %16 = vector.broadcast %cst_9 : f32 to vector<256x1xf32>
    %17 = arith.divf %15, %16 : vector<256x1xf32>
    %18 = vector.broadcast %10 : vector<256x1xf32> to vector<256x128xf32>
    %19 = arith.subf %6, %18 : vector<256x128xf32>
    %cst_10 = arith.constant 9.99999974E-6 : f32
    %20 = vector.broadcast %cst_10 : f32 to vector<256x1xf32>
    %21 = arith.addf %17, %20 : vector<256x1xf32>
    %22 = math.rsqrt %21 : vector<256x1xf32>
    %23 = vector.broadcast %22 : vector<256x1xf32> to vector<256x128xf32>
    %24 = arith.mulf %19, %23 : vector<256x128xf32>
    %cst_11 = arith.constant 2.000000e-02 : f32
    %25 = vector.broadcast %cst_11 : f32 to vector<256x128xf32>
    %26 = arith.mulf %25, %24 : vector<256x128xf32>
    %27 = arith.maximumf %24, %26 : vector<256x128xf32>
    %c0_12 = arith.constant 0 : index
    %c0_13 = arith.constant 0 : index
    %28 = vector.load %arg4[%c0_12, %c0_13] : memref<128x130xf32, #tpu.memory_space<vmem>>, vector<128x130xf32>
    %cst_14 = arith.constant dense<0.000000e+00> : vector<256x130xf32>
    %29 = tpu.matmul %27, %28, %cst_14 {dimension_numbers = #tpu.dot_dimension_numbers<[1], [0], [0], [1], [0, 0, 1, 1], [], []>} : vector<256x128xf32>, vector<128x130xf32>, vector<256x130xf32> -> vector<256x130xf32>
    %c1 = arith.constant 1 : index
    %c0_15 = arith.constant 0 : index
    %30 = vector.load %arg6[%c1, %c0_15] : memref<3x130xf32, #tpu.memory_space<vmem>>, vector<1x130xf32>
    %31 = vector.broadcast %30 : vector<1x130xf32> to vector<256x130xf32>
    %32 = arith.addf %29, %31 : vector<256x130xf32>
    %33 = vector.extract_strided_slice %32 {offsets = [0, 0], sizes = [256, 128], strides = [1, 1]} : vector<256x130xf32> to vector<256x128xf32>
    %34 = vector.extract_strided_slice %32 {offsets = [0, 128], sizes = [256, 1], strides = [1, 1]} : vector<256x130xf32> to vector<256x1xf32>
    %35 = vector.extract_strided_slice %32 {offsets = [0, 129], sizes = [256, 1], strides = [1, 1]} : vector<256x130xf32> to vector<256x1xf32>
    %36 = tpu.transpose %35, [1, 0] : vector<256x1xf32> -> vector<1x256xf32>
    %37 = vector.broadcast %34 : vector<256x1xf32> to vector<256x256xf32>
    %38 = vector.broadcast %36 : vector<1x256xf32> to vector<256x256xf32>
    %39 = arith.addf %37, %38 : vector<256x256xf32>
    %cst_16 = arith.constant 2.000000e-02 : f32
    %40 = vector.broadcast %cst_16 : f32 to vector<256x256xf32>
    %41 = arith.mulf %40, %39 : vector<256x256xf32>
    %42 = arith.maximumf %39, %41 : vector<256x256xf32>
    %c0_17 = arith.constant 0 : index
    %c0_18 = arith.constant 0 : index
    %43 = vector.load %arg2[%c0_17, %c0_18] : memref<256x64xi8, #tpu.memory_space<vmem>>, vector<256x64xi8>
    %44 = arith.sitofp %43 : vector<256x64xi8> to vector<256x64xf32>
    %cst_19 = arith.constant 0.000000e+00 : f32
    %45 = vector.broadcast %cst_19 : f32 to vector<64x64xf32>
    %46 = vector.extract_strided_slice %44 {offsets = [0, 0], sizes = [64, 64], strides = [1, 1]} : vector<256x64xf32> to vector<64x64xf32>
    %47 = tpu.concatenate %46, %45, %45, %45 in 1 : vector<64x64xf32>, vector<64x64xf32>, vector<64x64xf32>, vector<64x64xf32> -> vector<64x256xf32>
    %48 = vector.extract_strided_slice %44 {offsets = [64, 0], sizes = [64, 64], strides = [1, 1]} : vector<256x64xf32> to vector<64x64xf32>
    %49 = tpu.concatenate %45, %48, %45, %45 in 1 : vector<64x64xf32>, vector<64x64xf32>, vector<64x64xf32>, vector<64x64xf32> -> vector<64x256xf32>
    %50 = vector.extract_strided_slice %44 {offsets = [128, 0], sizes = [64, 64], strides = [1, 1]} : vector<256x64xf32> to vector<64x64xf32>
    %51 = tpu.concatenate %45, %45, %50, %45 in 1 : vector<64x64xf32>, vector<64x64xf32>, vector<64x64xf32>, vector<64x64xf32> -> vector<64x256xf32>
    %52 = vector.extract_strided_slice %44 {offsets = [192, 0], sizes = [64, 64], strides = [1, 1]} : vector<256x64xf32> to vector<64x64xf32>
    %53 = tpu.concatenate %45, %45, %45, %52 in 1 : vector<64x64xf32>, vector<64x64xf32>, vector<64x64xf32>, vector<64x64xf32> -> vector<64x256xf32>
    %54 = tpu.concatenate %47, %49, %51, %53 in 0 : vector<64x256xf32>, vector<64x256xf32>, vector<64x256xf32>, vector<64x256xf32> -> vector<256x256xf32>
    %cst_20 = arith.constant 0.000000e+00 : f32
    %55 = vector.broadcast %cst_20 : f32 to vector<256x256xf32>
    %56 = arith.cmpf one, %54, %55 : vector<256x256xf32>
    %cst_21 = arith.constant -9.000000e+15 : f32
    %57 = vector.broadcast %cst_21 : f32 to vector<256x256xf32>
    %58 = arith.select %56, %42, %57 : vector<256x256xi1>, vector<256x256xf32>
    %cst_22 = arith.constant dense<0xFF800000> : vector<256xf32>
    %59 = vector.multi_reduction <maximumf>, %58, %cst_22 [1] : vector<256x256xf32> to vector<256xf32>
    %60 = vector.shape_cast %59 : vector<256xf32> to vector<256x1xf32>
    %61 = vector.broadcast %60 : vector<256x1xf32> to vector<256x256xf32>
    %62 = arith.subf %58, %61 : vector<256x256xf32>
    %63 = math.exp %62 : vector<256x256xf32>
    %cst_23 = arith.constant dense<0.000000e+00> : vector<256xf32>
    %64 = vector.multi_reduction <add>, %63, %cst_23 [1] : vector<256x256xf32> to vector<256xf32>
    %65 = vector.shape_cast %64 : vector<256xf32> to vector<256x1xf32>
    %66 = tpu.reciprocal %65 {approx = true} : vector<256x1xf32> -> vector<256x1xf32>
    %67 = vector.broadcast %66 : vector<256x1xf32> to vector<256x256xf32>
    %68 = arith.mulf %63, %67 : vector<256x256xf32>
    %69 = arith.truncf %68 : vector<256x256xf32> to vector<256x256xbf16>
    %70 = arith.truncf %33 : vector<256x128xf32> to vector<256x128xbf16>
    %cst_24 = arith.constant dense<0.000000e+00> : vector<256x128xf32>
    %71 = tpu.matmul %69, %70, %cst_24 {dimension_numbers = #tpu.dot_dimension_numbers<[1], [0], [0], [1], [0, 0, 1, 1], [], []>} : vector<256x256xbf16>, vector<256x128xbf16>, vector<256x128xf32> -> vector<256x128xf32>
    %cst_25 = arith.constant dense<0.000000e+00> : vector<256xf32>
    %72 = vector.multi_reduction <add>, %71, %cst_25 [1] : vector<256x128xf32> to vector<256xf32>
    %73 = vector.shape_cast %72 : vector<256xf32> to vector<256x1xf32>
    %cst_26 = arith.constant 1.280000e+02 : f32
    %74 = vector.broadcast %cst_26 : f32 to vector<256x1xf32>
    %75 = arith.divf %73, %74 : vector<256x1xf32>
    %76 = vector.broadcast %75 : vector<256x1xf32> to vector<256x128xf32>
    %77 = arith.subf %71, %76 : vector<256x128xf32>
    %78 = arith.mulf %77, %77 : vector<256x128xf32>
    %cst_27 = arith.constant dense<0.000000e+00> : vector<256xf32>
    %79 = vector.multi_reduction <add>, %78, %cst_27 [1] : vector<256x128xf32> to vector<256xf32>
    %80 = vector.shape_cast %79 : vector<256xf32> to vector<256x1xf32>
    %cst_28 = arith.constant 1.280000e+02 : f32
    %81 = vector.broadcast %cst_28 : f32 to vector<256x1xf32>
    %82 = arith.divf %80, %81 : vector<256x1xf32>
    %83 = vector.broadcast %75 : vector<256x1xf32> to vector<256x128xf32>
    %84 = arith.subf %71, %83 : vector<256x128xf32>
    %cst_29 = arith.constant 9.99999974E-6 : f32
    %85 = vector.broadcast %cst_29 : f32 to vector<256x1xf32>
    %86 = arith.addf %82, %85 : vector<256x1xf32>
    %87 = math.rsqrt %86 : vector<256x1xf32>
    %88 = vector.broadcast %87 : vector<256x1xf32> to vector<256x128xf32>
    %89 = arith.mulf %84, %88 : vector<256x128xf32>
    %cst_30 = arith.constant 2.000000e-02 : f32
    %90 = vector.broadcast %cst_30 : f32 to vector<256x128xf32>
    %91 = arith.mulf %90, %89 : vector<256x128xf32>
    %92 = arith.maximumf %89, %91 : vector<256x128xf32>
    %93 = vector.shape_cast %92 : vector<256x128xf32> to vector<4x64x128xf32>
    %cst_31 = arith.constant dense<0xFF800000> : vector<4x128xf32>
    %94 = vector.multi_reduction <maximumf>, %93, %cst_31 [1] : vector<4x64x128xf32> to vector<4x128xf32>
    %c0_32 = arith.constant 0 : index
    %c0_33 = arith.constant 0 : index
    %95 = vector.load %arg5[%c0_32, %c0_33] : memref<128x2xf32, #tpu.memory_space<vmem>>, vector<128x2xf32>
    %cst_34 = arith.constant dense<0.000000e+00> : vector<4x2xf32>
    %96 = tpu.matmul %94, %95, %cst_34 {dimension_numbers = #tpu.dot_dimension_numbers<[1], [0], [0], [1], [0, 0, 1, 1], [], []>} : vector<4x128xf32>, vector<128x2xf32>, vector<4x2xf32> -> vector<4x2xf32>
    %c2 = arith.constant 2 : index
    %c0_35 = arith.constant 0 : index
    %97 = vector.load %arg6[%c2, %c0_35] : memref<3x130xf32, #tpu.memory_space<vmem>>, vector<1x2xf32>
    %98 = vector.broadcast %97 : vector<1x2xf32> to vector<4x2xf32>
    %99 = arith.addf %96, %98 : vector<4x2xf32>
    %cst_36 = arith.constant dense<0xFF800000> : vector<4xf32>
    %100 = vector.multi_reduction <maximumf>, %99, %cst_36 [1] : vector<4x2xf32> to vector<4xf32>
    %101 = vector.shape_cast %100 : vector<4xf32> to vector<4x1xf32>
    %102 = vector.broadcast %101 : vector<4x1xf32> to vector<4x2xf32>
    %103 = arith.subf %99, %102 : vector<4x2xf32>
    %104 = math.exp %103 : vector<4x2xf32>
    %cst_37 = arith.constant dense<0.000000e+00> : vector<4xf32>
    %105 = vector.multi_reduction <add>, %104, %cst_37 [1] : vector<4x2xf32> to vector<4xf32>
    %106 = vector.shape_cast %105 : vector<4xf32> to vector<4x1xf32>
    %107 = math.log %106 : vector<4x1xf32>
    %108 = vector.broadcast %107 : vector<4x1xf32> to vector<4x2xf32>
    %109 = arith.subf %103, %108 : vector<4x2xf32>
    %c0_38 = arith.constant 0 : index
    %c0_39 = arith.constant 0 : index
    %c0_40 = arith.constant 0 : index
    %110 = vector.load %arg7[%c0_38, %c0_39, %c0_40] : memref<1x4x2xf32, #tpu.memory_space<vmem>>, vector<1x4x2xf32>
    %111 = vector.shape_cast %110 : vector<1x4x2xf32> to vector<4x2xf32>
    %112 = vector.shape_cast %109 : vector<4x2xf32> to vector<1x4x2xf32>
    tpu.vector_store %arg7[%c0_38, %c0_39, %c0_40], %112 {strides = array<i32>} : memref<1x4x2xf32, #tpu.memory_space<vmem>>, vector<1x4x2xf32>,
    return
  }
  func.func @transform_0(%arg0: i32) -> (i32, i32, i32) {
    %c0_i32 = arith.constant 0 : i32
    %c0_i32_0 = arith.constant 0 : i32
    %c0_i32_1 = arith.constant 0 : i32
    return %arg0, %c0_i32, %c0_i32_0 : i32, i32, i32
  }
  func.func @transform_1(%arg0: i32) -> (i32, i32) {
    %c0_i32 = arith.constant 0 : i32
    %c0_i32_0 = arith.constant 0 : i32
    return %arg0, %c0_i32 : i32, i32
  }
  func.func @transform_2(%arg0: i32) -> (i32, i32) {
    %c0_i32 = arith.constant 0 : i32
    %c0_i32_0 = arith.constant 0 : i32
    %c0_i32_1 = arith.constant 0 : i32
    return %c0_i32, %c0_i32_0 : i32, i32
  }
  func.func @transform_3(%arg0: i32) -> (i32, i32) {
    %c0_i32 = arith.constant 0 : i32
    %c0_i32_0 = arith.constant 0 : i32
    %c0_i32_1 = arith.constant 0 : i32
    return %c0_i32, %c0_i32_0 : i32, i32
  }
  func.func @transform_4(%arg0: i32) -> (i32, i32) {
    %c0_i32 = arith.constant 0 : i32
    %c0_i32_0 = arith.constant 0 : i32
    %c0_i32_1 = arith.constant 0 : i32
    return %c0_i32, %c0_i32_0 : i32, i32
  }
  func.func @transform_5(%arg0: i32) -> (i32, i32) {
    %c0_i32 = arith.constant 0 : i32
    %c0_i32_0 = arith.constant 0 : i32
    %c0_i32_1 = arith.constant 0 : i32
    return %c0_i32, %c0_i32_0 : i32, i32
  }
  func.func @transform_6(%arg0: i32) -> (i32, i32, i32) {
    %c0_i32 = arith.constant 0 : i32
    %c0_i32_0 = arith.constant 0 : i32
    %c0_i32_1 = arith.constant 0 : i32
    return %arg0, %c0_i32, %c0_i32_0 : i32, i32, i32
  }
}

</mosaic_0001>

<llo_original>
// kernel: tpu_custom_call.1
$region0: #{tpu_custom_call.1}
  #allocation0 [shape = 'u32[]', space=smem, size = 0x4, offset = 0x4, fixed_abs, tag = 'smem constant byte address 0x4 - core index']
  #allocation1 [shape = 'u32[144,128]{1,0:T(1,128)}', space=vmem, size = 0x12000, scoped, tag = 'internal scratch']
  %s0 = inlined_call_operand.vmem [shape: f32[4,64,10], index: 0, kind: input, shape index: {}]
  %s1 = inlined_call_operand.vmem [shape: s8[256,64], index: 1, kind: input, shape index: {}]
  %s2 = inlined_call_operand.vmem [shape: f32[10,128], index: 2, kind: input, shape index: {}]
  %s3 = inlined_call_operand.vmem [shape: f32[128,130], index: 3, kind: input, shape index: {}]
  %s4 = inlined_call_operand.vmem [shape: f32[128,2], index: 4, kind: input, shape index: {}]
  %s5 = inlined_call_operand.vmem [shape: f32[3,130], index: 5, kind: input, shape index: {}]
  %s6 = inlined_call_operand.vmem [shape: f32[1,4,2], index: 6, kind: output, shape index: {}]
  %s7 = sld [smem:[#allocation0]]
  $region34: #{tpu_custom_call.1} parent=0
    _
  %s9 = ssub.s32 1, %s7
  %s10 = scalar_select 0, %s9, %s7
  // Predicated region
  $region2: #{tpu_custom_call.1} parent=0 // pred_check
    _
  $region3: #{tpu_custom_call.1} parent=0 // pred_check_branch
    %12 = sbr.rel (0) target = $region5
  $region4: #{tpu_custom_call.1} parent=0 // pred_region
    _
  $region5: #{tpu_custom_call.1} parent=0 // pred_fallthru
    _
  // Predicated region
  $region6: #{tpu_custom_call.1} parent=0 // pred_check
    _
  $region7: #{tpu_custom_call.1} parent=0 // pred_check_branch
    %14 = sbr.rel (0) target = $region9
  $region8: #{tpu_custom_call.1} parent=0 // pred_region
    _
  $region9: #{tpu_custom_call.1} parent=0 // pred_fallthru
    _
  // Predicated region
  $region10: #{tpu_custom_call.1} parent=0 // pred_check
    _
  $region11: #{tpu_custom_call.1} parent=0 // pred_check_branch
    %16 = sbr.rel (0) target = $region13
  $region12: #{tpu_custom_call.1} parent=0 // pred_region
    _
  $region13: #{tpu_custom_call.1} parent=0 // pred_fallthru
    _
  // Predicated region
  $region14: #{tpu_custom_call.1} parent=0 // pred_check
    _
  $region15: #{tpu_custom_call.1} parent=0 // pred_check_branch
    %18 = sbr.rel (0) target = $region17
  $region16: #{tpu_custom_call.1} parent=0 // pred_region
    _
  $region17: #{tpu_custom_call.1} parent=0 // pred_fallthru
    _
  // Predicated region
  $region18: #{tpu_custom_call.1} parent=0 // pred_check
    _
  $region19: #{tpu_custom_call.1} parent=0 // pred_check_branch
    %20 = sbr.rel (0) target = $region21
  $region20: #{tpu_custom_call.1} parent=0 // pred_region
    _
  $region21: #{tpu_custom_call.1} parent=0 // pred_fallthru
    _
  // Predicated region
  $region22: #{tpu_custom_call.1} parent=0 // pred_check
    _
  $region23: #{tpu_custom_call.1} parent=0 // pred_check_branch
    %22 = sbr.rel (0) target = $region25
  $region24: #{tpu_custom_call.1} parent=0 // pred_region
    _
  $region25: #{tpu_custom_call.1} parent=0 // pred_fallthru
    _
  %v24 = vld [vmem:[%s0] sm:$0xff]
  %v25 = vld [vmem:[%s0 + $0x8] sm:$0xff]
  %v26 = vld [vmem:[%s0 + $0x10] sm:$0xff]
  %v27 = vld [vmem:[%s0 + $0x18] sm:$0xff]
  %v28 = vld [vmem:[%s0 + $0x20] sm:$0xff]
  %v29 = vld [vmem:[%s0 + $0x28] sm:$0xff]
  %v30 = vld [vmem:[%s0 + $0x30] sm:$0xff]
  %v31 = vld [vmem:[%s0 + $0x38] sm:$0xff]
  %v32 = vld [vmem:[%s0 + $0x40] sm:$0xff]
  %v33 = vld [vmem:[%s0 + $0x48] sm:$0xff]
  %v34 = vld [vmem:[%s0 + $0x50] sm:$0xff]
  %v35 = vld [vmem:[%s0 + $0x58] sm:$0xff]
  %v36 = vld [vmem:[%s0 + $0x60] sm:$0xff]
  %v37 = vld [vmem:[%s0 + $0x68] sm:$0xff]
  %v38 = vld [vmem:[%s0 + $0x70] sm:$0xff]
  %v39 = vld [vmem:[%s0 + $0x78] sm:$0xff]
  %v40 = vld [vmem:[%s0 + $0x80] sm:$0xff]
  %v41 = vld [vmem:[%s0 + $0x88] sm:$0xff]
  %v42 = vld [vmem:[%s0 + $0x90] sm:$0xff]
  %v43 = vld [vmem:[%s0 + $0x98] sm:$0xff]
  %v44 = vld [vmem:[%s0 + $0xa0] sm:$0xff]
  %v45 = vld [vmem:[%s0 + $0xa8] sm:$0xff]
  %v46 = vld [vmem:[%s0 + $0xb0] sm:$0xff]
  %v47 = vld [vmem:[%s0 + $0xb8] sm:$0xff]
  %v48 = vld [vmem:[%s0 + $0xc0] sm:$0xff]
  %v49 = vld [vmem:[%s0 + $0xc8] sm:$0xff]
  %v50 = vld [vmem:[%s0 + $0xd0] sm:$0xff]
  %v51 = vld [vmem:[%s0 + $0xd8] sm:$0xff]
  %v52 = vld [vmem:[%s0 + $0xe0] sm:$0xff]
  %v53 = vld [vmem:[%s0 + $0xe8] sm:$0xff]
  %v54 = vld [vmem:[%s0 + $0xf0] sm:$0xff]
  %v55 = vld [vmem:[%s0 + $0xf8] sm:$0xff]
  %v56 = vld [vmem:[%s2] sm:$0xff]
  %v57 = vld [vmem:[%s2 + $0x8] sm:$0x3]
  %v58 = vld [vmem:[%s5] sm:$0x1]
  %v59 = vlaneseq
  %v60 = vshrl.u32 %v59, 7
  %v61 = vsub.s32 0, %v60
  %v62 = vrot.slane %v58, %v61
  %vm63 = vcmask 80896
  %v65 = vsel %vm63, %v24, 0
  %v68 = vsel %vm63, %v25, 0
  %v71 = vsel %vm63, %v26, 0
  %v74 = vsel %vm63, %v27, 0
  %v77 = vsel %vm63, %v28, 0
  %v80 = vsel %vm63, %v29, 0
  %v83 = vsel %vm63, %v30, 0
  %v86 = vsel %vm63, %v31, 0
  %v89 = vsel %vm63, %v32, 0
  %v92 = vsel %vm63, %v33, 0
  %v95 = vsel %vm63, %v34, 0
  %v98 = vsel %vm63, %v35, 0
  %v101 = vsel %vm63, %v36, 0
  %v104 = vsel %vm63, %v37, 0
  %v107 = vsel %vm63, %v38, 0
  %v110 = vsel %vm63, %v39, 0
  %v113 = vsel %vm63, %v40, 0
  %v116 = vsel %vm63, %v41, 0
  %v119 = vsel %vm63, %v42, 0
  %v122 = vsel %vm63, %v43, 0
  %v125 = vsel %vm63, %v44, 0
  %v128 = vsel %vm63, %v45, 0
  %v131 = vsel %vm63, %v46, 0
  %v134 = vsel %vm63, %v47, 0
  %v137 = vsel %vm63, %v48, 0
  %v140 = vsel %vm63, %v49, 0
  %v143 = vsel %vm63, %v50, 0
  %v146 = vsel %vm63, %v51, 0
  %v149 = vsel %vm63, %v52, 0
  %v152 = vsel %vm63, %v53, 0
  %v155 = vsel %vm63, %v54, 0
  %v158 = vsel %vm63, %v55, 0
  %vm160 = vcmask 1041408
  %v162 = vsel %vm160, %v57, 0
  %164 = vmatprep.subr.mxu0 0.0
  %165 = vmatpush1.msra.mxu0 %v56
  %166 = vmatprep.subr.mxu0 0.0
  %167 = vmatpush1.msra.mxu0 %v162
  %168 = vmatprep.subr.mxu0 0.0
  %169 = vmatpush1.msra.mxu0 0.0
  %170 = vmatprep.subr.mxu0 0.0
  %171 = vmatpush1.msra.mxu0 0.0
  %172 = vmatprep.subr.mxu0 0.0
  %173 = vmatpush1.msra.mxu0 0.0
  %174 = vmatprep.subr.mxu0 0.0
  %175 = vmatpush1.msra.mxu0 0.0
  %176 = vmatprep.subr.mxu0 0.0
  %177 = vmatpush1.msra.mxu0 0.0
  %178 = vmatprep.subr.mxu0 0.0
  %179 = vmatpush1.msra.mxu0 0.0
  %180 = vmatprep.subr.mxu0 0.0
  %181 = vmatpush1.msra.mxu0 0.0
  %182 = vmatprep.subr.mxu0 0.0
  %183 = vmatpush1.msra.mxu0 0.0
  %184 = vmatprep.subr.mxu0 0.0
  %185 = vmatpush1.msra.mxu0 0.0
  %186 = vmatprep.subr.mxu0 0.0
  %187 = vmatpush1.msra.mxu0 0.0
  %188 = vmatprep.subr.mxu0 0.0
  %189 = vmatpush1.msra.mxu0 0.0
  %190 = vmatprep.subr.mxu0 0.0
  %191 = vmatpush1.msra.mxu0 0.0
  %192 = vmatprep.subr.mxu0 0.0
  %193 = vmatpush1.msra.mxu0 0.0
  %194 = vmatprep.subr.mxu0 0.0
  %195 = vmatpush1.msra.mxu0 0.0
  %196 = vmatprep.subr.mxu0 0.0
  %197 = vmatpush1.msra.mxu0 0.0
  %198 = vmatprep.subr.mxu0 0.0
  %199 = vmatpush1.msra.mxu0 0.0
  %200 = vmatprep.subr.mxu0 0.0
  %201 = vmatpush1.msra.mxu0 0.0
  %202 = vmatprep.subr.mxu0 0.0
  %203 = vmatpush1.msra.mxu0 0.0
  %204 = vmatprep.subr.mxu0 0.0
  %205 = vmatpush1.msra.mxu0 0.0
  %206 = vmatprep.subr.mxu0 0.0
  %207 = vmatpush1.msra.mxu0 0.0
  %208 = vmatprep.subr.mxu0 0.0
  %209 = vmatpush1.msra.mxu0 0.0
  %210 = vmatprep.subr.mxu0 0.0
  %211 = vmatpush1.msra.mxu0 0.0
  %212 = vmatprep.subr.mxu0 0.0
  %213 = vmatpush1.msra.mxu0 0.0
  %214 = vmatprep.subr.mxu0 0.0
  %215 = vmatpush1.msra.mxu0 0.0
  %216 = vmatprep.subr.mxu0 0.0
  %217 = vmatpush1.msra.mxu0 0.0
  %218 = vmatprep.subr.mxu0 0.0
  %219 = vmatpush1.msra.mxu0 0.0
  %220 = vmatprep.subr.mxu0 0.0
  %221 = vmatpush1.msra.mxu0 0.0
  %222 = vmatprep.subr.mxu0 0.0
  %223 = vmatpush1.msra.mxu0 0.0
  %224 = vmatprep.subr.mxu0 0.0
  %225 = vmatpush1.msra.mxu0 0.0
  %226 = vmatprep.subr.mxu0 0.0
  %227 = vmatpush1.msra.mxu0 0.0
  %228 = vmatprep.mubr.f32.mxu0 0.0
  %229 = vmatmul.mubr.f32.gmra.mrb[0].mxu0 %v65
  %v230 = vpop.f32.mrb[0].mxu0
  %v231 = vadd.f32 %v62, %v230
  %v232 = vpop.f32.mrb[0].mxu0
  %233 = vmatprep.mubr.f32.mxu0 0.0
  %234 = vmatmul.mubr.f32.gmra.mrb[0].mxu0 %v68
  %v235 = vpop.f32.mrb[0].mxu0
  %v236 = vadd.f32 %v62, %v235
  %v237 = vpop.f32.mrb[0].mxu0
  %238 = vmatprep.mubr.f32.mxu0 0.0
  %239 = vmatmul.mubr.f32.gmra.mrb[0].mxu0 %v71
  %v240 = vpop.f32.mrb[0].mxu0
  %v241 = vadd.f32 %v62, %v240
  %v242 = vpop.f32.mrb[0].mxu0
  %243 = vmatprep.mubr.f32.mxu0 0.0
  %244 = vmatmul.mubr.f32.gmra.mrb[0].mxu0 %v74
  %v245 = vpop.f32.mrb[0].mxu0
  %v246 = vadd.f32 %v62, %v245
  %v247 = vpop.f32.mrb[0].mxu0
  %248 = vmatprep.mubr.f32.mxu0 0.0
  %249 = vmatmul.mubr.f32.gmra.mrb[0].mxu0 %v77
  %v250 = vpop.f32.mrb[0].mxu0
  %v251 = vadd.f32 %v62, %v250
  %v252 = vpop.f32.mrb[0].mxu0
  %253 = vmatprep.mubr.f32.mxu0 0.0
  %254 = vmatmul.mubr.f32.gmra.mrb[0].mxu0 %v80
  %v255 = vpop.f32.mrb[0].mxu0
  %v256 = vadd.f32 %v62, %v255
  %v257 = vpop.f32.mrb[0].mxu0
  %258 = vmatprep.mubr.f32.mxu0 0.0
  %259 = vmatmul.mubr.f32.gmra.mrb[0].mxu0 %v83
  %v260 = vpop.f32.mrb[0].mxu0
  %v261 = vadd.f32 %v62, %v260
  %v262 = vpop.f32.mrb[0].mxu0
  %263 = vmatprep.mubr.f32.mxu0 0.0
  %264 = vmatmul.mubr.f32.gmra.mrb[0].mxu0 %v86
  %v265 = vpop.f32.mrb[0].mxu0
  %v266 = vadd.f32 %v62, %v265
  %v267 = vpop.f32.mrb[0].mxu0
  %268 = vmatprep.mubr.f32.mxu0 0.0
  %269 = vmatmul.mubr.f32.gmra.mrb[0].mxu0 %v89
  %v270 = vpop.f32.mrb[0].mxu0
  %v271 = vadd.f32 %v62, %v270
  %v272 = vpop.f32.mrb[0].mxu0
  %273 = vmatprep.mubr.f32.mxu0 0.0
  %274 = vmatmul.mubr.f32.gmra.mrb[0].mxu0 %v92
  %v275 = vpop.f32.mrb[0].mxu0
  %v276 = vadd.f32 %v62, %v275
  %v277 = vpop.f32.mrb[0].mxu0
  %278 = vmatprep.mubr.f32.mxu0 0.0
  %279 = vmatmul.mubr.f32.gmra.mrb[0].mxu0 %v95
  %v280 = vpop.f32.mrb[0].mxu0
  %v281 = vadd.f32 %v62, %v280
  %v282 = vpop.f32.mrb[0].mxu0
  %283 = vmatprep.mubr.f32.mxu0 0.0
  %284 = vmatmul.mubr.f32.gmra.mrb[0].mxu0 %v98
  %v285 = vpop.f32.mrb[0].mxu0
  %v286 = vadd.f32 %v62, %v285
  %v287 = vpop.f32.mrb[0].mxu0
  %288 = vmatprep.mubr.f32.mxu0 0.0
  %289 = vmatmul.mubr.f32.gmra.mrb[0].mxu0 %v101
  %v290 = vpop.f32.mrb[0].mxu0
  %v291 = vadd.f32 %v62, %v290
  %v292 = vpop.f32.mrb[0].mxu0
  %293 = vmatprep.mubr.f32.mxu0 0.0
  %294 = vmatmul.mubr.f32.gmra.mrb[0].mxu0 %v104
  %v295 = vpop.f32.mrb[0].mxu0
  %v296 = vadd.f32 %v62, %v295
  %v297 = vpop.f32.mrb[0].mxu0
  %298 = vmatprep.mubr.f32.mxu0 0.0
  %299 = vmatmul.mubr.f32.gmra.mrb[0].mxu0 %v107
  %v300 = vpop.f32.mrb[0].mxu0
  %v301 = vadd.f32 %v62, %v300
  %v302 = vpop.f32.mrb[0].mxu0
  %303 = vmatprep.mubr.f32.mxu0 0.0
  %304 = vmatmul.mubr.f32.gmra.mrb[0].mxu0 %v110
  %v305 = vpop.f32.mrb[0].mxu0
  %v306 = vadd.f32 %v62, %v305
  %v307 = vpop.f32.mrb[0].mxu0
  %308 = vmatprep.mubr.f32.mxu0 0.0
  %309 = vmatmul.mubr.f32.gmra.mrb[0].mxu0 %v113
  %v310 = vpop.f32.mrb[0].mxu0
  %v311 = vadd.f32 %v62, %v310
  %v312 = vpop.f32.mrb[0].mxu0
  %313 = vmatprep.mubr.f32.mxu0 0.0
  %314 = vmatmul.mubr.f32.gmra.mrb[0].mxu0 %v116
  %v315 = vpop.f32.mrb[0].mxu0
  %v316 = vadd.f32 %v62, %v315
  %v317 = vpop.f32.mrb[0].mxu0
  %318 = vmatprep.mubr.f32.mxu0 0.0
  %319 = vmatmul.mubr.f32.gmra.mrb[0].mxu0 %v119
  %v320 = vpop.f32.mrb[0].mxu0
  %v321 = vadd.f32 %v62, %v320
  %v322 = vpop.f32.mrb[0].mxu0
  %323 = vmatprep.mubr.f32.mxu0 0.0
  %324 = vmatmul.mubr.f32.gmra.mrb[0].mxu0 %v122
  %v325 = vpop.f32.mrb[0].mxu0
  %v326 = vadd.f32 %v62, %v325
  %v327 = vpop.f32.mrb[0].mxu0
  %328 = vmatprep.mubr.f32.mxu0 0.0
  %329 = vmatmul.mubr.f32.gmra.mrb[0].mxu0 %v125
  %v330 = vpop.f32.mrb[0].mxu0
  %v331 = vadd.f32 %v62, %v330
  %v332 = vpop.f32.mrb[0].mxu0
  %333 = vmatprep.mubr.f32.mxu0 0.0
  %334 = vmatmul.mubr.f32.gmra.mrb[0].mxu0 %v128
  %v335 = vpop.f32.mrb[0].mxu0
  %v336 = vadd.f32 %v62, %v335
  %v337 = vpop.f32.mrb[0].mxu0
  %338 = vmatprep.mubr.f32.mxu0 0.0
  %339 = vmatmul.mubr.f32.gmra.mrb[0].mxu0 %v131
  %v340 = vpop.f32.mrb[0].mxu0
  %v341 = vadd.f32 %v62, %v340
  %v342 = vpop.f32.mrb[0].mxu0
  %343 = vmatprep.mubr.f32.mxu0 0.0
  %344 = vmatmul.mubr.f32.gmra.mrb[0].mxu0 %v134
  %v345 = vpop.f32.mrb[0].mxu0
  %v346 = vadd.f32 %v62, %v345
  %v347 = vpop.f32.mrb[0].mxu0
  %348 = vmatprep.mubr.f32.mxu0 0.0
  %349 = vmatmul.mubr.f32.gmra.mrb[0].mxu0 %v137
  %v350 = vpop.f32.mrb[0].mxu0
  %v351 = vadd.f32 %v62, %v350
  %v352 = vpop.f32.mrb[0].mxu0
  %353 = vmatprep.mubr.f32.mxu0 0.0
  %354 = vmatmul.mubr.f32.gmra.mrb[0].mxu0 %v140
  %v355 = vpop.f32.mrb[0].mxu0
  %v356 = vadd.f32 %v62, %v355
  %v357 = vpop.f32.mrb[0].mxu0
  %358 = vmatprep.mubr.f32.mxu0 0.0
  %359 = vmatmul.mubr.f32.gmra.mrb[0].mxu0 %v143
  %v360 = vpop.f32.mrb[0].mxu0
  %v361 = vadd.f32 %v62, %v360
  %v362 = vpop.f32.mrb[0].mxu0
  %363 = vmatprep.mubr.f32.mxu0 0.0
  %364 = vmatmul.mubr.f32.gmra.mrb[0].mxu0 %v146
  %v365 = vpop.f32.mrb[0].mxu0
  %v366 = vadd.f32 %v62, %v365
  %v367 = vpop.f32.mrb[0].mxu0
  %368 = vmatprep.mubr.f32.mxu0 0.0
  %369 = vmatmul.mubr.f32.gmra.mrb[0].mxu0 %v149
  %v370 = vpop.f32.mrb[0].mxu0
  %v371 = vadd.f32 %v62, %v370
  %v372 = vpop.f32.mrb[0].mxu0
  %373 = vmatprep.mubr.f32.mxu0 0.0
  %374 = vmatmul.mubr.f32.gmra.mrb[0].mxu0 %v152
  %v375 = vpop.f32.mrb[0].mxu0
  %v376 = vadd.f32 %v62, %v375
  %v377 = vpop.f32.mrb[0].mxu0
  %378 = vmatprep.mubr.f32.mxu0 0.0
  %379 = vmatmul.mubr.f32.gmra.mrb[0].mxu0 %v155
  %v380 = vpop.f32.mrb[0].mxu0
  %v381 = vadd.f32 %v62, %v380
  %v382 = vpop.f32.mrb[0].mxu0
  %383 = vmatprep.mubr.f32.mxu0 0.0
  %384 = vmatmul.mubr.f32.gmra.mrb[0].mxu0 %v158
  %v385 = vpop.f32.mrb[0].mxu0
  %v386 = vadd.f32 %v62, %v385
  %v387 = vpop.f32.mrb[0].mxu0
  %388 = vdwg.mxu0
  %389 = vadd.xlane.f32.xlu0 %v231
  %v390 = vpop.xlane.xlu0 %389
  %391 = vadd.xlane.f32.xlu0 %v236
  %v392 = vpop.xlane.xlu0 %391
  %393 = vadd.xlane.f32.xlu0 %v241
  %v394 = vpop.xlane.xlu0 %393
  %395 = vadd.xlane.f32.xlu0 %v246
  %v396 = vpop.xlane.xlu0 %395
  %397 = vadd.xlane.f32.xlu0 %v251
  %v398 = vpop.xlane.xlu0 %397
  %399 = vadd.xlane.f32.xlu0 %v256
  %v400 = vpop.xlane.xlu0 %399
  %401 = vadd.xlane.f32.xlu0 %v261
  %v402 = vpop.xlane.xlu0 %401
  %403 = vadd.xlane.f32.xlu0 %v266
  %v404 = vpop.xlane.xlu0 %403
  %405 = vadd.xlane.f32.xlu0 %v271
  %v406 = vpop.xlane.xlu0 %405
  %407 = vadd.xlane.f32.xlu0 %v276
  %v408 = vpop.xlane.xlu0 %407
  %409 = vadd.xlane.f32.xlu0 %v281
  %v410 = vpop.xlane.xlu0 %409
  %411 = vadd.xlane.f32.xlu0 %v286
  %v412 = vpop.xlane.xlu0 %411
  %413 = vadd.xlane.f32.xlu0 %v291
  %v414 = vpop.xlane.xlu0 %413
  %415 = vadd.xlane.f32.xlu0 %v296
  %v416 = vpop.xlane.xlu0 %415
  %417 = vadd.xlane.f32.xlu0 %v301
  %v418 = vpop.xlane.xlu0 %417
  %419 = vadd.xlane.f32.xlu0 %v306
  %v420 = vpop.xlane.xlu0 %419
  %421 = vadd.xlane.f32.xlu0 %v311
  %v422 = vpop.xlane.xlu0 %421
  %423 = vadd.xlane.f32.xlu0 %v316
  %v424 = vpop.xlane.xlu0 %423
  %425 = vadd.xlane.f32.xlu0 %v321
  %v426 = vpop.xlane.xlu0 %425
  %427 = vadd.xlane.f32.xlu0 %v326
  %v428 = vpop.xlane.xlu0 %427
  %429 = vadd.xlane.f32.xlu0 %v331
  %v430 = vpop.xlane.xlu0 %429
  %431 = vadd.xlane.f32.xlu0 %v336
  %v432 = vpop.xlane.xlu0 %431
  %433 = vadd.xlane.f32.xlu0 %v341
  %v434 = vpop.xlane.xlu0 %433
  %435 = vadd.xlane.f32.xlu0 %v346
  %v436 = vpop.xlane.xlu0 %435
  %437 = vadd.xlane.f32.xlu0 %v351
  %v438 = vpop.xlane.xlu0 %437
  %439 = vadd.xlane.f32.xlu0 %v356
  %v440 = vpop.xlane.xlu0 %439
  %441 = vadd.xlane.f32.xlu0 %v361
  %v442 = vpop.xlane.xlu0 %441
  %443 = vadd.xlane.f32.xlu0 %v366
  %v444 = vpop.xlane.xlu0 %443
  %445 = vadd.xlane.f32.xlu0 %v371
  %v446 = vpop.xlane.xlu0 %445
  %447 = vadd.xlane.f32.xlu0 %v376
  %v448 = vpop.xlane.xlu0 %447
  %449 = vadd.xlane.f32.xlu0 %v381
  %v450 = vpop.xlane.xlu0 %449
  %451 = vadd.xlane.f32.xlu0 %v386
  %v452 = vpop.xlane.xlu0 %451
  %v453 = vrcp.pop 128.0
  %v454 = vmul.f32 %v390, %v453
  %v455 = vmul.f32 %v392, %v453
  %v456 = vmul.f32 %v394, %v453
  %v457 = vmul.f32 %v396, %v453
  %v458 = vmul.f32 %v398, %v453
  %v459 = vmul.f32 %v400, %v453
  %v460 = vmul.f32 %v402, %v453
  %v461 = vmul.f32 %v404, %v453
  %v462 = vmul.f32 %v406, %v453
  %v463 = vmul.f32 %v408, %v453
  %v464 = vmul.f32 %v410, %v453
  %v465 = vmul.f32 %v412, %v453
  %v466 = vmul.f32 %v414, %v453
  %v467 = vmul.f32 %v416, %v453
  %v468 = vmul.f32 %v418, %v453
  %v469 = vmul.f32 %v420, %v453
  %v470 = vmul.f32 %v422, %v453
  %v471 = vmul.f32 %v424, %v453
  %v472 = vmul.f32 %v426, %v453
  %v473 = vmul.f32 %v428, %v453
  %v474 = vmul.f32 %v430, %v453
  %v475 = vmul.f32 %v432, %v453
  %v476 = vmul.f32 %v434, %v453
  %v477 = vmul.f32 %v436, %v453
  %v478 = vmul.f32 %v438, %v453
  %v479 = vmul.f32 %v440, %v453
  %v480 = vmul.f32 %v442, %v453
  %v481 = vmul.f32 %v444, %v453
  %v482 = vmul.f32 %v446, %v453
  %v483 = vmul.f32 %v448, %v453
  %v484 = vmul.f32 %v450, %v453
  %v485 = vmul.f32 %v452, %v453
  %v486 = vsub.f32 %v231, %v454
  %v487 = vsub.f32 %v236, %v455
  %v488 = vsub.f32 %v241, %v456
  %v489 = vsub.f32 %v246, %v457
  %v490 = vsub.f32 %v251, %v458
  %v491 = vsub.f32 %v256, %v459
  %v492 = vsub.f32 %v261, %v460
  %v493 = vsub.f32 %v266, %v461
  %v494 = vsub.f32 %v271, %v462
  %v495 = vsub.f32 %v276, %v463
  %v496 = vsub.f32 %v281, %v464
  %v497 = vsub.f32 %v286, %v465
  %v498 = vsub.f32 %v291, %v466
  %v499 = vsub.f32 %v296, %v467
  %v500 = vsub.f32 %v301, %v468
  %v501 = vsub.f32 %v306, %v469
  %v502 = vsub.f32 %v311, %v470
  %v503 = vsub.f32 %v316, %v471
  %v504 = vsub.f32 %v321, %v472
  %v505 = vsub.f32 %v326, %v473
  %v506 = vsub.f32 %v331, %v474
  %v507 = vsub.f32 %v336, %v475
  %v508 = vsub.f32 %v341, %v476
  %v509 = vsub.f32 %v346, %v477
  %v510 = vsub.f32 %v351, %v478
  %v511 = vsub.f32 %v356, %v479
  %v512 = vsub.f32 %v361, %v480
  %v513 = vsub.f32 %v366, %v481
  %v514 = vsub.f32 %v371, %v482
  %v515 = vsub.f32 %v376, %v483
  %v516 = vsub.f32 %v381, %v484
  %v517 = vsub.f32 %v386, %v485
  %v518 = vmul.f32 %v486, %v486
  %v519 = vmul.f32 %v487, %v487
  %v520 = vmul.f32 %v488, %v488
  %v521 = vmul.f32 %v489, %v489
  %v522 = vmul.f32 %v490, %v490
  %v523 = vmul.f32 %v491, %v491
  %v524 = vmul.f32 %v492, %v492
  %v525 = vmul.f32 %v493, %v493
  %v526 = vmul.f32 %v494, %v494
  %v527 = vmul.f32 %v495, %v495
  %v528 = vmul.f32 %v496, %v496
  %v529 = vmul.f32 %v497, %v497
  %v530 = vmul.f32 %v498, %v498
  %v531 = vmul.f32 %v499, %v499
  %v532 = vmul.f32 %v500, %v500
  %v533 = vmul.f32 %v501, %v501
  %v534 = vmul.f32 %v502, %v502
  %v535 = vmul.f32 %v503, %v503
  %v536 = vmul.f32 %v504, %v504
  %v537 = vmul.f32 %v505, %v505
  %v538 = vmul.f32 %v506, %v506
  %v539 = vmul.f32 %v507, %v507
  %v540 = vmul.f32 %v508, %v508
  %v541 = vmul.f32 %v509, %v509
  %v542 = vmul.f32 %v510, %v510
  %v543 = vmul.f32 %v511, %v511
  %v544 = vmul.f32 %v512, %v512
  %v545 = vmul.f32 %v513, %v513
  %v546 = vmul.f32 %v514, %v514
  %v547 = vmul.f32 %v515, %v515
  %v548 = vmul.f32 %v516, %v516
  %v549 = vmul.f32 %v517, %v517
  %550 = vadd.xlane.f32.xlu0 %v518
  %v551 = vpop.xlane.xlu0 %550
  %552 = vadd.xlane.f32.xlu0 %v519
  %v553 = vpop.xlane.xlu0 %552
  %554 = vadd.xlane.f32.xlu0 %v520
  %v555 = vpop.xlane.xlu0 %554
  %556 = vadd.xlane.f32.xlu0 %v521
  %v557 = vpop.xlane.xlu0 %556
  %558 = vadd.xlane.f32.xlu0 %v522
  %v559 = vpop.xlane.xlu0 %558
  %560 = vadd.xlane.f32.xlu0 %v523
  %v561 = vpop.xlane.xlu0 %560
  %562 = vadd.xlane.f32.xlu0 %v524
  %v563 = vpop.xlane.xlu0 %562
  %564 = vadd.xlane.f32.xlu0 %v525
  %v565 = vpop.xlane.xlu0 %564
  %566 = vadd.xlane.f32.xlu0 %v526
  %v567 = vpop.xlane.xlu0 %566
  %568 = vadd.xlane.f32.xlu0 %v527
  %v569 = vpop.xlane.xlu0 %568
  %570 = vadd.xlane.f32.xlu0 %v528
  %v571 = vpop.xlane.xlu0 %570
  %572 = vadd.xlane.f32.xlu0 %v529
  %v573 = vpop.xlane.xlu0 %572
  %574 = vadd.xlane.f32.xlu0 %v530
  %v575 = vpop.xlane.xlu0 %574
  %576 = vadd.xlane.f32.xlu0 %v531
  %v577 = vpop.xlane.xlu0 %576
  %578 = vadd.xlane.f32.xlu0 %v532
  %v579 = vpop.xlane.xlu0 %578
  %580 = vadd.xlane.f32.xlu0 %v533
  %v581 = vpop.xlane.xlu0 %580
  %582 = vadd.xlane.f32.xlu0 %v534
  %v583 = vpop.xlane.xlu0 %582
  %584 = vadd.xlane.f32.xlu0 %v535
  %v585 = vpop.xlane.xlu0 %584
  %586 = vadd.xlane.f32.xlu0 %v536
  %v587 = vpop.xlane.xlu0 %586
  %588 = vadd.xlane.f32.xlu0 %v537
  %v589 = vpop.xlane.xlu0 %588
  %590 = vadd.xlane.f32.xlu0 %v538
  %v591 = vpop.xlane.xlu0 %590
  %592 = vadd.xlane.f32.xlu0 %v539
  %v593 = vpop.xlane.xlu0 %592
  %594 = vadd.xlane.f32.xlu0 %v540
  %v595 = vpop.xlane.xlu0 %594
  %596 = vadd.xlane.f32.xlu0 %v541
  %v597 = vpop.xlane.xlu0 %596
  %598 = vadd.xlane.f32.xlu0 %v542
  %v599 = vpop.xlane.xlu0 %598
  %600 = vadd.xlane.f32.xlu0 %v543
  %v601 = vpop.xlane.xlu0 %600
  %602 = vadd.xlane.f32.xlu0 %v544
  %v603 = vpop.xlane.xlu0 %602
  %604 = vadd.xlane.f32.xlu0 %v545
  %v605 = vpop.xlane.xlu0 %604
  %606 = vadd.xlane.f32.xlu0 %v546
  %v607 = vpop.xlane.xlu0 %606
  %608 = vadd.xlane.f32.xlu0 %v547
  %v609 = vpop.xlane.xlu0 %608
  %610 = vadd.xlane.f32.xlu0 %v548
  %v611 = vpop.xlane.xlu0 %610
  %612 = vadd.xlane.f32.xlu0 %v549
  %v613 = vpop.xlane.xlu0 %612
  %v614 = vmul.f32 %v551, %v453
  %v615 = vmul.f32 %v553, %v453
  %v616 = vmul.f32 %v555, %v453
  %v617 = vmul.f32 %v557, %v453
  %v618 = vmul.f32 %v559, %v453
  %v619 = vmul.f32 %v561, %v453
  %v620 = vmul.f32 %v563, %v453
  %v621 = vmul.f32 %v565, %v453
  %v622 = vmul.f32 %v567, %v453
  %v623 = vmul.f32 %v569, %v453
  %v624 = vmul.f32 %v571, %v453
  %v625 = vmul.f32 %v573, %v453
  %v626 = vmul.f32 %v575, %v453
  %v627 = vmul.f32 %v577, %v453
  %v628 = vmul.f32 %v579, %v453
  %v629 = vmul.f32 %v581, %v453
  %v630 = vmul.f32 %v583, %v453
  %v631 = vmul.f32 %v585, %v453
  %v632 = vmul.f32 %v587, %v453
  %v633 = vmul.f32 %v589, %v453
  %v634 = vmul.f32 %v591, %v453
  %v635 = vmul.f32 %v593, %v453
  %v636 = vmul.f32 %v595, %v453
  %v637 = vmul.f32 %v597, %v453
  %v638 = vmul.f32 %v599, %v453
  %v639 = vmul.f32 %v601, %v453
  %v640 = vmul.f32 %v603, %v453
  %v641 = vmul.f32 %v605, %v453
  %v642 = vmul.f32 %v607, %v453
  %v643 = vmul.f32 %v609, %v453
  %v644 = vmul.f32 %v611, %v453
  %v645 = vmul.f32 %v613, %v453
  %v646 = vadd.f32 %v614, 1e-05
  %v647 = vadd.f32 %v615, 1e-05
  %v648 = vadd.f32 %v616, 1e-05
  %v649 = vadd.f32 %v617, 1e-05
  %v650 = vadd.f32 %v618, 1e-05
  %v651 = vadd.f32 %v619, 1e-05
  %v652 = vadd.f32 %v620, 1e-05
  %v653 = vadd.f32 %v621, 1e-05
  %v654 = vadd.f32 %v622, 1e-05
  %v655 = vadd.f32 %v623, 1e-05
  %v656 = vadd.f32 %v624, 1e-05
  %v657 = vadd.f32 %v625, 1e-05
  %v658 = vadd.f32 %v626, 1e-05
  %v659 = vadd.f32 %v627, 1e-05
  %v660 = vadd.f32 %v628, 1e-05
  %v661 = vadd.f32 %v629, 1e-05
  %v662 = vadd.f32 %v630, 1e-05
  %v663 = vadd.f32 %v631, 1e-05
  %v664 = vadd.f32 %v632, 1e-05
  %v665 = vadd.f32 %v633, 1e-05
  %v666 = vadd.f32 %v634, 1e-05
  %v667 = vadd.f32 %v635, 1e-05
  %v668 = vadd.f32 %v636, 1e-05
  %v669 = vadd.f32 %v637, 1e-05
  %v670 = vadd.f32 %v638, 1e-05
  %v671 = vadd.f32 %v639, 1e-05
  %v672 = vadd.f32 %v640, 1e-05
  %v673 = vadd.f32 %v641, 1e-05
  %v674 = vadd.f32 %v642, 1e-05
  %v675 = vadd.f32 %v643, 1e-05
  %v676 = vadd.f32 %v644, 1e-05
  %v677 = vadd.f32 %v645, 1e-05
  %v678 = vrsqrt.pop %v646
  %v679 = vrsqrt.pop %v647
  %v680 = vrsqrt.pop %v648
  %v681 = vrsqrt.pop %v649
  %v682 = vrsqrt.pop %v650
  %v683 = vrsqrt.pop %v651
  %v684 = vrsqrt.pop %v652
  %v685 = vrsqrt.pop %v653
  %v686 = vrsqrt.pop %v654
  %v687 = vrsqrt.pop %v655
  %v688 = vrsqrt.pop %v656
  %v689 = vrsqrt.pop %v657
  %v690 = vrsqrt.pop %v658
  %v691 = vrsqrt.pop %v659
  %v692 = vrsqrt.pop %v660
  %v693 = vrsqrt.pop %v661
  %v694 = vrsqrt.pop %v662
  %v695 = vrsqrt.pop %v663
  %v696 = vrsqrt.pop %v664
  %v697 = vrsqrt.pop %v665
  %v698 = vrsqrt.pop %v666
  %v699 = vrsqrt.pop %v667
  %v700 = vrsqrt.pop %v668
  %v701 = vrsqrt.pop %v669
  %v702 = vrsqrt.pop %v670
  %v703 = vrsqrt.pop %v671
  %v704 = vrsqrt.pop %v672
  %v705 = vrsqrt.pop %v673
  %v706 = vrsqrt.pop %v674
  %v707 = vrsqrt.pop %v675
  %v708 = vrsqrt.pop %v676
  %v709 = vrsqrt.pop %v677
  %v710 = vmul.f32 %v486, %v678
  %v711 = vmul.f32 %v487, %v679
  %v712 = vmul.f32 %v488, %v680
  %v713 = vmul.f32 %v489, %v681
  %v714 = vmul.f32 %v490, %v682
  %v715 = vmul.f32 %v491, %v683
  %v716 = vmul.f32 %v492, %v684
  %v717 = vmul.f32 %v493, %v685
  %v718 = vmul.f32 %v494, %v686
  %v719 = vmul.f32 %v495, %v687
  %v720 = vmul.f32 %v496, %v688
  %v721 = vmul.f32 %v497, %v689
  %v722 = vmul.f32 %v498, %v690
  %v723 = vmul.f32 %v499, %v691
  %v724 = vmul.f32 %v500, %v692
  %v725 = vmul.f32 %v501, %v693
  %v726 = vmul.f32 %v502, %v694
  %v727 = vmul.f32 %v503, %v695
  %v728 = vmul.f32 %v504, %v696
  %v729 = vmul.f32 %v505, %v697
  %v730 = vmul.f32 %v506, %v698
  %v731 = vmul.f32 %v507, %v699
  %v732 = vmul.f32 %v508, %v700
  %v733 = vmul.f32 %v509, %v701
  %v734 = vmul.f32 %v510, %v702
  %v735 = vmul.f32 %v511, %v703
  %v736 = vmul.f32 %v512, %v704
  %v737 = vmul.f32 %v513, %v705
  %v738 = vmul.f32 %v514, %v706
  %v739 = vmul.f32 %v515, %v707
  %v740 = vmul.f32 %v516, %v708
  %v741 = vmul.f32 %v517, %v709
  %v742 = vmul.f32 %v710, 0.02
  %v743 = vmul.f32 %v711, 0.02
  %v744 = vmul.f32 %v712, 0.02
  %v745 = vmul.f32 %v713, 0.02
  %v746 = vmul.f32 %v714, 0.02
  %v747 = vmul.f32 %v715, 0.02
  %v748 = vmul.f32 %v716, 0.02
  %v749 = vmul.f32 %v717, 0.02
  %v750 = vmul.f32 %v718, 0.02
  %v751 = vmul.f32 %v719, 0.02
  %v752 = vmul.f32 %v720, 0.02
  %v753 = vmul.f32 %v721, 0.02
  %v754 = vmul.f32 %v722, 0.02
  %v755 = vmul.f32 %v723, 0.02
  %v756 = vmul.f32 %v724, 0.02
  %v757 = vmul.f32 %v725, 0.02
  %v758 = vmul.f32 %v726, 0.02
  %v759 = vmul.f32 %v727, 0.02
  %v760 = vmul.f32 %v728, 0.02
  %v761 = vmul.f32 %v729, 0.02
  %v762 = vmul.f32 %v730, 0.02
  %v763 = vmul.f32 %v731, 0.02
  %v764 = vmul.f32 %v732, 0.02
  %v765 = vmul.f32 %v733, 0.02
  %v766 = vmul.f32 %v734, 0.02
  %v767 = vmul.f32 %v735, 0.02
  %v768 = vmul.f32 %v736, 0.02
  %v769 = vmul.f32 %v737, 0.02
  %v770 = vmul.f32 %v738, 0.02
  %v771 = vmul.f32 %v739, 0.02
  %v772 = vmul.f32 %v740, 0.02
  %v773 = vmul.f32 %v741, 0.02
  %v774 = vmax.f32 %v710, %v742
  %v775 = vmax.f32 %v711, %v743
  %v776 = vmax.f32 %v712, %v744
  %v777 = vmax.f32 %v713, %v745
  %v778 = vmax.f32 %v714, %v746
  %v779 = vmax.f32 %v715, %v747
  %v780 = vmax.f32 %v716, %v748
  %v781 = vmax.f32 %v717, %v749
  %v782 = vmax.f32 %v718, %v750
  %v783 = vmax.f32 %v719, %v751
  %v784 = vmax.f32 %v720, %v752
  %v785 = vmax.f32 %v721, %v753
  %v786 = vmax.f32 %v722, %v754
  %v787 = vmax.f32 %v723, %v755
  %v788 = vmax.f32 %v724, %v756
  %v789 = vmax.f32 %v725, %v757
  %v790 = vmax.f32 %v726, %v758
  %v791 = vmax.f32 %v727, %v759
  %v792 = vmax.f32 %v728, %v760
  %v793 = vmax.f32 %v729, %v761
  %v794 = vmax.f32 %v730, %v762
  %v795 = vmax.f32 %v731, %v763
  %v796 = vmax.f32 %v732, %v764
  %v797 = vmax.f32 %v733, %v765
  %v798 = vmax.f32 %v734, %v766
  %v799 = vmax.f32 %v735, %v767
  %v800 = vmax.f32 %v736, %v768
  %v801 = vmax.f32 %v737, %v769
  %v802 = vmax.f32 %v738, %v770
  %v803 = vmax.f32 %v739, %v771
  %v804 = vmax.f32 %v740, %v772
  %v805 = vmax.f32 %v741, %v773
  %v806 = vld [vmem:[%s3] sm:$0xff]
  %v807 = vld [vmem:[%s3 + $0x8] sm:$0xff]
  %v808 = vld [vmem:[%s3 + $0x10] sm:$0xff]
  %v809 = vld [vmem:[%s3 + $0x18] sm:$0xff]
  %v810 = vld [vmem:[%s3 + $0x20] sm:$0xff]
  %v811 = vld [vmem:[%s3 + $0x28] sm:$0xff]
  %v812 = vld [vmem:[%s3 + $0x30] sm:$0xff]
  %v813 = vld [vmem:[%s3 + $0x38] sm:$0xff]
  %v814 = vld [vmem:[%s3 + $0x40] sm:$0xff]
  %v815 = vld [vmem:[%s3 + $0x48] sm:$0xff]
  %v816 = vld [vmem:[%s3 + $0x50] sm:$0xff]
  %v817 = vld [vmem:[%s3 + $0x58] sm:$0xff]
  %v818 = vld [vmem:[%s3 + $0x60] sm:$0xff]
  %v819 = vld [vmem:[%s3 + $0x68] sm:$0xff]
  %v820 = vld [vmem:[%s3 + $0x70] sm:$0xff]
  %v821 = vld [vmem:[%s3 + $0x78] sm:$0xff]
  %v822 = vld [vmem:[%s3 + $0x80] sm:$0xff]
  %v823 = vld [vmem:[%s3 + $0x88] sm:$0xff]
  %v824 = vld [vmem:[%s3 + $0x90] sm:$0xff]
  %v825 = vld [vmem:[%s3 + $0x98] sm:$0xff]
  %v826 = vld [vmem:[%s3 + $0xa0] sm:$0xff]
  %v827 = vld [vmem:[%s3 + $0xa8] sm:$0xff]
  %v828 = vld [vmem:[%s3 + $0xb0] sm:$0xff]
  %v829 = vld [vmem:[%s3 + $0xb8] sm:$0xff]
  %v830 = vld [vmem:[%s3 + $0xc0] sm:$0xff]
  %v831 = vld [vmem:[%s3 + $0xc8] sm:$0xff]
  %v832 = vld [vmem:[%s3 + $0xd0] sm:$0xff]
  %v833 = vld [vmem:[%s3 + $0xd8] sm:$0xff]
  %v834 = vld [vmem:[%s3 + $0xe0] sm:$0xff]
  %v835 = vld [vmem:[%s3 + $0xe8] sm:$0xff]
  %v836 = vld [vmem:[%s3 + $0xf0] sm:$0xff]
  %v837 = vld [vmem:[%s3 + $0xf8] sm:$0xff]
  %s838 = scalar_lea.vmem %s5, 1
  %v839 = vld [vmem:[%s838] ss:$4 sm:$0x3]
  %v841 = vlaneseq
  %v842 = vshrl.u32 %v841, 7
  %v843 = vsub.s32 0, %v842
  %v844 = vrot.slane %v839, %v843
  %v845 = vlaneseq
  %v846 = vshrl.u32 %v845, 7
  %v847 = vsub.s32 1, %v846
  %v848 = vrot.slane %v839, %v847
  %851 = vmatprep.subr.mxu0 %v807
  %852 = vmatpush1.msra.mxu0 %v806
  %853 = vmatprep.subr.mxu0 %v809
  %854 = vmatpush1.msra.mxu0 %v808
  %855 = vmatprep.subr.mxu0 %v811
  %856 = vmatpush1.msra.mxu0 %v810
  %857 = vmatprep.subr.mxu0 %v813
  %858 = vmatpush1.msra.mxu0 %v812
  %859 = vmatprep.subr.mxu0 %v815
  %860 = vmatpush1.msra.mxu0 %v814
  %861 = vmatprep.subr.mxu0 %v817
  %862 = vmatpush1.msra.mxu0 %v816
  %863 = vmatprep.subr.mxu0 %v819
  %864 = vmatpush1.msra.mxu0 %v818
  %865 = vmatprep.subr.mxu0 %v821
  %866 = vmatpush1.msra.mxu0 %v820
  %867 = vmatprep.subr.mxu0 %v823
  %868 = vmatpush1.msra.mxu0 %v822
  %869 = vmatprep.subr.mxu0 %v825
  %870 = vmatpush1.msra.mxu0 %v824
  %871 = vmatprep.subr.mxu0 %v827
  %872 = vmatpush1.msra.mxu0 %v826
  %873 = vmatprep.subr.mxu0 %v829
  %874 = vmatpush1.msra.mxu0 %v828
  %875 = vmatprep.subr.mxu0 %v831
  %876 = vmatpush1.msra.mxu0 %v830
  %877 = vmatprep.subr.mxu0 %v833
  %878 = vmatpush1.msra.mxu0 %v832
  %879 = vmatprep.subr.mxu0 %v835
  %880 = vmatpush1.msra.mxu0 %v834
  %881 = vmatprep.subr.mxu0 %v837
  %882 = vmatpush1.msra.mxu0 %v836
  %883 = vmatprep.subr.mxu0 0.0
  %884 = vmatpush1.msra.mxu0 0.0
  %885 = vmatprep.subr.mxu0 0.0
  %886 = vmatpush1.msra.mxu0 0.0
  %887 = vmatprep.subr.mxu0 0.0
  %888 = vmatpush1.msra.mxu0 0.0
  %889 = vmatprep.subr.mxu0 0.0
  %890 = vmatpush1.msra.mxu0 0.0
  %891 = vmatprep.subr.mxu0 0.0
  %892 = vmatpush1.msra.mxu0 0.0
  %893 = vmatprep.subr.mxu0 0.0
  %894 = vmatpush1.msra.mxu0 0.0
  %895 = vmatprep.subr.mxu0 0.0
  %896 = vmatpush1.msra.mxu0 0.0
  %897 = vmatprep.subr.mxu0 0.0
  %898 = vmatpush1.msra.mxu0 0.0
  %899 = vmatprep.subr.mxu0 0.0
  %900 = vmatpush1.msra.mxu0 0.0
  %901 = vmatprep.subr.mxu0 0.0
  %902 = vmatpush1.msra.mxu0 0.0
  %903 = vmatprep.subr.mxu0 0.0
  %904 = vmatpush1.msra.mxu0 0.0
  %905 = vmatprep.subr.mxu0 0.0
  %906 = vmatpush1.msra.mxu0 0.0
  %907 = vmatprep.subr.mxu0 0.0
  %908 = vmatpush1.msra.mxu0 0.0
  %909 = vmatprep.subr.mxu0 0.0
  %910 = vmatpush1.msra.mxu0 0.0
  %911 = vmatprep.subr.mxu0 0.0
  %912 = vmatpush1.msra.mxu0 0.0
  %913 = vmatprep.subr.mxu0 0.0
  %914 = vmatpush1.msra.mxu0 0.0
  %915 = vmatprep.mubr.f32.mxu0 0.0
  %916 = vmatmul.mubr.f32.gmra.mrb[0].mxu0 %v774
  %v917 = vpop.f32.mrb[0].mxu0
  %v918 = vadd.f32 %v844, %v917
  %v919 = vpop.f32.mrb[0].mxu0
  %v920 = vadd.f32 %v848, %v919
  %921 = vmatprep.mubr.f32.mxu0 0.0
  %922 = vmatmul.mubr.f32.gmra.mrb[0].mxu0 %v775
  %v923 = vpop.f32.mrb[0].mxu0
  %v924 = vadd.f32 %v844, %v923
  %v925 = vpop.f32.mrb[0].mxu0
  %v926 = vadd.f32 %v848, %v925
  %927 = vmatprep.mubr.f32.mxu0 0.0
  %928 = vmatmul.mubr.f32.gmra.mrb[0].mxu0 %v776
  %v929 = vpop.f32.mrb[0].mxu0
  %v930 = vadd.f32 %v844, %v929
  %v931 = vpop.f32.mrb[0].mxu0
  %v932 = vadd.f32 %v848, %v931
  %933 = vmatprep.mubr.f32.mxu0 0.0
  %934 = vmatmul.mubr.f32.gmra.mrb[0].mxu0 %v777
  %v935 = vpop.f32.mrb[0].mxu0
  %v936 = vadd.f32 %v844, %v935
  %v937 = vpop.f32.mrb[0].mxu0
  %v938 = vadd.f32 %v848, %v937
  %939 = vmatprep.mubr.f32.mxu0 0.0
  %940 = vmatmul.mubr.f32.gmra.mrb[0].mxu0 %v778
  %v941 = vpop.f32.mrb[0].mxu0
  %v942 = vadd.f32 %v844, %v941
  %v943 = vpop.f32.mrb[0].mxu0
  %v944 = vadd.f32 %v848, %v943
  %945 = vmatprep.mubr.f32.mxu0 0.0
  %946 = vmatmul.mubr.f32.gmra.mrb[0].mxu0 %v779
  %v947 = vpop.f32.mrb[0].mxu0
  %v948 = vadd.f32 %v844, %v947
  %v949 = vpop.f32.mrb[0].mxu0
  %v950 = vadd.f32 %v848, %v949
  %951 = vmatprep.mubr.f32.mxu0 0.0
  %952 = vmatmul.mubr.f32.gmra.mrb[0].mxu0 %v780
  %v953 = vpop.f32.mrb[0].mxu0
  %v954 = vadd.f32 %v844, %v953
  %v955 = vpop.f32.mrb[0].mxu0
  %v956 = vadd.f32 %v848, %v955
  %957 = vmatprep.mubr.f32.mxu0 0.0
  %958 = vmatmul.mubr.f32.gmra.mrb[0].mxu0 %v781
  %v959 = vpop.f32.mrb[0].mxu0
  %v960 = vadd.f32 %v844, %v959
  %v961 = vpop.f32.mrb[0].mxu0
  %v962 = vadd.f32 %v848, %v961
  %963 = vmatprep.mubr.f32.mxu0 0.0
  %964 = vmatmul.mubr.f32.gmra.mrb[0].mxu0 %v782
  %v965 = vpop.f32.mrb[0].mxu0
  %v966 = vadd.f32 %v844, %v965
  %v967 = vpop.f32.mrb[0].mxu0
  %v968 = vadd.f32 %v848, %v967
  %969 = vmatprep.mubr.f32.mxu0 0.0
  %970 = vmatmul.mubr.f32.gmra.mrb[0].mxu0 %v783
  %v971 = vpop.f32.mrb[0].mxu0
  %v972 = vadd.f32 %v844, %v971
  %v973 = vpop.f32.mrb[0].mxu0
  %v974 = vadd.f32 %v848, %v973
  %975 = vmatprep.mubr.f32.mxu0 0.0
  %976 = vmatmul.mubr.f32.gmra.mrb[0].mxu0 %v784
  %v977 = vpop.f32.mrb[0].mxu0
  %v978 = vadd.f32 %v844, %v977
  %v979 = vpop.f32.mrb[0].mxu0
  %v980 = vadd.f32 %v848, %v979
  %981 = vmatprep.mubr.f32.mxu0 0.0
  %982 = vmatmul.mubr.f32.gmra.mrb[0].mxu0 %v785
  %v983 = vpop.f32.mrb[0].mxu0
  %v984 = vadd.f32 %v844, %v983
  %v985 = vpop.f32.mrb[0].mxu0
  %v986 = vadd.f32 %v848, %v985
  %987 = vmatprep.mubr.f32.mxu0 0.0
  %988 = vmatmul.mubr.f32.gmra.mrb[0].mxu0 %v786
  %v989 = vpop.f32.mrb[0].mxu0
  %v990 = vadd.f32 %v844, %v989
  %v991 = vpop.f32.mrb[0].mxu0
  %v992 = vadd.f32 %v848, %v991
  %993 = vmatprep.mubr.f32.mxu0 0.0
  %994 = vmatmul.mubr.f32.gmra.mrb[0].mxu0 %v787
  %v995 = vpop.f32.mrb[0].mxu0
  %v996 = vadd.f32 %v844, %v995
  %v997 = vpop.f32.mrb[0].mxu0
  %v998 = vadd.f32 %v848, %v997
  %999 = vmatprep.mubr.f32.mxu0 0.0
  %1000 = vmatmul.mubr.f32.gmra.mrb[0].mxu0 %v788
  %v1001 = vpop.f32.mrb[0].mxu0
  %v1002 = vadd.f32 %v844, %v1001
  %v1003 = vpop.f32.mrb[0].mxu0
  %v1004 = vadd.f32 %v848, %v1003
  %1005 = vmatprep.mubr.f32.mxu0 0.0
  %1006 = vmatmul.mubr.f32.gmra.mrb[0].mxu0 %v789
  %v1007 = vpop.f32.mrb[0].mxu0
  %v1008 = vadd.f32 %v844, %v1007
  %v1009 = vpop.f32.mrb[0].mxu0
  %v1010 = vadd.f32 %v848, %v1009
  %1011 = vmatprep.mubr.f32.mxu0 0.0
  %1012 = vmatmul.mubr.f32.gmra.mrb[0].mxu0 %v790
  %v1013 = vpop.f32.mrb[0].mxu0
  %v1014 = vadd.f32 %v844, %v1013
  %v1015 = vpop.f32.mrb[0].mxu0
  %v1016 = vadd.f32 %v848, %v1015
  %1017 = vmatprep.mubr.f32.mxu0 0.0
  %1018 = vmatmul.mubr.f32.gmra.mrb[0].mxu0 %v791
  %v1019 = vpop.f32.mrb[0].mxu0
  %v1020 = vadd.f32 %v844, %v1019
  %v1021 = vpop.f32.mrb[0].mxu0
  %v1022 = vadd.f32 %v848, %v1021
  %1023 = vmatprep.mubr.f32.mxu0 0.0
  %1024 = vmatmul.mubr.f32.gmra.mrb[0].mxu0 %v792
  %v1025 = vpop.f32.mrb[0].mxu0
  %v1026 = vadd.f32 %v844, %v1025
  %v1027 = vpop.f32.mrb[0].mxu0
  %v1028 = vadd.f32 %v848, %v1027
  %1029 = vmatprep.mubr.f32.mxu0 0.0
  %1030 = vmatmul.mubr.f32.gmra.mrb[0].mxu0 %v793
  %v1031 = vpop.f32.mrb[0].mxu0
  %v1032 = vadd.f32 %v844, %v1031
  %v1033 = vpop.f32.mrb[0].mxu0
  %v1034 = vadd.f32 %v848, %v1033
  %1035 = vmatprep.mubr.f32.mxu0 0.0
  %1036 = vmatmul.mubr.f32.gmra.mrb[0].mxu0 %v794
  %v1037 = vpop.f32.mrb[0].mxu0
  %v1038 = vadd.f32 %v844, %v1037
  %v1039 = vpop.f32.mrb[0].mxu0
  %v1040 = vadd.f32 %v848, %v1039
  %1041 = vmatprep.mubr.f32.mxu0 0.0
  %1042 = vmatmul.mubr.f32.gmra.mrb[0].mxu0 %v795
  %v1043 = vpop.f32.mrb[0].mxu0
  %v1044 = vadd.f32 %v844, %v1043
  %v1045 = vpop.f32.mrb[0].mxu0
  %v1046 = vadd.f32 %v848, %v1045
  %1047 = vmatprep.mubr.f32.mxu0 0.0
  %1048 = vmatmul.mubr.f32.gmra.mrb[0].mxu0 %v796
  %v1049 = vpop.f32.mrb[0].mxu0
  %v1050 = vadd.f32 %v844, %v1049
  %v1051 = vpop.f32.mrb[0].mxu0
  %v1052 = vadd.f32 %v848, %v1051
  %1053 = vmatprep.mubr.f32.mxu0 0.0
  %1054 = vmatmul.mubr.f32.gmra.mrb[0].mxu0 %v797
  %v1055 = vpop.f32.mrb[0].mxu0
  %v1056 = vadd.f32 %v844, %v1055
  %v1057 = vpop.f32.mrb[0].mxu0
  %v1058 = vadd.f32 %v848, %v1057
  %1059 = vmatprep.mubr.f32.mxu0 0.0
  %1060 = vmatmul.mubr.f32.gmra.mrb[0].mxu0 %v798
  %v1061 = vpop.f32.mrb[0].mxu0
  %v1062 = vadd.f32 %v844, %v1061
  %v1063 = vpop.f32.mrb[0].mxu0
  %v1064 = vadd.f32 %v848, %v1063
  %1065 = vmatprep.mubr.f32.mxu0 0.0
  %1066 = vmatmul.mubr.f32.gmra.mrb[0].mxu0 %v799
  %v1067 = vpop.f32.mrb[0].mxu0
  %v1068 = vadd.f32 %v844, %v1067
  %v1069 = vpop.f32.mrb[0].mxu0
  %v1070 = vadd.f32 %v848, %v1069
  %1071 = vmatprep.mubr.f32.mxu0 0.0
  %1072 = vmatmul.mubr.f32.gmra.mrb[0].mxu0 %v800
  %v1073 = vpop.f32.mrb[0].mxu0
  %v1074 = vadd.f32 %v844, %v1073
  %v1075 = vpop.f32.mrb[0].mxu0
  %v1076 = vadd.f32 %v848, %v1075
  %1077 = vmatprep.mubr.f32.mxu0 0.0
  %1078 = vmatmul.mubr.f32.gmra.mrb[0].mxu0 %v801
  %v1079 = vpop.f32.mrb[0].mxu0
  %v1080 = vadd.f32 %v844, %v1079
  %v1081 = vpop.f32.mrb[0].mxu0
  %v1082 = vadd.f32 %v848, %v1081
  %1083 = vmatprep.mubr.f32.mxu0 0.0
  %1084 = vmatmul.mubr.f32.gmra.mrb[0].mxu0 %v802
  %v1085 = vpop.f32.mrb[0].mxu0
  %v1086 = vadd.f32 %v844, %v1085
  %v1087 = vpop.f32.mrb[0].mxu0
  %v1088 = vadd.f32 %v848, %v1087
  %1089 = vmatprep.mubr.f32.mxu0 0.0
  %1090 = vmatmul.mubr.f32.gmra.mrb[0].mxu0 %v803
  %v1091 = vpop.f32.mrb[0].mxu0
  %v1092 = vadd.f32 %v844, %v1091
  %v1093 = vpop.f32.mrb[0].mxu0
  %v1094 = vadd.f32 %v848, %v1093
  %1095 = vmatprep.mubr.f32.mxu0 0.0
  %1096 = vmatmul.mubr.f32.gmra.mrb[0].mxu0 %v804
  %v1097 = vpop.f32.mrb[0].mxu0
  %v1098 = vadd.f32 %v844, %v1097
  %v1099 = vpop.f32.mrb[0].mxu0
  %v1100 = vadd.f32 %v848, %v1099
  %1101 = vmatprep.mubr.f32.mxu0 0.0
  %1102 = vmatmul.mubr.f32.gmra.mrb[0].mxu0 %v805
  %v1103 = vpop.f32.mrb[0].mxu0
  %v1104 = vadd.f32 %v844, %v1103
  %v1105 = vpop.f32.mrb[0].mxu0
  %v1106 = vadd.f32 %v848, %v1105
  %1107 = vdwg.mxu0
  %1140 = vrot.lane.b32.xlu0 %v920, 127
  %v1141 = vpop.permute.xlu0 %1140
  %1142 = vrot.lane.b32.xlu0 %v926, 127
  %v1143 = vpop.permute.xlu0 %1142
  %1144 = vrot.lane.b32.xlu0 %v932, 127
  %v1145 = vpop.permute.xlu0 %1144
  %1146 = vrot.lane.b32.xlu0 %v938, 127
  %v1147 = vpop.permute.xlu0 %1146
  %1148 = vrot.lane.b32.xlu0 %v944, 127
  %v1149 = vpop.permute.xlu0 %1148
  %1150 = vrot.lane.b32.xlu0 %v950, 127
  %v1151 = vpop.permute.xlu0 %1150
  %1152 = vrot.lane.b32.xlu0 %v956, 127
  %v1153 = vpop.permute.xlu0 %1152
  %1154 = vrot.lane.b32.xlu0 %v962, 127
  %v1155 = vpop.permute.xlu0 %1154
  %1156 = vrot.lane.b32.xlu0 %v968, 127
  %v1157 = vpop.permute.xlu0 %1156
  %1158 = vrot.lane.b32.xlu0 %v974, 127
  %v1159 = vpop.permute.xlu0 %1158
  %1160 = vrot.lane.b32.xlu0 %v980, 127
  %v1161 = vpop.permute.xlu0 %1160
  %1162 = vrot.lane.b32.xlu0 %v986, 127
  %v1163 = vpop.permute.xlu0 %1162
  %1164 = vrot.lane.b32.xlu0 %v992, 127
  %v1165 = vpop.permute.xlu0 %1164
  %1166 = vrot.lane.b32.xlu0 %v998, 127
  %v1167 = vpop.permute.xlu0 %1166
  %1168 = vrot.lane.b32.xlu0 %v1004, 127
  %v1169 = vpop.permute.xlu0 %1168
  %1170 = vrot.lane.b32.xlu0 %v1010, 127
  %v1171 = vpop.permute.xlu0 %1170
  %1172 = vrot.lane.b32.xlu0 %v1016, 127
  %v1173 = vpop.permute.xlu0 %1172
  %1174 = vrot.lane.b32.xlu0 %v1022, 127
  %v1175 = vpop.permute.xlu0 %1174
  %1176 = vrot.lane.b32.xlu0 %v1028, 127
  %v1177 = vpop.permute.xlu0 %1176
  %1178 = vrot.lane.b32.xlu0 %v1034, 127
  %v1179 = vpop.permute.xlu0 %1178
  %1180 = vrot.lane.b32.xlu0 %v1040, 127
  %v1181 = vpop.permute.xlu0 %1180
  %1182 = vrot.lane.b32.xlu0 %v1046, 127
  %v1183 = vpop.permute.xlu0 %1182
  %1184 = vrot.lane.b32.xlu0 %v1052, 127
  %v1185 = vpop.permute.xlu0 %1184
  %1186 = vrot.lane.b32.xlu0 %v1058, 127
  %v1187 = vpop.permute.xlu0 %1186
  %1188 = vrot.lane.b32.xlu0 %v1064, 127
  %v1189 = vpop.permute.xlu0 %1188
  %1190 = vrot.lane.b32.xlu0 %v1070, 127
  %v1191 = vpop.permute.xlu0 %1190
  %1192 = vrot.lane.b32.xlu0 %v1076, 127
  %v1193 = vpop.permute.xlu0 %1192
  %1194 = vrot.lane.b32.xlu0 %v1082, 127
  %v1195 = vpop.permute.xlu0 %1194
  %1196 = vrot.lane.b32.xlu0 %v1088, 127
  %v1197 = vpop.permute.xlu0 %1196
  %1198 = vrot.lane.b32.xlu0 %v1094, 127
  %v1199 = vpop.permute.xlu0 %1198
  %1200 = vrot.lane.b32.xlu0 %v1100, 127
  %v1201 = vpop.permute.xlu0 %1200
  %1202 = vrot.lane.b32.xlu0 %v1106, 127
  %v1203 = vpop.permute.xlu0 %1202
  %1236 = vxpose.xlu0.b32.start [1/16] %v1141, 128
  %1237 = vxpose.xlu0.b32.cont [2/16] %v1143, 128
  %1238 = vxpose.xlu0.b32.cont [3/16] %v1145, 128
  %1239 = vxpose.xlu0.b32.cont [4/16] %v1147, 128
  %1240 = vxpose.xlu0.b32.cont [5/16] %v1149, 128
  %1241 = vxpose.xlu0.b32.cont [6/16] %v1151, 128
  %1242 = vxpose.xlu0.b32.cont [7/16] %v1153, 128
  %1243 = vxpose.xlu0.b32.cont [8/16] %v1155, 128
  %1244 = vxpose.xlu0.b32.cont [9/16] %v1157, 128
  %1245 = vxpose.xlu0.b32.cont [10/16] %v1159, 128
  %1246 = vxpose.xlu0.b32.cont [11/16] %v1161, 128
  %1247 = vxpose.xlu0.b32.cont [12/16] %v1163, 128
  %1248 = vxpose.xlu0.b32.cont [13/16] %v1165, 128
  %1249 = vxpose.xlu0.b32.cont [14/16] %v1167, 128
  %1250 = vxpose.xlu0.b32.cont [15/16] %v1169, 128
  %1251 = vxpose.xlu0.b32.end [16/16] %v1171, 128
  %v1252 = vpop.trf.xlu0
  %v1253 = vpop.trf.xlu0
  %v1254 = vpop.trf.xlu0
  %v1255 = vpop.trf.xlu0
  %v1256 = vpop.trf.xlu0
  %v1257 = vpop.trf.xlu0
  %v1258 = vpop.trf.xlu0
  %v1259 = vpop.trf.xlu0
  %v1260 = vpop.trf.xlu0
  %v1261 = vpop.trf.xlu0
  %v1262 = vpop.trf.xlu0
  %v1263 = vpop.trf.xlu0
  %v1264 = vpop.trf.xlu0
  %v1265 = vpop.trf.xlu0
  %v1266 = vpop.trf.xlu0
  %v1267 = vpop.trf.xlu0
  %1268 = vxpose.xlu0.b32.start [1/16] %v1173, 128
  %1269 = vxpose.xlu0.b32.cont [2/16] %v1175, 128
  %1270 = vxpose.xlu0.b32.cont [3/16] %v1177, 128
  %1271 = vxpose.xlu0.b32.cont [4/16] %v1179, 128
  %1272 = vxpose.xlu0.b32.cont [5/16] %v1181, 128
  %1273 = vxpose.xlu0.b32.cont [6/16] %v1183, 128
  %1274 = vxpose.xlu0.b32.cont [7/16] %v1185, 128
  %1275 = vxpose.xlu0.b32.cont [8/16] %v1187, 128
  %1276 = vxpose.xlu0.b32.cont [9/16] %v1189, 128
  %1277 = vxpose.xlu0.b32.cont [10/16] %v1191, 128
  %1278 = vxpose.xlu0.b32.cont [11/16] %v1193, 128
  %1279 = vxpose.xlu0.b32.cont [12/16] %v1195, 128
  %1280 = vxpose.xlu0.b32.cont [13/16] %v1197, 128
  %1281 = vxpose.xlu0.b32.cont [14/16] %v1199, 128
  %1282 = vxpose.xlu0.b32.cont [15/16] %v1201, 128
  %1283 = vxpose.xlu0.b32.end [16/16] %v1203, 128
  %v1284 = vpop.trf.xlu0
  %v1285 = vpop.trf.xlu0
  %v1286 = vpop.trf.xlu0
  %v1287 = vpop.trf.xlu0
  %v1288 = vpop.trf.xlu0
  %v1289 = vpop.trf.xlu0
  %v1290 = vpop.trf.xlu0
  %v1291 = vpop.trf.xlu0
  %v1292 = vpop.trf.xlu0
  %v1293 = vpop.trf.xlu0
  %v1294 = vpop.trf.xlu0
  %v1295 = vpop.trf.xlu0
  %v1296 = vpop.trf.xlu0
  %v1297 = vpop.trf.xlu0
  %v1298 = vpop.trf.xlu0
  %v1299 = vpop.trf.xlu0
  %1300 = vset.pattern.permute.xlu0 0
  %1301 = vperm.xlu0 %1300, %v920
  %v1302 = vpop.permute.xlu0 %1301
  %1304 = vset.pattern.permute.xlu0 0
  %1305 = vperm.xlu0 %1304, %v926
  %v1306 = vpop.permute.xlu0 %1305
  %1308 = vset.pattern.permute.xlu0 0
  %1309 = vperm.xlu0 %1308, %v932
  %v1310 = vpop.permute.xlu0 %1309
  %1312 = vset.pattern.permute.xlu0 0
  %1313 = vperm.xlu0 %1312, %v938
  %v1314 = vpop.permute.xlu0 %1313
  %1316 = vset.pattern.permute.xlu0 0
  %1317 = vperm.xlu0 %1316, %v944
  %v1318 = vpop.permute.xlu0 %1317
  %1320 = vset.pattern.permute.xlu0 0
  %1321 = vperm.xlu0 %1320, %v950
  %v1322 = vpop.permute.xlu0 %1321
  %1324 = vset.pattern.permute.xlu0 0
  %1325 = vperm.xlu0 %1324, %v956
  %v1326 = vpop.permute.xlu0 %1325
  %1328 = vset.pattern.permute.xlu0 0
  %1329 = vperm.xlu0 %1328, %v962
  %v1330 = vpop.permute.xlu0 %1329
  %1332 = vset.pattern.permute.xlu0 0
  %1333 = vperm.xlu0 %1332, %v968
  %v1334 = vpop.permute.xlu0 %1333
  %1336 = vset.pattern.permute.xlu0 0
  %1337 = vperm.xlu0 %1336, %v974
  %v1338 = vpop.permute.xlu0 %1337
  %1340 = vset.pattern.permute.xlu0 0
  %1341 = vperm.xlu0 %1340, %v980
  %v1342 = vpop.permute.xlu0 %1341
  %1344 = vset.pattern.permute.xlu0 0
  %1345 = vperm.xlu0 %1344, %v986
  %v1346 = vpop.permute.xlu0 %1345
  %1348 = vset.pattern.permute.xlu0 0
  %1349 = vperm.xlu0 %1348, %v992
  %v1350 = vpop.permute.xlu0 %1349
  %1352 = vset.pattern.permute.xlu0 0
  %1353 = vperm.xlu0 %1352, %v998
  %v1354 = vpop.permute.xlu0 %1353
  %1356 = vset.pattern.permute.xlu0 0
  %1357 = vperm.xlu0 %1356, %v1004
  %v1358 = vpop.permute.xlu0 %1357
  %1360 = vset.pattern.permute.xlu0 0
  %1361 = vperm.xlu0 %1360, %v1010
  %v1362 = vpop.permute.xlu0 %1361
  %1364 = vset.pattern.permute.xlu0 0
  %1365 = vperm.xlu0 %1364, %v1016
  %v1366 = vpop.permute.xlu0 %1365
  %1368 = vset.pattern.permute.xlu0 0
  %1369 = vperm.xlu0 %1368, %v1022
  %v1370 = vpop.permute.xlu0 %1369
  %1372 = vset.pattern.permute.xlu0 0
  %1373 = vperm.xlu0 %1372, %v1028
  %v1374 = vpop.permute.xlu0 %1373
  %1376 = vset.pattern.permute.xlu0 0
  %1377 = vperm.xlu0 %1376, %v1034
  %v1378 = vpop.permute.xlu0 %1377
  %1380 = vset.pattern.permute.xlu0 0
  %1381 = vperm.xlu0 %1380, %v1040
  %v1382 = vpop.permute.xlu0 %1381
  %1384 = vset.pattern.permute.xlu0 0
  %1385 = vperm.xlu0 %1384, %v1046
  %v1386 = vpop.permute.xlu0 %1385
  %1388 = vset.pattern.permute.xlu0 0
  %1389 = vperm.xlu0 %1388, %v1052
  %v1390 = vpop.permute.xlu0 %1389
  %1392 = vset.pattern.permute.xlu0 0
  %1393 = vperm.xlu0 %1392, %v1058
  %v1394 = vpop.permute.xlu0 %1393
  %1396 = vset.pattern.permute.xlu0 0
  %1397 = vperm.xlu0 %1396, %v1064
  %v1398 = vpop.permute.xlu0 %1397
  %1400 = vset.pattern.permute.xlu0 0
  %1401 = vperm.xlu0 %1400, %v1070
  %v1402 = vpop.permute.xlu0 %1401
  %1404 = vset.pattern.permute.xlu0 0
  %1405 = vperm.xlu0 %1404, %v1076
  %v1406 = vpop.permute.xlu0 %1405
  %1408 = vset.pattern.permute.xlu0 0
  %1409 = vperm.xlu0 %1408, %v1082
  %v1410 = vpop.permute.xlu0 %1409
  %1412 = vset.pattern.permute.xlu0 0
  %1413 = vperm.xlu0 %1412, %v1088
  %v1414 = vpop.permute.xlu0 %1413
  %1416 = vset.pattern.permute.xlu0 0
  %1417 = vperm.xlu0 %1416, %v1094
  %v1418 = vpop.permute.xlu0 %1417
  %1420 = vset.pattern.permute.xlu0 0
  %1421 = vperm.xlu0 %1420, %v1100
  %v1422 = vpop.permute.xlu0 %1421
  %1424 = vset.pattern.permute.xlu0 0
  %1425 = vperm.xlu0 %1424, %v1106
  %v1426 = vpop.permute.xlu0 %1425
  %v1428 = vlaneseq
  %v1429 = vshrl.u32 %v1428, 7
  %v1430 = vsub.s32 0, %v1429
  %v1431 = vrot.slane %v1252, %v1430
  %v1432 = vlaneseq
  %v1433 = vshrl.u32 %v1432, 7
  %v1434 = vsub.s32 0, %v1433
  %v1435 = vrot.slane %v1284, %v1434
  %v1436 = vadd.f32 %v1302, %v1431
  %v1437 = vadd.f32 %v1302, %v1435
  %v1438 = vadd.f32 %v1306, %v1431
  %v1439 = vadd.f32 %v1306, %v1435
  %v1440 = vadd.f32 %v1310, %v1431
  %v1441 = vadd.f32 %v1310, %v1435
  %v1442 = vadd.f32 %v1314, %v1431
  %v1443 = vadd.f32 %v1314, %v1435
  %v1444 = vadd.f32 %v1318, %v1431
  %v1445 = vadd.f32 %v1318, %v1435
  %v1446 = vadd.f32 %v1322, %v1431
  %v1447 = vadd.f32 %v1322, %v1435
  %v1448 = vadd.f32 %v1326, %v1431
  %v1449 = vadd.f32 %v1326, %v1435
  %v1450 = vadd.f32 %v1330, %v1431
  %v1451 = vadd.f32 %v1330, %v1435
  %v1452 = vadd.f32 %v1334, %v1431
  %v1453 = vadd.f32 %v1334, %v1435
  %v1454 = vadd.f32 %v1338, %v1431
  %v1455 = vadd.f32 %v1338, %v1435
  %v1456 = vadd.f32 %v1342, %v1431
  %v1457 = vadd.f32 %v1342, %v1435
  %v1458 = vadd.f32 %v1346, %v1431
  %v1459 = vadd.f32 %v1346, %v1435
  %v1460 = vadd.f32 %v1350, %v1431
  %v1461 = vadd.f32 %v1350, %v1435
  %v1462 = vadd.f32 %v1354, %v1431
  %v1463 = vadd.f32 %v1354, %v1435
  %v1464 = vadd.f32 %v1358, %v1431
  %v1465 = vadd.f32 %v1358, %v1435
  %v1466 = vadd.f32 %v1362, %v1431
  %v1467 = vadd.f32 %v1362, %v1435
  %v1468 = vadd.f32 %v1366, %v1431
  %v1469 = vadd.f32 %v1366, %v1435
  %v1470 = vadd.f32 %v1370, %v1431
  %v1471 = vadd.f32 %v1370, %v1435
  %v1472 = vadd.f32 %v1374, %v1431
  %v1473 = vadd.f32 %v1374, %v1435
  %v1474 = vadd.f32 %v1378, %v1431
  %v1475 = vadd.f32 %v1378, %v1435
  %v1476 = vadd.f32 %v1382, %v1431
  %v1477 = vadd.f32 %v1382, %v1435
  %v1478 = vadd.f32 %v1386, %v1431
  %v1479 = vadd.f32 %v1386, %v1435
  %v1480 = vadd.f32 %v1390, %v1431
  %v1481 = vadd.f32 %v1390, %v1435
  %v1482 = vadd.f32 %v1394, %v1431
  %v1483 = vadd.f32 %v1394, %v1435
  %v1484 = vadd.f32 %v1398, %v1431
  %v1485 = vadd.f32 %v1398, %v1435
  %v1486 = vadd.f32 %v1402, %v1431
  %v1487 = vadd.f32 %v1402, %v1435
  %v1488 = vadd.f32 %v1406, %v1431
  %v1489 = vadd.f32 %v1406, %v1435
  %v1490 = vadd.f32 %v1410, %v1431
  %v1491 = vadd.f32 %v1410, %v1435
  %v1492 = vadd.f32 %v1414, %v1431
  %v1493 = vadd.f32 %v1414, %v1435
  %v1494 = vadd.f32 %v1418, %v1431
  %v1495 = vadd.f32 %v1418, %v1435
  %v1496 = vadd.f32 %v1422, %v1431
  %v1497 = vadd.f32 %v1422, %v1435
  %v1498 = vadd.f32 %v1426, %v1431
  %v1499 = vadd.f32 %v1426, %v1435
  %v1500 = vmul.f32 %v1436, 0.02
  %v1501 = vmul.f32 %v1437, 0.02
  %v1502 = vmul.f32 %v1438, 0.02
  %v1503 = vmul.f32 %v1439, 0.02
  %v1504 = vmul.f32 %v1440, 0.02
  %v1505 = vmul.f32 %v1441, 0.02
  %v1506 = vmul.f32 %v1442, 0.02
  %v1507 = vmul.f32 %v1443, 0.02
  %v1508 = vmul.f32 %v1444, 0.02
  %v1509 = vmul.f32 %v1445, 0.02
  %v1510 = vmul.f32 %v1446, 0.02
  %v1511 = vmul.f32 %v1447, 0.02
  %v1512 = vmul.f32 %v1448, 0.02
  %v1513 = vmul.f32 %v1449, 0.02
  %v1514 = vmul.f32 %v1450, 0.02
  %v1515 = vmul.f32 %v1451, 0.02
  %v1516 = vmul.f32 %v1452, 0.02
  %v1517 = vmul.f32 %v1453, 0.02
  %v1518 = vmul.f32 %v1454, 0.02
  %v1519 = vmul.f32 %v1455, 0.02
  %v1520 = vmul.f32 %v1456, 0.02
  %v1521 = vmul.f32 %v1457, 0.02
  %v1522 = vmul.f32 %v1458, 0.02
  %v1523 = vmul.f32 %v1459, 0.02
  %v1524 = vmul.f32 %v1460, 0.02
  %v1525 = vmul.f32 %v1461, 0.02
  %v1526 = vmul.f32 %v1462, 0.02
  %v1527 = vmul.f32 %v1463, 0.02
  %v1528 = vmul.f32 %v1464, 0.02
  %v1529 = vmul.f32 %v1465, 0.02
  %v1530 = vmul.f32 %v1466, 0.02
  %v1531 = vmul.f32 %v1467, 0.02
  %v1532 = vmul.f32 %v1468, 0.02
  %v1533 = vmul.f32 %v1469, 0.02
  %v1534 = vmul.f32 %v1470, 0.02
  %v1535 = vmul.f32 %v1471, 0.02
  %v1536 = vmul.f32 %v1472, 0.02
  %v1537 = vmul.f32 %v1473, 0.02
  %v1538 = vmul.f32 %v1474, 0.02
  %v1539 = vmul.f32 %v1475, 0.02
  %v1540 = vmul.f32 %v1476, 0.02
  %v1541 = vmul.f32 %v1477, 0.02
  %v1542 = vmul.f32 %v1478, 0.02
  %v1543 = vmul.f32 %v1479, 0.02
  %v1544 = vmul.f32 %v1480, 0.02
  %v1545 = vmul.f32 %v1481, 0.02
  %v1546 = vmul.f32 %v1482, 0.02
  %v1547 = vmul.f32 %v1483, 0.02
  %v1548 = vmul.f32 %v1484, 0.02
  %v1549 = vmul.f32 %v1485, 0.02
  %v1550 = vmul.f32 %v1486, 0.02
  %v1551 = vmul.f32 %v1487, 0.02
  %v1552 = vmul.f32 %v1488, 0.02
  %v1553 = vmul.f32 %v1489, 0.02
  %v1554 = vmul.f32 %v1490, 0.02
  %v1555 = vmul.f32 %v1491, 0.02
  %v1556 = vmul.f32 %v1492, 0.02
  %v1557 = vmul.f32 %v1493, 0.02
  %v1558 = vmul.f32 %v1494, 0.02
  %v1559 = vmul.f32 %v1495, 0.02
  %v1560 = vmul.f32 %v1496, 0.02
  %v1561 = vmul.f32 %v1497, 0.02
  %v1562 = vmul.f32 %v1498, 0.02
  %v1563 = vmul.f32 %v1499, 0.02
  %v1564 = vmax.f32 %v1436, %v1500
  %v1565 = vmax.f32 %v1437, %v1501
  %v1566 = vmax.f32 %v1438, %v1502
  %v1567 = vmax.f32 %v1439, %v1503
  %v1568 = vmax.f32 %v1440, %v1504
  %v1569 = vmax.f32 %v1441, %v1505
  %v1570 = vmax.f32 %v1442, %v1506
  %v1571 = vmax.f32 %v1443, %v1507
  %v1572 = vmax.f32 %v1444, %v1508
  %v1573 = vmax.f32 %v1445, %v1509
  %v1574 = vmax.f32 %v1446, %v1510
  %v1575 = vmax.f32 %v1447, %v1511
  %v1576 = vmax.f32 %v1448, %v1512
  %v1577 = vmax.f32 %v1449, %v1513
  %v1578 = vmax.f32 %v1450, %v1514
  %v1579 = vmax.f32 %v1451, %v1515
  %v1580 = vmax.f32 %v1452, %v1516
  %v1581 = vmax.f32 %v1453, %v1517
  %v1582 = vmax.f32 %v1454, %v1518
  %v1583 = vmax.f32 %v1455, %v1519
  %v1584 = vmax.f32 %v1456, %v1520
  %v1585 = vmax.f32 %v1457, %v1521
  %v1586 = vmax.f32 %v1458, %v1522
  %v1587 = vmax.f32 %v1459, %v1523
  %v1588 = vmax.f32 %v1460, %v1524
  %v1589 = vmax.f32 %v1461, %v1525
  %v1590 = vmax.f32 %v1462, %v1526
  %v1591 = vmax.f32 %v1463, %v1527
  %v1592 = vmax.f32 %v1464, %v1528
  %v1593 = vmax.f32 %v1465, %v1529
  %v1594 = vmax.f32 %v1466, %v1530
  %v1595 = vmax.f32 %v1467, %v1531
  %v1596 = vmax.f32 %v1468, %v1532
  %v1597 = vmax.f32 %v1469, %v1533
  %v1598 = vmax.f32 %v1470, %v1534
  %v1599 = vmax.f32 %v1471, %v1535
  %v1600 = vmax.f32 %v1472, %v1536
  %v1601 = vmax.f32 %v1473, %v1537
  %v1602 = vmax.f32 %v1474, %v1538
  %v1603 = vmax.f32 %v1475, %v1539
  %v1604 = vmax.f32 %v1476, %v1540
  %v1605 = vmax.f32 %v1477, %v1541
  %v1606 = vmax.f32 %v1478, %v1542
  %v1607 = vmax.f32 %v1479, %v1543
  %v1608 = vmax.f32 %v1480, %v1544
  %v1609 = vmax.f32 %v1481, %v1545
  %v1610 = vmax.f32 %v1482, %v1546
  %v1611 = vmax.f32 %v1483, %v1547
  %v1612 = vmax.f32 %v1484, %v1548
  %v1613 = vmax.f32 %v1485, %v1549
  %v1614 = vmax.f32 %v1486, %v1550
  %v1615 = vmax.f32 %v1487, %v1551
  %v1616 = vmax.f32 %v1488, %v1552
  %v1617 = vmax.f32 %v1489, %v1553
  %v1618 = vmax.f32 %v1490, %v1554
  %v1619 = vmax.f32 %v1491, %v1555
  %v1620 = vmax.f32 %v1492, %v1556
  %v1621 = vmax.f32 %v1493, %v1557
  %v1622 = vmax.f32 %v1494, %v1558
  %v1623 = vmax.f32 %v1495, %v1559
  %v1624 = vmax.f32 %v1496, %v1560
  %v1625 = vmax.f32 %v1497, %v1561
  %v1626 = vmax.f32 %v1498, %v1562
  %v1627 = vmax.f32 %v1499, %v1563
  %v1628 = vld [vmem:[%s1] sm:$0xff]
  %v1629 = vld [vmem:[%s1 + $0x8] sm:$0xff]
  %v1630 = vld [vmem:[%s1 + $0x10] sm:$0xff]
  %v1631 = vld [vmem:[%s1 + $0x18] sm:$0xff]
  %v1632 = vld [vmem:[%s1 + $0x20] sm:$0xff]
  %v1633 = vld [vmem:[%s1 + $0x28] sm:$0xff]
  %v1634 = vld [vmem:[%s1 + $0x30] sm:$0xff]
  %v1635 = vld [vmem:[%s1 + $0x38] sm:$0xff]
  %v1636 = vunpack.c.0.s8 %v1628
  %v1637 = vunpack.c.1.s8 %v1628
  %v1638 = vunpack.c.2.s8 %v1628
  %v1639 = vunpack.c.3.s8 %v1628
  %v1640 = vunpack.c.0.s8 %v1629
  %v1641 = vunpack.c.1.s8 %v1629
  %v1642 = vunpack.c.2.s8 %v1629
  %v1643 = vunpack.c.3.s8 %v1629
  %v1644 = vunpack.c.0.s8 %v1630
  %v1645 = vunpack.c.1.s8 %v1630
  %v1646 = vunpack.c.2.s8 %v1630
  %v1647 = vunpack.c.3.s8 %v1630
  %v1648 = vunpack.c.0.s8 %v1631
  %v1649 = vunpack.c.1.s8 %v1631
  %v1650 = vunpack.c.2.s8 %v1631
  %v1651 = vunpack.c.3.s8 %v1631
  %v1652 = vunpack.c.0.s8 %v1632
  %v1653 = vunpack.c.1.s8 %v1632
  %v1654 = vunpack.c.2.s8 %v1632
  %v1655 = vunpack.c.3.s8 %v1632
  %v1656 = vunpack.c.0.s8 %v1633
  %v1657 = vunpack.c.1.s8 %v1633
  %v1658 = vunpack.c.2.s8 %v1633
  %v1659 = vunpack.c.3.s8 %v1633
  %v1660 = vunpack.c.0.s8 %v1634
  %v1661 = vunpack.c.1.s8 %v1634
  %v1662 = vunpack.c.2.s8 %v1634
  %v1663 = vunpack.c.3.s8 %v1634
  %v1664 = vunpack.c.0.s8 %v1635
  %v1665 = vunpack.c.1.s8 %v1635
  %v1666 = vunpack.c.2.s8 %v1635
  %v1667 = vunpack.c.3.s8 %v1635
  %v1668 = vcvt.s32.f32 %v1636
  %v1669 = vcvt.s32.f32 %v1637
  %v1670 = vcvt.s32.f32 %v1638
  %v1671 = vcvt.s32.f32 %v1639
  %v1672 = vcvt.s32.f32 %v1640
  %v1673 = vcvt.s32.f32 %v1641
  %v1674 = vcvt.s32.f32 %v1642
  %v1675 = vcvt.s32.f32 %v1643
  %v1676 = vcvt.s32.f32 %v1644
  %v1677 = vcvt.s32.f32 %v1645
  %v1678 = vcvt.s32.f32 %v1646
  %v1679 = vcvt.s32.f32 %v1647
  %v1680 = vcvt.s32.f32 %v1648
  %v1681 = vcvt.s32.f32 %v1649
  %v1682 = vcvt.s32.f32 %v1650
  %v1683 = vcvt.s32.f32 %v1651
  %v1684 = vcvt.s32.f32 %v1652
  %v1685 = vcvt.s32.f32 %v1653
  %v1686 = vcvt.s32.f32 %v1654
  %v1687 = vcvt.s32.f32 %v1655
  %v1688 = vcvt.s32.f32 %v1656
  %v1689 = vcvt.s32.f32 %v1657
  %v1690 = vcvt.s32.f32 %v1658
  %v1691 = vcvt.s32.f32 %v1659
  %v1692 = vcvt.s32.f32 %v1660
  %v1693 = vcvt.s32.f32 %v1661
  %v1694 = vcvt.s32.f32 %v1662
  %v1695 = vcvt.s32.f32 %v1663
  %v1696 = vcvt.s32.f32 %v1664
  %v1697 = vcvt.s32.f32 %v1665
  %v1698 = vcvt.s32.f32 %v1666
  %v1699 = vcvt.s32.f32 %v1667
  %vm1700 = vcmask 523264
  %v1701 = vsel %vm1700, %v1668, 0.0
  %v1702 = vsel %vm1700, %v1669, 0.0
  %v1703 = vsel %vm1700, %v1670, 0.0
  %v1704 = vsel %vm1700, %v1671, 0.0
  %v1705 = vsel %vm1700, %v1672, 0.0
  %v1706 = vsel %vm1700, %v1673, 0.0
  %v1707 = vsel %vm1700, %v1674, 0.0
  %v1708 = vsel %vm1700, %v1675, 0.0
  %1717 = vrot.lane.b32.xlu0 %v1676, 64
  %v1718 = vpop.permute.xlu0 %1717
  %1719 = vrot.lane.b32.xlu0 %v1677, 64
  %v1720 = vpop.permute.xlu0 %1719
  %1721 = vrot.lane.b32.xlu0 %v1678, 64
  %v1722 = vpop.permute.xlu0 %1721
  %1723 = vrot.lane.b32.xlu0 %v1679, 64
  %v1724 = vpop.permute.xlu0 %1723
  %1725 = vrot.lane.b32.xlu0 %v1680, 64
  %v1726 = vpop.permute.xlu0 %1725
  %1727 = vrot.lane.b32.xlu0 %v1681, 64
  %v1728 = vpop.permute.xlu0 %1727
  %1729 = vrot.lane.b32.xlu0 %v1682, 64
  %v1730 = vpop.permute.xlu0 %1729
  %1731 = vrot.lane.b32.xlu0 %v1683, 64
  %v1732 = vpop.permute.xlu0 %1731
  %v1741 = vsel %vm1700, 0.0, %v1718
  %v1742 = vsel %vm1700, 0.0, %v1720
  %v1743 = vsel %vm1700, 0.0, %v1722
  %v1744 = vsel %vm1700, 0.0, %v1724
  %v1745 = vsel %vm1700, 0.0, %v1726
  %v1746 = vsel %vm1700, 0.0, %v1728
  %v1747 = vsel %vm1700, 0.0, %v1730
  %v1748 = vsel %vm1700, 0.0, %v1732
  %v1749 = vsel %vm1700, %v1684, 0.0
  %v1750 = vsel %vm1700, %v1685, 0.0
  %v1751 = vsel %vm1700, %v1686, 0.0
  %v1752 = vsel %vm1700, %v1687, 0.0
  %v1753 = vsel %vm1700, %v1688, 0.0
  %v1754 = vsel %vm1700, %v1689, 0.0
  %v1755 = vsel %vm1700, %v1690, 0.0
  %v1756 = vsel %vm1700, %v1691, 0.0
  %1765 = vrot.lane.b32.xlu0 %v1692, 64
  %v1766 = vpop.permute.xlu0 %1765
  %1767 = vrot.lane.b32.xlu0 %v1693, 64
  %v1768 = vpop.permute.xlu0 %1767
  %1769 = vrot.lane.b32.xlu0 %v1694, 64
  %v1770 = vpop.permute.xlu0 %1769
  %1771 = vrot.lane.b32.xlu0 %v1695, 64
  %v1772 = vpop.permute.xlu0 %1771
  %1773 = vrot.lane.b32.xlu0 %v1696, 64
  %v1774 = vpop.permute.xlu0 %1773
  %1775 = vrot.lane.b32.xlu0 %v1697, 64
  %v1776 = vpop.permute.xlu0 %1775
  %1777 = vrot.lane.b32.xlu0 %v1698, 64
  %v1778 = vpop.permute.xlu0 %1777
  %1779 = vrot.lane.b32.xlu0 %v1699, 64
  %v1780 = vpop.permute.xlu0 %1779
  %v1789 = vsel %vm1700, 0.0, %v1766
  %v1790 = vsel %vm1700, 0.0, %v1768
  %v1791 = vsel %vm1700, 0.0, %v1770
  %v1792 = vsel %vm1700, 0.0, %v1772
  %v1793 = vsel %vm1700, 0.0, %v1774
  %v1794 = vsel %vm1700, 0.0, %v1776
  %v1795 = vsel %vm1700, 0.0, %v1778
  %v1796 = vsel %vm1700, 0.0, %v1780
  %vm1797 = vcmp.ne.f32.partialorder %v1701, 0.0
  %vm1798 = vcmp.ne.f32.partialorder 0.0, 0.0
  %vm1799 = vcmp.ne.f32.partialorder %v1702, 0.0
  %vm1800 = vcmp.ne.f32.partialorder %v1703, 0.0
  %vm1801 = vcmp.ne.f32.partialorder %v1704, 0.0
  %vm1802 = vcmp.ne.f32.partialorder %v1705, 0.0
  %vm1803 = vcmp.ne.f32.partialorder %v1706, 0.0
  %vm1804 = vcmp.ne.f32.partialorder %v1707, 0.0
  %vm1805 = vcmp.ne.f32.partialorder %v1708, 0.0
  %vm1806 = vcmp.ne.f32.partialorder %v1741, 0.0
  %vm1807 = vcmp.ne.f32.partialorder %v1742, 0.0
  %vm1808 = vcmp.ne.f32.partialorder %v1743, 0.0
  %vm1809 = vcmp.ne.f32.partialorder %v1744, 0.0
  %vm1810 = vcmp.ne.f32.partialorder %v1745, 0.0
  %vm1811 = vcmp.ne.f32.partialorder %v1746, 0.0
  %vm1812 = vcmp.ne.f32.partialorder %v1747, 0.0
  %vm1813 = vcmp.ne.f32.partialorder %v1748, 0.0
  %vm1814 = vcmp.ne.f32.partialorder %v1749, 0.0
  %vm1815 = vcmp.ne.f32.partialorder %v1750, 0.0
  %vm1816 = vcmp.ne.f32.partialorder %v1751, 0.0
  %vm1817 = vcmp.ne.f32.partialorder %v1752, 0.0
  %vm1818 = vcmp.ne.f32.partialorder %v1753, 0.0
  %vm1819 = vcmp.ne.f32.partialorder %v1754, 0.0
  %vm1820 = vcmp.ne.f32.partialorder %v1755, 0.0
  %vm1821 = vcmp.ne.f32.partialorder %v1756, 0.0
  %vm1822 = vcmp.ne.f32.partialorder %v1789, 0.0
  %vm1823 = vcmp.ne.f32.partialorder %v1790, 0.0
  %vm1824 = vcmp.ne.f32.partialorder %v1791, 0.0
  %vm1825 = vcmp.ne.f32.partialorder %v1792, 0.0
  %vm1826 = vcmp.ne.f32.partialorder %v1793, 0.0
  %vm1827 = vcmp.ne.f32.partialorder %v1794, 0.0
  %vm1828 = vcmp.ne.f32.partialorder %v1795, 0.0
  %vm1829 = vcmp.ne.f32.partialorder %v1796, 0.0
  %v1830 = vsel %vm1797, %v1564, -9e+15
  %v1831 = vsel %vm1798, %v1565, -9e+15
  %v1832 = vsel %vm1799, %v1566, -9e+15
  %v1833 = vsel %vm1798, %v1567, -9e+15
  %v1834 = vsel %vm1800, %v1568, -9e+15
  %v1835 = vsel %vm1798, %v1569, -9e+15
  %v1836 = vsel %vm1801, %v1570, -9e+15
  %v1837 = vsel %vm1798, %v1571, -9e+15
  %v1838 = vsel %vm1802, %v1572, -9e+15
  %v1839 = vsel %vm1798, %v1573, -9e+15
  %v1840 = vsel %vm1803, %v1574, -9e+15
  %v1841 = vsel %vm1798, %v1575, -9e+15
  %v1842 = vsel %vm1804, %v1576, -9e+15
  %v1843 = vsel %vm1798, %v1577, -9e+15
  %v1844 = vsel %vm1805, %v1578, -9e+15
  %v1845 = vsel %vm1798, %v1579, -9e+15
  %v1846 = vsel %vm1806, %v1580, -9e+15
  %v1847 = vsel %vm1798, %v1581, -9e+15
  %v1848 = vsel %vm1807, %v1582, -9e+15
  %v1849 = vsel %vm1798, %v1583, -9e+15
  %v1850 = vsel %vm1808, %v1584, -9e+15
  %v1851 = vsel %vm1798, %v1585, -9e+15
  %v1852 = vsel %vm1809, %v1586, -9e+15
  %v1853 = vsel %vm1798, %v1587, -9e+15
  %v1854 = vsel %vm1810, %v1588, -9e+15
  %v1855 = vsel %vm1798, %v1589, -9e+15
  %v1856 = vsel %vm1811, %v1590, -9e+15
  %v1857 = vsel %vm1798, %v1591, -9e+15
  %v1858 = vsel %vm1812, %v1592, -9e+15
  %v1859 = vsel %vm1798, %v1593, -9e+15
  %v1860 = vsel %vm1813, %v1594, -9e+15
  %v1861 = vsel %vm1798, %v1595, -9e+15
  %v1862 = vsel %vm1798, %v1596, -9e+15
  %v1863 = vsel %vm1814, %v1597, -9e+15
  %v1864 = vsel %vm1798, %v1598, -9e+15
  %v1865 = vsel %vm1815, %v1599, -9e+15
  %v1866 = vsel %vm1798, %v1600, -9e+15
  %v1867 = vsel %vm1816, %v1601, -9e+15
  %v1868 = vsel %vm1798, %v1602, -9e+15
  %v1869 = vsel %vm1817, %v1603, -9e+15
  %v1870 = vsel %vm1798, %v1604, -9e+15
  %v1871 = vsel %vm1818, %v1605, -9e+15
  %v1872 = vsel %vm1798, %v1606, -9e+15
  %v1873 = vsel %vm1819, %v1607, -9e+15
  %v1874 = vsel %vm1798, %v1608, -9e+15
  %v1875 = vsel %vm1820, %v1609, -9e+15
  %v1876 = vsel %vm1798, %v1610, -9e+15
  %v1877 = vsel %vm1821, %v1611, -9e+15
  %v1878 = vsel %vm1798, %v1612, -9e+15
  %v1879 = vsel %vm1822, %v1613, -9e+15
  %v1880 = vsel %vm1798, %v1614, -9e+15
  %v1881 = vsel %vm1823, %v1615, -9e+15
  %v1882 = vsel %vm1798, %v1616, -9e+15
  %v1883 = vsel %vm1824, %v1617, -9e+15
  %v1884 = vsel %vm1798, %v1618, -9e+15
  %v1885 = vsel %vm1825, %v1619, -9e+15
  %v1886 = vsel %vm1798, %v1620, -9e+15
  %v1887 = vsel %vm1826, %v1621, -9e+15
  %v1888 = vsel %vm1798, %v1622, -9e+15
  %v1889 = vsel %vm1827, %v1623, -9e+15
  %v1890 = vsel %vm1798, %v1624, -9e+15
  %v1891 = vsel %vm1828, %v1625, -9e+15
  %v1892 = vsel %vm1798, %v1626, -9e+15
  %v1893 = vsel %vm1829, %v1627, -9e+15
  %v1894 = vmax.f32 %v1830, %v1831
  %1895 = vmax.xlane.f32.xlu0 %v1894
  %v1896 = vpop.xlane.xlu0 %1895
  %v1897 = vmax.f32 %v1832, %v1833
  %1898 = vmax.xlane.f32.xlu0 %v1897
  %v1899 = vpop.xlane.xlu0 %1898
  %v1900 = vmax.f32 %v1834, %v1835
  %1901 = vmax.xlane.f32.xlu0 %v1900
  %v1902 = vpop.xlane.xlu0 %1901
  %v1903 = vmax.f32 %v1836, %v1837
  %1904 = vmax.xlane.f32.xlu0 %v1903
  %v1905 = vpop.xlane.xlu0 %1904
  %v1906 = vmax.f32 %v1838, %v1839
  %1907 = vmax.xlane.f32.xlu0 %v1906
  %v1908 = vpop.xlane.xlu0 %1907
  %v1909 = vmax.f32 %v1840, %v1841
  %1910 = vmax.xlane.f32.xlu0 %v1909
  %v1911 = vpop.xlane.xlu0 %1910
  %v1912 = vmax.f32 %v1842, %v1843
  %1913 = vmax.xlane.f32.xlu0 %v1912
  %v1914 = vpop.xlane.xlu0 %1913
  %v1915 = vmax.f32 %v1844, %v1845
  %1916 = vmax.xlane.f32.xlu0 %v1915
  %v1917 = vpop.xlane.xlu0 %1916
  %v1918 = vmax.f32 %v1846, %v1847
  %1919 = vmax.xlane.f32.xlu0 %v1918
  %v1920 = vpop.xlane.xlu0 %1919
  %v1921 = vmax.f32 %v1848, %v1849
  %1922 = vmax.xlane.f32.xlu0 %v1921
  %v1923 = vpop.xlane.xlu0 %1922
  %v1924 = vmax.f32 %v1850, %v1851
  %1925 = vmax.xlane.f32.xlu0 %v1924
  %v1926 = vpop.xlane.xlu0 %1925
  %v1927 = vmax.f32 %v1852, %v1853
  %1928 = vmax.xlane.f32.xlu0 %v1927
  %v1929 = vpop.xlane.xlu0 %1928
  %v1930 = vmax.f32 %v1854, %v1855
  %1931 = vmax.xlane.f32.xlu0 %v1930
  %v1932 = vpop.xlane.xlu0 %1931
  %v1933 = vmax.f32 %v1856, %v1857
  %1934 = vmax.xlane.f32.xlu0 %v1933
  %v1935 = vpop.xlane.xlu0 %1934
  %v1936 = vmax.f32 %v1858, %v1859
  %1937 = vmax.xlane.f32.xlu0 %v1936
  %v1938 = vpop.xlane.xlu0 %1937
  %v1939 = vmax.f32 %v1860, %v1861
  %1940 = vmax.xlane.f32.xlu0 %v1939
  %v1941 = vpop.xlane.xlu0 %1940
  %v1942 = vmax.f32 %v1862, %v1863
  %1943 = vmax.xlane.f32.xlu0 %v1942
  %v1944 = vpop.xlane.xlu0 %1943
  %v1945 = vmax.f32 %v1864, %v1865
  %1946 = vmax.xlane.f32.xlu0 %v1945
  %v1947 = vpop.xlane.xlu0 %1946
  %v1948 = vmax.f32 %v1866, %v1867
  %1949 = vmax.xlane.f32.xlu0 %v1948
  %v1950 = vpop.xlane.xlu0 %1949
  %v1951 = vmax.f32 %v1868, %v1869
  %1952 = vmax.xlane.f32.xlu0 %v1951
  %v1953 = vpop.xlane.xlu0 %1952
  %v1954 = vmax.f32 %v1870, %v1871
  %1955 = vmax.xlane.f32.xlu0 %v1954
  %v1956 = vpop.xlane.xlu0 %1955
  %v1957 = vmax.f32 %v1872, %v1873
  %1958 = vmax.xlane.f32.xlu0 %v1957
  %v1959 = vpop.xlane.xlu0 %1958
  %v1960 = vmax.f32 %v1874, %v1875
  %1961 = vmax.xlane.f32.xlu0 %v1960
  %v1962 = vpop.xlane.xlu0 %1961
  %v1963 = vmax.f32 %v1876, %v1877
  %1964 = vmax.xlane.f32.xlu0 %v1963
  %v1965 = vpop.xlane.xlu0 %1964
  %v1966 = vmax.f32 %v1878, %v1879
  %1967 = vmax.xlane.f32.xlu0 %v1966
  %v1968 = vpop.xlane.xlu0 %1967
  %v1969 = vmax.f32 %v1880, %v1881
  %1970 = vmax.xlane.f32.xlu0 %v1969
  %v1971 = vpop.xlane.xlu0 %1970
  %v1972 = vmax.f32 %v1882, %v1883
  %1973 = vmax.xlane.f32.xlu0 %v1972
  %v1974 = vpop.xlane.xlu0 %1973
  %v1975 = vmax.f32 %v1884, %v1885
  %1976 = vmax.xlane.f32.xlu0 %v1975
  %v1977 = vpop.xlane.xlu0 %1976
  %v1978 = vmax.f32 %v1886, %v1887
  %1979 = vmax.xlane.f32.xlu0 %v1978
  %v1980 = vpop.xlane.xlu0 %1979
  %v1981 = vmax.f32 %v1888, %v1889
  %1982 = vmax.xlane.f32.xlu0 %v1981
  %v1983 = vpop.xlane.xlu0 %1982
  %v1984 = vmax.f32 %v1890, %v1891
  %1985 = vmax.xlane.f32.xlu0 %v1984
  %v1986 = vpop.xlane.xlu0 %1985
  %v1987 = vmax.f32 %v1892, %v1893
  %1988 = vmax.xlane.f32.xlu0 %v1987
  %v1989 = vpop.xlane.xlu0 %1988
  %v1990 = vsub.f32 %v1830, %v1896
  %v1991 = vsub.f32 %v1831, %v1896
  %v1992 = vsub.f32 %v1832, %v1899
  %v1993 = vsub.f32 %v1833, %v1899
  %v1994 = vsub.f32 %v1834, %v1902
  %v1995 = vsub.f32 %v1835, %v1902
  %v1996 = vsub.f32 %v1836, %v1905
  %v1997 = vsub.f32 %v1837, %v1905
  %v1998 = vsub.f32 %v1838, %v1908
  %v1999 = vsub.f32 %v1839, %v1908
  %v2000 = vsub.f32 %v1840, %v1911
  %v2001 = vsub.f32 %v1841, %v1911
  %v2002 = vsub.f32 %v1842, %v1914
  %v2003 = vsub.f32 %v1843, %v1914
  %v2004 = vsub.f32 %v1844, %v1917
  %v2005 = vsub.f32 %v1845, %v1917
  %v2006 = vsub.f32 %v1846, %v1920
  %v2007 = vsub.f32 %v1847, %v1920
  %v2008 = vsub.f32 %v1848, %v1923
  %v2009 = vsub.f32 %v1849, %v1923
  %v2010 = vsub.f32 %v1850, %v1926
  %v2011 = vsub.f32 %v1851, %v1926
  %v2012 = vsub.f32 %v1852, %v1929
  %v2013 = vsub.f32 %v1853, %v1929
  %v2014 = vsub.f32 %v1854, %v1932
  %v2015 = vsub.f32 %v1855, %v1932
  %v2016 = vsub.f32 %v1856, %v1935
  %v2017 = vsub.f32 %v1857, %v1935
  %v2018 = vsub.f32 %v1858, %v1938
  %v2019 = vsub.f32 %v1859, %v1938
  %v2020 = vsub.f32 %v1860, %v1941
  %v2021 = vsub.f32 %v1861, %v1941
  %v2022 = vsub.f32 %v1862, %v1944
  %v2023 = vsub.f32 %v1863, %v1944
  %v2024 = vsub.f32 %v1864, %v1947
  %v2025 = vsub.f32 %v1865, %v1947
  %v2026 = vsub.f32 %v1866, %v1950
  %v2027 = vsub.f32 %v1867, %v1950
  %v2028 = vsub.f32 %v1868, %v1953
  %v2029 = vsub.f32 %v1869, %v1953
  %v2030 = vsub.f32 %v1870, %v1956
  %v2031 = vsub.f32 %v1871, %v1956
  %v2032 = vsub.f32 %v1872, %v1959
  %v2033 = vsub.f32 %v1873, %v1959
  %v2034 = vsub.f32 %v1874, %v1962
  %v2035 = vsub.f32 %v1875, %v1962
  %v2036 = vsub.f32 %v1876, %v1965
  %v2037 = vsub.f32 %v1877, %v1965
  %v2038 = vsub.f32 %v1878, %v1968
  %v2039 = vsub.f32 %v1879, %v1968
  %v2040 = vsub.f32 %v1880, %v1971
  %v2041 = vsub.f32 %v1881, %v1971
  %v2042 = vsub.f32 %v1882, %v1974
  %v2043 = vsub.f32 %v1883, %v1974
  %v2044 = vsub.f32 %v1884, %v1977
  %v2045 = vsub.f32 %v1885, %v1977
  %v2046 = vsub.f32 %v1886, %v1980
  %v2047 = vsub.f32 %v1887, %v1980
  %v2048 = vsub.f32 %v1888, %v1983
  %v2049 = vsub.f32 %v1889, %v1983
  %v2050 = vsub.f32 %v1890, %v1986
  %v2051 = vsub.f32 %v1891, %v1986
  %v2052 = vsub.f32 %v1892, %v1989
  %v2053 = vsub.f32 %v1893, %v1989
  %v2054 = vmul.f32 %v1990, 1.442695
  %v2055 = vpow.pop %v2054
  %v2056 = vmul.f32 %v1991, 1.442695
  %v2057 = vpow.pop %v2056
  %v2058 = vmul.f32 %v1992, 1.442695
  %v2059 = vpow.pop %v2058
  %v2060 = vmul.f32 %v1993, 1.442695
  %v2061 = vpow.pop %v2060
  %v2062 = vmul.f32 %v1994, 1.442695
  %v2063 = vpow.pop %v2062
  %v2064 = vmul.f32 %v1995, 1.442695
  %v2065 = vpow.pop %v2064
  %v2066 = vmul.f32 %v1996, 1.442695
  %v2067 = vpow.pop %v2066
  %v2068 = vmul.f32 %v1997, 1.442695
  %v2069 = vpow.pop %v2068
  %v2070 = vmul.f32 %v1998, 1.442695
  %v2071 = vpow.pop %v2070
  %v2072 = vmul.f32 %v1999, 1.442695
  %v2073 = vpow.pop %v2072
  %v2074 = vmul.f32 %v2000, 1.442695
  %v2075 = vpow.pop %v2074
  %v2076 = vmul.f32 %v2001, 1.442695
  %v2077 = vpow.pop %v2076
  %v2078 = vmul.f32 %v2002, 1.442695
  %v2079 = vpow.pop %v2078
  %v2080 = vmul.f32 %v2003, 1.442695
  %v2081 = vpow.pop %v2080
  %v2082 = vmul.f32 %v2004, 1.442695
  %v2083 = vpow.pop %v2082
  %v2084 = vmul.f32 %v2005, 1.442695
  %v2085 = vpow.pop %v2084
  %v2086 = vmul.f32 %v2006, 1.442695
  %v2087 = vpow.pop %v2086
  %v2088 = vmul.f32 %v2007, 1.442695
  %v2089 = vpow.pop %v2088
  %v2090 = vmul.f32 %v2008, 1.442695
  %v2091 = vpow.pop %v2090
  %v2092 = vmul.f32 %v2009, 1.442695
  %v2093 = vpow.pop %v2092
  %v2094 = vmul.f32 %v2010, 1.442695
  %v2095 = vpow.pop %v2094
  %v2096 = vmul.f32 %v2011, 1.442695
  %v2097 = vpow.pop %v2096
  %v2098 = vmul.f32 %v2012, 1.442695
  %v2099 = vpow.pop %v2098
  %v2100 = vmul.f32 %v2013, 1.442695
  %v2101 = vpow.pop %v2100
  %v2102 = vmul.f32 %v2014, 1.442695
  %v2103 = vpow.pop %v2102
  %v2104 = vmul.f32 %v2015, 1.442695
  %v2105 = vpow.pop %v2104
  %v2106 = vmul.f32 %v2016, 1.442695
  %v2107 = vpow.pop %v2106
  %v2108 = vmul.f32 %v2017, 1.442695
  %v2109 = vpow.pop %v2108
  %v2110 = vmul.f32 %v2018, 1.442695
  %v2111 = vpow.pop %v2110
  %v2112 = vmul.f32 %v2019, 1.442695
  %v2113 = vpow.pop %v2112
  %v2114 = vmul.f32 %v2020, 1.442695
  %v2115 = vpow.pop %v2114
  %v2116 = vmul.f32 %v2021, 1.442695
  %v2117 = vpow.pop %v2116
  %v2118 = vmul.f32 %v2022, 1.442695
  %v2119 = vpow.pop %v2118
  %v2120 = vmul.f32 %v2023, 1.442695
  %v2121 = vpow.pop %v2120
  %v2122 = vmul.f32 %v2024, 1.442695
  %v2123 = vpow.pop %v2122
  %v2124 = vmul.f32 %v2025, 1.442695
  %v2125 = vpow.pop %v2124
  %v2126 = vmul.f32 %v2026, 1.442695
  %v2127 = vpow.pop %v2126
  %v2128 = vmul.f32 %v2027, 1.442695
  %v2129 = vpow.pop %v2128
  %v2130 = vmul.f32 %v2028, 1.442695
  %v2131 = vpow.pop %v2130
  %v2132 = vmul.f32 %v2029, 1.442695
  %v2133 = vpow.pop %v2132
  %v2134 = vmul.f32 %v2030, 1.442695
  %v2135 = vpow.pop %v2134
  %v2136 = vmul.f32 %v2031, 1.442695
  %v2137 = vpow.pop %v2136
  %v2138 = vmul.f32 %v2032, 1.442695
  %v2139 = vpow.pop %v2138
  %v2140 = vmul.f32 %v2033, 1.442695
  %v2141 = vpow.pop %v2140
  %v2142 = vmul.f32 %v2034, 1.442695
  %v2143 = vpow.pop %v2142
  %v2144 = vmul.f32 %v2035, 1.442695
  %v2145 = vpow.pop %v2144
  %v2146 = vmul.f32 %v2036, 1.442695
  %v2147 = vpow.pop %v2146
  %v2148 = vmul.f32 %v2037, 1.442695
  %v2149 = vpow.pop %v2148
  %v2150 = vmul.f32 %v2038, 1.442695
  %v2151 = vpow.pop %v2150
  %v2152 = vmul.f32 %v2039, 1.442695
  %v2153 = vpow.pop %v2152
  %v2154 = vmul.f32 %v2040, 1.442695
  %v2155 = vpow.pop %v2154
  %v2156 = vmul.f32 %v2041, 1.442695
  %v2157 = vpow.pop %v2156
  %v2158 = vmul.f32 %v2042, 1.442695
  %v2159 = vpow.pop %v2158
  %v2160 = vmul.f32 %v2043, 1.442695
  %v2161 = vpow.pop %v2160
  %v2162 = vmul.f32 %v2044, 1.442695
  %v2163 = vpow.pop %v2162
  %v2164 = vmul.f32 %v2045, 1.442695
  %v2165 = vpow.pop %v2164
  %v2166 = vmul.f32 %v2046, 1.442695
  %v2167 = vpow.pop %v2166
  %v2168 = vmul.f32 %v2047, 1.442695
  %v2169 = vpow.pop %v2168
  %v2170 = vmul.f32 %v2048, 1.442695
  %v2171 = vpow.pop %v2170
  %v2172 = vmul.f32 %v2049, 1.442695
  %v2173 = vpow.pop %v2172
  %v2174 = vmul.f32 %v2050, 1.442695
  %v2175 = vpow.pop %v2174
  %v2176 = vmul.f32 %v2051, 1.442695
  %v2177 = vpow.pop %v2176
  %v2178 = vmul.f32 %v2052, 1.442695
  %v2179 = vpow.pop %v2178
  %v2180 = vmul.f32 %v2053, 1.442695
  %v2181 = vpow.pop %v2180
  %v2182 = vadd.f32 %v2055, %v2057
  %2183 = vadd.xlane.f32.xlu0 %v2182
  %v2184 = vpop.xlane.xlu0 %2183
  %v2185 = vadd.f32 %v2059, %v2061
  %2186 = vadd.xlane.f32.xlu0 %v2185
  %v2187 = vpop.xlane.xlu0 %2186
  %v2188 = vadd.f32 %v2063, %v2065
  %2189 = vadd.xlane.f32.xlu0 %v2188
  %v2190 = vpop.xlane.xlu0 %2189
  %v2191 = vadd.f32 %v2067, %v2069
  %2192 = vadd.xlane.f32.xlu0 %v2191
  %v2193 = vpop.xlane.xlu0 %2192
  %v2194 = vadd.f32 %v2071, %v2073
  %2195 = vadd.xlane.f32.xlu0 %v2194
  %v2196 = vpop.xlane.xlu0 %2195
  %v2197 = vadd.f32 %v2075, %v2077
  %2198 = vadd.xlane.f32.xlu0 %v2197
  %v2199 = vpop.xlane.xlu0 %2198
  %v2200 = vadd.f32 %v2079, %v2081
  %2201 = vadd.xlane.f32.xlu0 %v2200
  %v2202 = vpop.xlane.xlu0 %2201
  %v2203 = vadd.f32 %v2083, %v2085
  %2204 = vadd.xlane.f32.xlu0 %v2203
  %v2205 = vpop.xlane.xlu0 %2204
  %v2206 = vadd.f32 %v2087, %v2089
  %2207 = vadd.xlane.f32.xlu0 %v2206
  %v2208 = vpop.xlane.xlu0 %2207
  %v2209 = vadd.f32 %v2091, %v2093
  %2210 = vadd.xlane.f32.xlu0 %v2209
  %v2211 = vpop.xlane.xlu0 %2210
  %v2212 = vadd.f32 %v2095, %v2097
  %2213 = vadd.xlane.f32.xlu0 %v2212
  %v2214 = vpop.xlane.xlu0 %2213
  %v2215 = vadd.f32 %v2099, %v2101
  %2216 = vadd.xlane.f32.xlu0 %v2215
  %v2217 = vpop.xlane.xlu0 %2216
  %v2218 = vadd.f32 %v2103, %v2105
  %2219 = vadd.xlane.f32.xlu0 %v2218
  %v2220 = vpop.xlane.xlu0 %2219
  %v2221 = vadd.f32 %v2107, %v2109
  %2222 = vadd.xlane.f32.xlu0 %v2221
  %v2223 = vpop.xlane.xlu0 %2222
  %v2224 = vadd.f32 %v2111, %v2113
  %2225 = vadd.xlane.f32.xlu0 %v2224
  %v2226 = vpop.xlane.xlu0 %2225
  %v2227 = vadd.f32 %v2115, %v2117
  %2228 = vadd.xlane.f32.xlu0 %v2227
  %v2229 = vpop.xlane.xlu0 %2228
  %v2230 = vadd.f32 %v2119, %v2121
  %2231 = vadd.xlane.f32.xlu0 %v2230
  %v2232 = vpop.xlane.xlu0 %2231
  %v2233 = vadd.f32 %v2123, %v2125
  %2234 = vadd.xlane.f32.xlu0 %v2233
  %v2235 = vpop.xlane.xlu0 %2234
  %v2236 = vadd.f32 %v2127, %v2129
  %2237 = vadd.xlane.f32.xlu0 %v2236
  %v2238 = vpop.xlane.xlu0 %2237
  %v2239 = vadd.f32 %v2131, %v2133
  %2240 = vadd.xlane.f32.xlu0 %v2239
  %v2241 = vpop.xlane.xlu0 %2240
  %v2242 = vadd.f32 %v2135, %v2137
  %2243 = vadd.xlane.f32.xlu0 %v2242
  %v2244 = vpop.xlane.xlu0 %2243
  %v2245 = vadd.f32 %v2139, %v2141
  %2246 = vadd.xlane.f32.xlu0 %v2245
  %v2247 = vpop.xlane.xlu0 %2246
  %v2248 = vadd.f32 %v2143, %v2145
  %2249 = vadd.xlane.f32.xlu0 %v2248
  %v2250 = vpop.xlane.xlu0 %2249
  %v2251 = vadd.f32 %v2147, %v2149
  %2252 = vadd.xlane.f32.xlu0 %v2251
  %v2253 = vpop.xlane.xlu0 %2252
  %v2254 = vadd.f32 %v2151, %v2153
  %2255 = vadd.xlane.f32.xlu0 %v2254
  %v2256 = vpop.xlane.xlu0 %2255
  %v2257 = vadd.f32 %v2155, %v2157
  %2258 = vadd.xlane.f32.xlu0 %v2257
  %v2259 = vpop.xlane.xlu0 %2258
  %v2260 = vadd.f32 %v2159, %v2161
  %2261 = vadd.xlane.f32.xlu0 %v2260
  %v2262 = vpop.xlane.xlu0 %2261
  %v2263 = vadd.f32 %v2163, %v2165
  %2264 = vadd.xlane.f32.xlu0 %v2263
  %v2265 = vpop.xlane.xlu0 %2264
  %v2266 = vadd.f32 %v2167, %v2169
  %2267 = vadd.xlane.f32.xlu0 %v2266
  %v2268 = vpop.xlane.xlu0 %2267
  %v2269 = vadd.f32 %v2171, %v2173
  %2270 = vadd.xlane.f32.xlu0 %v2269
  %v2271 = vpop.xlane.xlu0 %2270
  %v2272 = vadd.f32 %v2175, %v2177
  %2273 = vadd.xlane.f32.xlu0 %v2272
  %v2274 = vpop.xlane.xlu0 %2273
  %v2275 = vadd.f32 %v2179, %v2181
  %2276 = vadd.xlane.f32.xlu0 %v2275
  %v2277 = vpop.xlane.xlu0 %2276
  %v2278 = vrcp.pop %v2184
  %v2279 = vrcp.pop %v2187
  %v2280 = vrcp.pop %v2190
  %v2281 = vrcp.pop %v2193
  %v2282 = vrcp.pop %v2196
  %v2283 = vrcp.pop %v2199
  %v2284 = vrcp.pop %v2202
  %v2285 = vrcp.pop %v2205
  %v2286 = vrcp.pop %v2208
  %v2287 = vrcp.pop %v2211
  %v2288 = vrcp.pop %v2214
  %v2289 = vrcp.pop %v2217
  %v2290 = vrcp.pop %v2220
  %v2291 = vrcp.pop %v2223
  %v2292 = vrcp.pop %v2226
  %v2293 = vrcp.pop %v2229
  %v2294 = vrcp.pop %v2232
  %v2295 = vrcp.pop %v2235
  %v2296 = vrcp.pop %v2238
  %v2297 = vrcp.pop %v2241
  %v2298 = vrcp.pop %v2244
  %v2299 = vrcp.pop %v2247
  %v2300 = vrcp.pop %v2250
  %v2301 = vrcp.pop %v2253
  %v2302 = vrcp.pop %v2256
  %v2303 = vrcp.pop %v2259
  %v2304 = vrcp.pop %v2262
  %v2305 = vrcp.pop %v2265
  %v2306 = vrcp.pop %v2268
  %v2307 = vrcp.pop %v2271
  %v2308 = vrcp.pop %v2274
  %v2309 = vrcp.pop %v2277
  %v2310 = vmul.f32 %v2055, %v2278
  %v2311 = vmul.f32 %v2057, %v2278
  %v2312 = vmul.f32 %v2059, %v2279
  %v2313 = vmul.f32 %v2061, %v2279
  %v2314 = vmul.f32 %v2063, %v2280
  %v2315 = vmul.f32 %v2065, %v2280
  %v2316 = vmul.f32 %v2067, %v2281
  %v2317 = vmul.f32 %v2069, %v2281
  %v2318 = vmul.f32 %v2071, %v2282
  %v2319 = vmul.f32 %v2073, %v2282
  %v2320 = vmul.f32 %v2075, %v2283
  %v2321 = vmul.f32 %v2077, %v2283
  %v2322 = vmul.f32 %v2079, %v2284
  %v2323 = vmul.f32 %v2081, %v2284
  %v2324 = vmul.f32 %v2083, %v2285
  %v2325 = vmul.f32 %v2085, %v2285
  %v2326 = vmul.f32 %v2087, %v2286
  %v2327 = vmul.f32 %v2089, %v2286
  %v2328 = vmul.f32 %v2091, %v2287
  %v2329 = vmul.f32 %v2093, %v2287
  %v2330 = vmul.f32 %v2095, %v2288
  %v2331 = vmul.f32 %v2097, %v2288
  %v2332 = vmul.f32 %v2099, %v2289
  %v2333 = vmul.f32 %v2101, %v2289
  %v2334 = vmul.f32 %v2103, %v2290
  %v2335 = vmul.f32 %v2105, %v2290
  %v2336 = vmul.f32 %v2107, %v2291
  %v2337 = vmul.f32 %v2109, %v2291
  %v2338 = vmul.f32 %v2111, %v2292
  %v2339 = vmul.f32 %v2113, %v2292
  %v2340 = vmul.f32 %v2115, %v2293
  %v2341 = vmul.f32 %v2117, %v2293
  %v2342 = vmul.f32 %v2119, %v2294
  %v2343 = vmul.f32 %v2121, %v2294
  %v2344 = vmul.f32 %v2123, %v2295
  %v2345 = vmul.f32 %v2125, %v2295
  %v2346 = vmul.f32 %v2127, %v2296
  %v2347 = vmul.f32 %v2129, %v2296
  %v2348 = vmul.f32 %v2131, %v2297
  %v2349 = vmul.f32 %v2133, %v2297
  %v2350 = vmul.f32 %v2135, %v2298
  %v2351 = vmul.f32 %v2137, %v2298
  %v2352 = vmul.f32 %v2139, %v2299
  %v2353 = vmul.f32 %v2141, %v2299
  %v2354 = vmul.f32 %v2143, %v2300
  %v2355 = vmul.f32 %v2145, %v2300
  %v2356 = vmul.f32 %v2147, %v2301
  %v2357 = vmul.f32 %v2149, %v2301
  %v2358 = vmul.f32 %v2151, %v2302
  %v2359 = vmul.f32 %v2153, %v2302
  %v2360 = vmul.f32 %v2155, %v2303
  %v2361 = vmul.f32 %v2157, %v2303
  %v2362 = vmul.f32 %v2159, %v2304
  %v2363 = vmul.f32 %v2161, %v2304
  %v2364 = vmul.f32 %v2163, %v2305
  %v2365 = vmul.f32 %v2165, %v2305
  %v2366 = vmul.f32 %v2167, %v2306
  %v2367 = vmul.f32 %v2169, %v2306
  %v2368 = vmul.f32 %v2171, %v2307
  %v2369 = vmul.f32 %v2173, %v2307
  %v2370 = vmul.f32 %v2175, %v2308
  %v2371 = vmul.f32 %v2177, %v2308
  %v2372 = vmul.f32 %v2179, %v2309
  %v2373 = vmul.f32 %v2181, %v2309
  %v2374 = vpack.c.bf16 %v2312, %v2310
  %v2375 = vpack.c.bf16 %v2313, %v2311
  %v2376 = vpack.c.bf16 %v2316, %v2314
  %v2377 = vpack.c.bf16 %v2317, %v2315
  %v2378 = vpack.c.bf16 %v2320, %v2318
  %v2379 = vpack.c.bf16 %v2321, %v2319
  %v2380 = vpack.c.bf16 %v2324, %v2322
  %v2381 = vpack.c.bf16 %v2325, %v2323
  %v2382 = vpack.c.bf16 %v2328, %v2326
  %v2383 = vpack.c.bf16 %v2329, %v2327
  %v2384 = vpack.c.bf16 %v2332, %v2330
  %v2385 = vpack.c.bf16 %v2333, %v2331
  %v2386 = vpack.c.bf16 %v2336, %v2334
  %v2387 = vpack.c.bf16 %v2337, %v2335
  %v2388 = vpack.c.bf16 %v2340, %v2338
  %v2389 = vpack.c.bf16 %v2341, %v2339
  %v2390 = vpack.c.bf16 %v2344, %v2342
  %v2391 = vpack.c.bf16 %v2345, %v2343
  %v2392 = vpack.c.bf16 %v2348, %v2346
  %v2393 = vpack.c.bf16 %v2349, %v2347
  %v2394 = vpack.c.bf16 %v2352, %v2350
  %v2395 = vpack.c.bf16 %v2353, %v2351
  %v2396 = vpack.c.bf16 %v2356, %v2354
  %v2397 = vpack.c.bf16 %v2357, %v2355
  %v2398 = vpack.c.bf16 %v2360, %v2358
  %v2399 = vpack.c.bf16 %v2361, %v2359
  %v2400 = vpack.c.bf16 %v2364, %v2362
  %v2401 = vpack.c.bf16 %v2365, %v2363
  %v2402 = vpack.c.bf16 %v2368, %v2366
  %v2403 = vpack.c.bf16 %v2369, %v2367
  %v2404 = vpack.c.bf16 %v2372, %v2370
  %v2405 = vpack.c.bf16 %v2373, %v2371
  %v2406 = vpack.c.bf16 %v924, %v918
  %v2407 = vpack.c.bf16 %v936, %v930
  %v2408 = vpack.c.bf16 %v948, %v942
  %v2409 = vpack.c.bf16 %v960, %v954
  %v2410 = vpack.c.bf16 %v972, %v966
  %v2411 = vpack.c.bf16 %v984, %v978
  %v2412 = vpack.c.bf16 %v996, %v990
  %v2413 = vpack.c.bf16 %v1008, %v1002
  %v2414 = vpack.c.bf16 %v1020, %v1014
  %v2415 = vpack.c.bf16 %v1032, %v1026
  %v2416 = vpack.c.bf16 %v1044, %v1038
  %v2417 = vpack.c.bf16 %v1056, %v1050
  %v2418 = vpack.c.bf16 %v1068, %v1062
  %v2419 = vpack.c.bf16 %v1080, %v1074
  %v2420 = vpack.c.bf16 %v1092, %v1086
  %v2421 = vpack.c.bf16 %v1104, %v1098
  %2422 = vmatprep.subr.bf16.mxu0 0
  %2423 = vmatpush1.bf16.msra.mxu0 %v2406
  %2424 = vmatprep.subr.bf16.mxu0 0
  %2425 = vmatpush1.bf16.msra.mxu0 %v2407
  %2426 = vmatprep.subr.bf16.mxu0 0
  %2427 = vmatpush1.bf16.msra.mxu0 %v2408
  %2428 = vmatprep.subr.bf16.mxu0 0
  %2429 = vmatpush1.bf16.msra.mxu0 %v2409
  %2430 = vmatprep.subr.bf16.mxu0 0
  %2431 = vmatpush1.bf16.msra.mxu0 %v2410
  %2432 = vmatprep.subr.bf16.mxu0 0
  %2433 = vmatpush1.bf16.msra.mxu0 %v2411
  %2434 = vmatprep.subr.bf16.mxu0 0
  %2435 = vmatpush1.bf16.msra.mxu0 %v2412
  %2436 = vmatprep.subr.bf16.mxu0 0
  %2437 = vmatpush1.bf16.msra.mxu0 %v2413
  %2438 = vmatprep.subr.bf16.mxu0 0
  %2439 = vmatpush1.bf16.msra.mxu0 %v2414
  %2440 = vmatprep.subr.bf16.mxu0 0
  %2441 = vmatpush1.bf16.msra.mxu0 %v2415
  %2442 = vmatprep.subr.bf16.mxu0 0
  %2443 = vmatpush1.bf16.msra.mxu0 %v2416
  %2444 = vmatprep.subr.bf16.mxu0 0
  %2445 = vmatpush1.bf16.msra.mxu0 %v2417
  %2446 = vmatprep.subr.bf16.mxu0 0
  %2447 = vmatpush1.bf16.msra.mxu0 %v2418
  %2448 = vmatprep.subr.bf16.mxu0 0
  %2449 = vmatpush1.bf16.msra.mxu0 %v2419
  %2450 = vmatprep.subr.bf16.mxu0 0
  %2451 = vmatpush1.bf16.msra.mxu0 %v2420
  %2452 = vmatprep.subr.bf16.mxu0 0
  %2453 = vmatpush1.bf16.msra.mxu0 %v2421
  %2454 = vmatprep.mubr.bf16.mxu0 %v2375
  %2455 = vmatmul.mubr.bf16.gmra.mrb[0].mxu0 %v2374
  %v2456 = vpop.f32.mrb[0].mxu0
  %v2457 = vadd.f32 0.0, %v2456
  %v2458 = vpop.f32.mrb[0].mxu0
  %v2459 = vpop.f32.mrb[0].mxu0
  %v2460 = vadd.f32 0.0, %v2459
  %v2461 = vpop.f32.mrb[0].mxu0
  %2462 = vmatprep.mubr.bf16.mxu0 %v2377
  %2463 = vmatmul.mubr.bf16.gmra.mrb[0].mxu0 %v2376
  %v2464 = vpop.f32.mrb[0].mxu0
  %v2465 = vadd.f32 0.0, %v2464
  %v2466 = vpop.f32.mrb[0].mxu0
  %v2467 = vpop.f32.mrb[0].mxu0
  %v2468 = vadd.f32 0.0, %v2467
  %v2469 = vpop.f32.mrb[0].mxu0
  %2470 = vmatprep.mubr.bf16.mxu0 %v2379
  %2471 = vmatmul.mubr.bf16.gmra.mrb[0].mxu0 %v2378
  %v2472 = vpop.f32.mrb[0].mxu0
  %v2473 = vadd.f32 0.0, %v2472
  %v2474 = vpop.f32.mrb[0].mxu0
  %v2475 = vpop.f32.mrb[0].mxu0
  %v2476 = vadd.f32 0.0, %v2475
  %v2477 = vpop.f32.mrb[0].mxu0
  %2478 = vmatprep.mubr.bf16.mxu0 %v2381
  %2479 = vmatmul.mubr.bf16.gmra.mrb[0].mxu0 %v2380
  %v2480 = vpop.f32.mrb[0].mxu0
  %v2481 = vadd.f32 0.0, %v2480
  %v2482 = vpop.f32.mrb[0].mxu0
  %v2483 = vpop.f32.mrb[0].mxu0
  %v2484 = vadd.f32 0.0, %v2483
  %v2485 = vpop.f32.mrb[0].mxu0
  %2486 = vmatprep.mubr.bf16.mxu0 %v2383
  %2487 = vmatmul.mubr.bf16.gmra.mrb[0].mxu0 %v2382
  %v2488 = vpop.f32.mrb[0].mxu0
  %v2489 = vadd.f32 0.0, %v2488
  %v2490 = vpop.f32.mrb[0].mxu0
  %v2491 = vpop.f32.mrb[0].mxu0
  %v2492 = vadd.f32 0.0, %v2491
  %v2493 = vpop.f32.mrb[0].mxu0
  %2494 = vmatprep.mubr.bf16.mxu0 %v2385
  %2495 = vmatmul.mubr.bf16.gmra.mrb[0].mxu0 %v2384
  %v2496 = vpop.f32.mrb[0].mxu0
  %v2497 = vadd.f32 0.0, %v2496
  %v2498 = vpop.f32.mrb[0].mxu0
  %v2499 = vpop.f32.mrb[0].mxu0
  %v2500 = vadd.f32 0.0, %v2499
  %v2501 = vpop.f32.mrb[0].mxu0
  %2502 = vmatprep.mubr.bf16.mxu0 %v2387
  %2503 = vmatmul.mubr.bf16.gmra.mrb[0].mxu0 %v2386
  %v2504 = vpop.f32.mrb[0].mxu0
  %v2505 = vadd.f32 0.0, %v2504
  %v2506 = vpop.f32.mrb[0].mxu0
  %v2507 = vpop.f32.mrb[0].mxu0
  %v2508 = vadd.f32 0.0, %v2507
  %v2509 = vpop.f32.mrb[0].mxu0
  %2510 = vmatprep.mubr.bf16.mxu0 %v2389
  %2511 = vmatmul.mubr.bf16.gmra.mrb[0].mxu0 %v2388
  %v2512 = vpop.f32.mrb[0].mxu0
  %v2513 = vadd.f32 0.0, %v2512
  %v2514 = vpop.f32.mrb[0].mxu0
  %v2515 = vpop.f32.mrb[0].mxu0
  %v2516 = vadd.f32 0.0, %v2515
  %v2517 = vpop.f32.mrb[0].mxu0
  %2518 = vmatprep.mubr.bf16.mxu0 %v2391
  %2519 = vmatmul.mubr.bf16.gmra.mrb[0].mxu0 %v2390
  %v2520 = vpop.f32.mrb[0].mxu0
  %v2521 = vadd.f32 0.0, %v2520
  %v2522 = vpop.f32.mrb[0].mxu0
  %v2523 = vpop.f32.mrb[0].mxu0
  %v2524 = vadd.f32 0.0, %v2523
  %v2525 = vpop.f32.mrb[0].mxu0
  %2526 = vmatprep.mubr.bf16.mxu0 %v2393
  %2527 = vmatmul.mubr.bf16.gmra.mrb[0].mxu0 %v2392
  %v2528 = vpop.f32.mrb[0].mxu0
  %v2529 = vadd.f32 0.0, %v2528
  %v2530 = vpop.f32.mrb[0].mxu0
  %v2531 = vpop.f32.mrb[0].mxu0
  %v2532 = vadd.f32 0.0, %v2531
  %v2533 = vpop.f32.mrb[0].mxu0
  %2534 = vmatprep.mubr.bf16.mxu0 %v2395
  %2535 = vmatmul.mubr.bf16.gmra.mrb[0].mxu0 %v2394
  %v2536 = vpop.f32.mrb[0].mxu0
  %v2537 = vadd.f32 0.0, %v2536
  %v2538 = vpop.f32.mrb[0].mxu0
  %v2539 = vpop.f32.mrb[0].mxu0
  %v2540 = vadd.f32 0.0, %v2539
  %v2541 = vpop.f32.mrb[0].mxu0
  %2542 = vmatprep.mubr.bf16.mxu0 %v2397
  %2543 = vmatmul.mubr.bf16.gmra.mrb[0].mxu0 %v2396
  %v2544 = vpop.f32.mrb[0].mxu0
  %v2545 = vadd.f32 0.0, %v2544
  %v2546 = vpop.f32.mrb[0].mxu0
  %v2547 = vpop.f32.mrb[0].mxu0
  %v2548 = vadd.f32 0.0, %v2547
  %v2549 = vpop.f32.mrb[0].mxu0
  %2550 = vmatprep.mubr.bf16.mxu0 %v2399
  %2551 = vmatmul.mubr.bf16.gmra.mrb[0].mxu0 %v2398
  %v2552 = vpop.f32.mrb[0].mxu0
  %v2553 = vadd.f32 0.0, %v2552
  %v2554 = vpop.f32.mrb[0].mxu0
  %v2555 = vpop.f32.mrb[0].mxu0
  %v2556 = vadd.f32 0.0, %v2555
  %v2557 = vpop.f32.mrb[0].mxu0
  %2558 = vmatprep.mubr.bf16.mxu0 %v2401
  %2559 = vmatmul.mubr.bf16.gmra.mrb[0].mxu0 %v2400
  %v2560 = vpop.f32.mrb[0].mxu0
  %v2561 = vadd.f32 0.0, %v2560
  %v2562 = vpop.f32.mrb[0].mxu0
  %v2563 = vpop.f32.mrb[0].mxu0
  %v2564 = vadd.f32 0.0, %v2563
  %v2565 = vpop.f32.mrb[0].mxu0
  %2566 = vmatprep.mubr.bf16.mxu0 %v2403
  %2567 = vmatmul.mubr.bf16.gmra.mrb[0].mxu0 %v2402
  %v2568 = vpop.f32.mrb[0].mxu0
  %v2569 = vadd.f32 0.0, %v2568
  %v2570 = vpop.f32.mrb[0].mxu0
  %v2571 = vpop.f32.mrb[0].mxu0
  %v2572 = vadd.f32 0.0, %v2571
  %v2573 = vpop.f32.mrb[0].mxu0
  %2574 = vmatprep.mubr.bf16.mxu0 %v2405
  %2575 = vmatmul.mubr.bf16.gmra.mrb[0].mxu0 %v2404
  %v2576 = vpop.f32.mrb[0].mxu0
  %v2577 = vadd.f32 0.0, %v2576
  %v2578 = vpop.f32.mrb[0].mxu0
  %v2579 = vpop.f32.mrb[0].mxu0
  %v2580 = vadd.f32 0.0, %v2579
  %v2581 = vpop.f32.mrb[0].mxu0
  %2582 = vdwg.mxu0
  %2583 = vadd.xlane.f32.xlu0 %v2457
  %v2584 = vpop.xlane.xlu0 %2583
  %2585 = vadd.xlane.f32.xlu0 %v2460
  %v2586 = vpop.xlane.xlu0 %2585
  %2587 = vadd.xlane.f32.xlu0 %v2465
  %v2588 = vpop.xlane.xlu0 %2587
  %2589 = vadd.xlane.f32.xlu0 %v2468
  %v2590 = vpop.xlane.xlu0 %2589
  %2591 = vadd.xlane.f32.xlu0 %v2473
  %v2592 = vpop.xlane.xlu0 %2591
  %2593 = vadd.xlane.f32.xlu0 %v2476
  %v2594 = vpop.xlane.xlu0 %2593
  %2595 = vadd.xlane.f32.xlu0 %v2481
  %v2596 = vpop.xlane.xlu0 %2595
  %2597 = vadd.xlane.f32.xlu0 %v2484
  %v2598 = vpop.xlane.xlu0 %2597
  %2599 = vadd.xlane.f32.xlu0 %v2489
  %v2600 = vpop.xlane.xlu0 %2599
  %2601 = vadd.xlane.f32.xlu0 %v2492
  %v2602 = vpop.xlane.xlu0 %2601
  %2603 = vadd.xlane.f32.xlu0 %v2497
  %v2604 = vpop.xlane.xlu0 %2603
  %2605 = vadd.xlane.f32.xlu0 %v2500
  %v2606 = vpop.xlane.xlu0 %2605
  %2607 = vadd.xlane.f32.xlu0 %v2505
  %v2608 = vpop.xlane.xlu0 %2607
  %2609 = vadd.xlane.f32.xlu0 %v2508
  %v2610 = vpop.xlane.xlu0 %2609
  %2611 = vadd.xlane.f32.xlu0 %v2513
  %v2612 = vpop.xlane.xlu0 %2611
  %2613 = vadd.xlane.f32.xlu0 %v2516
  %v2614 = vpop.xlane.xlu0 %2613
  %2615 = vadd.xlane.f32.xlu0 %v2521
  %v2616 = vpop.xlane.xlu0 %2615
  %2617 = vadd.xlane.f32.xlu0 %v2524
  %v2618 = vpop.xlane.xlu0 %2617
  %2619 = vadd.xlane.f32.xlu0 %v2529
  %v2620 = vpop.xlane.xlu0 %2619
  %2621 = vadd.xlane.f32.xlu0 %v2532
  %v2622 = vpop.xlane.xlu0 %2621
  %2623 = vadd.xlane.f32.xlu0 %v2537
  %v2624 = vpop.xlane.xlu0 %2623
  %2625 = vadd.xlane.f32.xlu0 %v2540
  %v2626 = vpop.xlane.xlu0 %2625
  %2627 = vadd.xlane.f32.xlu0 %v2545
  %v2628 = vpop.xlane.xlu0 %2627
  %2629 = vadd.xlane.f32.xlu0 %v2548
  %v2630 = vpop.xlane.xlu0 %2629
  %2631 = vadd.xlane.f32.xlu0 %v2553
  %v2632 = vpop.xlane.xlu0 %2631
  %2633 = vadd.xlane.f32.xlu0 %v2556
  %v2634 = vpop.xlane.xlu0 %2633
  %2635 = vadd.xlane.f32.xlu0 %v2561
  %v2636 = vpop.xlane.xlu0 %2635
  %2637 = vadd.xlane.f32.xlu0 %v2564
  %v2638 = vpop.xlane.xlu0 %2637
  %2639 = vadd.xlane.f32.xlu0 %v2569
  %v2640 = vpop.xlane.xlu0 %2639
  %2641 = vadd.xlane.f32.xlu0 %v2572
  %v2642 = vpop.xlane.xlu0 %2641
  %2643 = vadd.xlane.f32.xlu0 %v2577
  %v2644 = vpop.xlane.xlu0 %2643
  %2645 = vadd.xlane.f32.xlu0 %v2580
  %v2646 = vpop.xlane.xlu0 %2645
  %v2647 = vmul.f32 %v2584, %v453
  %v2648 = vmul.f32 %v2586, %v453
  %v2649 = vmul.f32 %v2588, %v453
  %v2650 = vmul.f32 %v2590, %v453
  %v2651 = vmul.f32 %v2592, %v453
  %v2652 = vmul.f32 %v2594, %v453
  %v2653 = vmul.f32 %v2596, %v453
  %v2654 = vmul.f32 %v2598, %v453
  %v2655 = vmul.f32 %v2600, %v453
  %v2656 = vmul.f32 %v2602, %v453
  %v2657 = vmul.f32 %v2604, %v453
  %v2658 = vmul.f32 %v2606, %v453
  %v2659 = vmul.f32 %v2608, %v453
  %v2660 = vmul.f32 %v2610, %v453
  %v2661 = vmul.f32 %v2612, %v453
  %v2662 = vmul.f32 %v2614, %v453
  %v2663 = vmul.f32 %v2616, %v453
  %v2664 = vmul.f32 %v2618, %v453
  %v2665 = vmul.f32 %v2620, %v453
  %v2666 = vmul.f32 %v2622, %v453
  %v2667 = vmul.f32 %v2624, %v453
  %v2668 = vmul.f32 %v2626, %v453
  %v2669 = vmul.f32 %v2628, %v453
  %v2670 = vmul.f32 %v2630, %v453
  %v2671 = vmul.f32 %v2632, %v453
  %v2672 = vmul.f32 %v2634, %v453
  %v2673 = vmul.f32 %v2636, %v453
  %v2674 = vmul.f32 %v2638, %v453
  %v2675 = vmul.f32 %v2640, %v453
  %v2676 = vmul.f32 %v2642, %v453
  %v2677 = vmul.f32 %v2644, %v453
  %v2678 = vmul.f32 %v2646, %v453
  %v2679 = vsub.f32 %v2457, %v2647
  %v2680 = vsub.f32 %v2460, %v2648
  %v2681 = vsub.f32 %v2465, %v2649
  %v2682 = vsub.f32 %v2468, %v2650
  %v2683 = vsub.f32 %v2473, %v2651
  %v2684 = vsub.f32 %v2476, %v2652
  %v2685 = vsub.f32 %v2481, %v2653
  %v2686 = vsub.f32 %v2484, %v2654
  %v2687 = vsub.f32 %v2489, %v2655
  %v2688 = vsub.f32 %v2492, %v2656
  %v2689 = vsub.f32 %v2497, %v2657
  %v2690 = vsub.f32 %v2500, %v2658
  %v2691 = vsub.f32 %v2505, %v2659
  %v2692 = vsub.f32 %v2508, %v2660
  %v2693 = vsub.f32 %v2513, %v2661
  %v2694 = vsub.f32 %v2516, %v2662
  %v2695 = vsub.f32 %v2521, %v2663
  %v2696 = vsub.f32 %v2524, %v2664
  %v2697 = vsub.f32 %v2529, %v2665
  %v2698 = vsub.f32 %v2532, %v2666
  %v2699 = vsub.f32 %v2537, %v2667
  %v2700 = vsub.f32 %v2540, %v2668
  %v2701 = vsub.f32 %v2545, %v2669
  %v2702 = vsub.f32 %v2548, %v2670
  %v2703 = vsub.f32 %v2553, %v2671
  %v2704 = vsub.f32 %v2556, %v2672
  %v2705 = vsub.f32 %v2561, %v2673
  %v2706 = vsub.f32 %v2564, %v2674
  %v2707 = vsub.f32 %v2569, %v2675
  %v2708 = vsub.f32 %v2572, %v2676
  %v2709 = vsub.f32 %v2577, %v2677
  %v2710 = vsub.f32 %v2580, %v2678
  %v2711 = vmul.f32 %v2679, %v2679
  %v2712 = vmul.f32 %v2680, %v2680
  %v2713 = vmul.f32 %v2681, %v2681
  %v2714 = vmul.f32 %v2682, %v2682
  %v2715 = vmul.f32 %v2683, %v2683
  %v2716 = vmul.f32 %v2684, %v2684
  %v2717 = vmul.f32 %v2685, %v2685
  %v2718 = vmul.f32 %v2686, %v2686
  %v2719 = vmul.f32 %v2687, %v2687
  %v2720 = vmul.f32 %v2688, %v2688
  %v2721 = vmul.f32 %v2689, %v2689
  %v2722 = vmul.f32 %v2690, %v2690
  %v2723 = vmul.f32 %v2691, %v2691
  %v2724 = vmul.f32 %v2692, %v2692
  %v2725 = vmul.f32 %v2693, %v2693
  %v2726 = vmul.f32 %v2694, %v2694
  %v2727 = vmul.f32 %v2695, %v2695
  %v2728 = vmul.f32 %v2696, %v2696
  %v2729 = vmul.f32 %v2697, %v2697
  %v2730 = vmul.f32 %v2698, %v2698
  %v2731 = vmul.f32 %v2699, %v2699
  %v2732 = vmul.f32 %v2700, %v2700
  %v2733 = vmul.f32 %v2701, %v2701
  %v2734 = vmul.f32 %v2702, %v2702
  %v2735 = vmul.f32 %v2703, %v2703
  %v2736 = vmul.f32 %v2704, %v2704
  %v2737 = vmul.f32 %v2705, %v2705
  %v2738 = vmul.f32 %v2706, %v2706
  %v2739 = vmul.f32 %v2707, %v2707
  %v2740 = vmul.f32 %v2708, %v2708
  %v2741 = vmul.f32 %v2709, %v2709
  %v2742 = vmul.f32 %v2710, %v2710
  %2743 = vadd.xlane.f32.xlu0 %v2711
  %v2744 = vpop.xlane.xlu0 %2743
  %2745 = vadd.xlane.f32.xlu0 %v2712
  %v2746 = vpop.xlane.xlu0 %2745
  %2747 = vadd.xlane.f32.xlu0 %v2713
  %v2748 = vpop.xlane.xlu0 %2747
  %2749 = vadd.xlane.f32.xlu0 %v2714
  %v2750 = vpop.xlane.xlu0 %2749
  %2751 = vadd.xlane.f32.xlu0 %v2715
  %v2752 = vpop.xlane.xlu0 %2751
  %2753 = vadd.xlane.f32.xlu0 %v2716
  %v2754 = vpop.xlane.xlu0 %2753
  %2755 = vadd.xlane.f32.xlu0 %v2717
  %v2756 = vpop.xlane.xlu0 %2755
  %2757 = vadd.xlane.f32.xlu0 %v2718
  %v2758 = vpop.xlane.xlu0 %2757
  %2759 = vadd.xlane.f32.xlu0 %v2719
  %v2760 = vpop.xlane.xlu0 %2759
  %2761 = vadd.xlane.f32.xlu0 %v2720
  %v2762 = vpop.xlane.xlu0 %2761
  %2763 = vadd.xlane.f32.xlu0 %v2721
  %v2764 = vpop.xlane.xlu0 %2763
  %2765 = vadd.xlane.f32.xlu0 %v2722
  %v2766 = vpop.xlane.xlu0 %2765
  %2767 = vadd.xlane.f32.xlu0 %v2723
  %v2768 = vpop.xlane.xlu0 %2767
  %2769 = vadd.xlane.f32.xlu0 %v2724
  %v2770 = vpop.xlane.xlu0 %2769
  %2771 = vadd.xlane.f32.xlu0 %v2725
  %v2772 = vpop.xlane.xlu0 %2771
  %2773 = vadd.xlane.f32.xlu0 %v2726
  %v2774 = vpop.xlane.xlu0 %2773
  %2775 = vadd.xlane.f32.xlu0 %v2727
  %v2776 = vpop.xlane.xlu0 %2775
  %2777 = vadd.xlane.f32.xlu0 %v2728
  %v2778 = vpop.xlane.xlu0 %2777
  %2779 = vadd.xlane.f32.xlu0 %v2729
  %v2780 = vpop.xlane.xlu0 %2779
  %2781 = vadd.xlane.f32.xlu0 %v2730
  %v2782 = vpop.xlane.xlu0 %2781
  %2783 = vadd.xlane.f32.xlu0 %v2731
  %v2784 = vpop.xlane.xlu0 %2783
  %2785 = vadd.xlane.f32.xlu0 %v2732
  %v2786 = vpop.xlane.xlu0 %2785
  %2787 = vadd.xlane.f32.xlu0 %v2733
  %v2788 = vpop.xlane.xlu0 %2787
  %2789 = vadd.xlane.f32.xlu0 %v2734
  %v2790 = vpop.xlane.xlu0 %2789
  %2791 = vadd.xlane.f32.xlu0 %v2735
  %v2792 = vpop.xlane.xlu0 %2791
  %2793 = vadd.xlane.f32.xlu0 %v2736
  %v2794 = vpop.xlane.xlu0 %2793
  %2795 = vadd.xlane.f32.xlu0 %v2737
  %v2796 = vpop.xlane.xlu0 %2795
  %2797 = vadd.xlane.f32.xlu0 %v2738
  %v2798 = vpop.xlane.xlu0 %2797
  %2799 = vadd.xlane.f32.xlu0 %v2739
  %v2800 = vpop.xlane.xlu0 %2799
  %2801 = vadd.xlane.f32.xlu0 %v2740
  %v2802 = vpop.xlane.xlu0 %2801
  %2803 = vadd.xlane.f32.xlu0 %v2741
  %v2804 = vpop.xlane.xlu0 %2803
  %2805 = vadd.xlane.f32.xlu0 %v2742
  %v2806 = vpop.xlane.xlu0 %2805
  %v2807 = vmul.f32 %v2744, %v453
  %v2808 = vmul.f32 %v2746, %v453
  %v2809 = vmul.f32 %v2748, %v453
  %v2810 = vmul.f32 %v2750, %v453
  %v2811 = vmul.f32 %v2752, %v453
  %v2812 = vmul.f32 %v2754, %v453
  %v2813 = vmul.f32 %v2756, %v453
  %v2814 = vmul.f32 %v2758, %v453
  %v2815 = vmul.f32 %v2760, %v453
  %v2816 = vmul.f32 %v2762, %v453
  %v2817 = vmul.f32 %v2764, %v453
  %v2818 = vmul.f32 %v2766, %v453
  %v2819 = vmul.f32 %v2768, %v453
  %v2820 = vmul.f32 %v2770, %v453
  %v2821 = vmul.f32 %v2772, %v453
  %v2822 = vmul.f32 %v2774, %v453
  %v2823 = vmul.f32 %v2776, %v453
  %v2824 = vmul.f32 %v2778, %v453
  %v2825 = vmul.f32 %v2780, %v453
  %v2826 = vmul.f32 %v2782, %v453
  %v2827 = vmul.f32 %v2784, %v453
  %v2828 = vmul.f32 %v2786, %v453
  %v2829 = vmul.f32 %v2788, %v453
  %v2830 = vmul.f32 %v2790, %v453
  %v2831 = vmul.f32 %v2792, %v453
  %v2832 = vmul.f32 %v2794, %v453
  %v2833 = vmul.f32 %v2796, %v453
  %v2834 = vmul.f32 %v2798, %v453
  %v2835 = vmul.f32 %v2800, %v453
  %v2836 = vmul.f32 %v2802, %v453
  %v2837 = vmul.f32 %v2804, %v453
  %v2838 = vmul.f32 %v2806, %v453
  %v2839 = vadd.f32 %v2807, 1e-05
  %v2840 = vadd.f32 %v2808, 1e-05
  %v2841 = vadd.f32 %v2809, 1e-05
  %v2842 = vadd.f32 %v2810, 1e-05
  %v2843 = vadd.f32 %v2811, 1e-05
  %v2844 = vadd.f32 %v2812, 1e-05
  %v2845 = vadd.f32 %v2813, 1e-05
  %v2846 = vadd.f32 %v2814, 1e-05
  %v2847 = vadd.f32 %v2815, 1e-05
  %v2848 = vadd.f32 %v2816, 1e-05
  %v2849 = vadd.f32 %v2817, 1e-05
  %v2850 = vadd.f32 %v2818, 1e-05
  %v2851 = vadd.f32 %v2819, 1e-05
  %v2852 = vadd.f32 %v2820, 1e-05
  %v2853 = vadd.f32 %v2821, 1e-05
  %v2854 = vadd.f32 %v2822, 1e-05
  %v2855 = vadd.f32 %v2823, 1e-05
  %v2856 = vadd.f32 %v2824, 1e-05
  %v2857 = vadd.f32 %v2825, 1e-05
  %v2858 = vadd.f32 %v2826, 1e-05
  %v2859 = vadd.f32 %v2827, 1e-05
  %v2860 = vadd.f32 %v2828, 1e-05
  %v2861 = vadd.f32 %v2829, 1e-05
  %v2862 = vadd.f32 %v2830, 1e-05
  %v2863 = vadd.f32 %v2831, 1e-05
  %v2864 = vadd.f32 %v2832, 1e-05
  %v2865 = vadd.f32 %v2833, 1e-05
  %v2866 = vadd.f32 %v2834, 1e-05
  %v2867 = vadd.f32 %v2835, 1e-05
  %v2868 = vadd.f32 %v2836, 1e-05
  %v2869 = vadd.f32 %v2837, 1e-05
  %v2870 = vadd.f32 %v2838, 1e-05
  %v2871 = vrsqrt.pop %v2839
  %v2872 = vrsqrt.pop %v2840
  %v2873 = vrsqrt.pop %v2841
  %v2874 = vrsqrt.pop %v2842
  %v2875 = vrsqrt.pop %v2843
  %v2876 = vrsqrt.pop %v2844
  %v2877 = vrsqrt.pop %v2845
  %v2878 = vrsqrt.pop %v2846
  %v2879 = vrsqrt.pop %v2847
  %v2880 = vrsqrt.pop %v2848
  %v2881 = vrsqrt.pop %v2849
  %v2882 = vrsqrt.pop %v2850
  %v2883 = vrsqrt.pop %v2851
  %v2884 = vrsqrt.pop %v2852
  %v2885 = vrsqrt.pop %v2853
  %v2886 = vrsqrt.pop %v2854
  %v2887 = vrsqrt.pop %v2855
  %v2888 = vrsqrt.pop %v2856
  %v2889 = vrsqrt.pop %v2857
  %v2890 = vrsqrt.pop %v2858
  %v2891 = vrsqrt.pop %v2859
  %v2892 = vrsqrt.pop %v2860
  %v2893 = vrsqrt.pop %v2861
  %v2894 = vrsqrt.pop %v2862
  %v2895 = vrsqrt.pop %v2863
  %v2896 = vrsqrt.pop %v2864
  %v2897 = vrsqrt.pop %v2865
  %v2898 = vrsqrt.pop %v2866
  %v2899 = vrsqrt.pop %v2867
  %v2900 = vrsqrt.pop %v2868
  %v2901 = vrsqrt.pop %v2869
  %v2902 = vrsqrt.pop %v2870
  %v2903 = vmul.f32 %v2679, %v2871
  %v2904 = vmul.f32 %v2680, %v2872
  %v2905 = vmul.f32 %v2681, %v2873
  %v2906 = vmul.f32 %v2682, %v2874
  %v2907 = vmul.f32 %v2683, %v2875
  %v2908 = vmul.f32 %v2684, %v2876
  %v2909 = vmul.f32 %v2685, %v2877
  %v2910 = vmul.f32 %v2686, %v2878
  %v2911 = vmul.f32 %v2687, %v2879
  %v2912 = vmul.f32 %v2688, %v2880
  %v2913 = vmul.f32 %v2689, %v2881
  %v2914 = vmul.f32 %v2690, %v2882
  %v2915 = vmul.f32 %v2691, %v2883
  %v2916 = vmul.f32 %v2692, %v2884
  %v2917 = vmul.f32 %v2693, %v2885
  %v2918 = vmul.f32 %v2694, %v2886
  %v2919 = vmul.f32 %v2695, %v2887
  %v2920 = vmul.f32 %v2696, %v2888
  %v2921 = vmul.f32 %v2697, %v2889
  %v2922 = vmul.f32 %v2698, %v2890
  %v2923 = vmul.f32 %v2699, %v2891
  %v2924 = vmul.f32 %v2700, %v2892
  %v2925 = vmul.f32 %v2701, %v2893
  %v2926 = vmul.f32 %v2702, %v2894
  %v2927 = vmul.f32 %v2703, %v2895
  %v2928 = vmul.f32 %v2704, %v2896
  %v2929 = vmul.f32 %v2705, %v2897
  %v2930 = vmul.f32 %v2706, %v2898
  %v2931 = vmul.f32 %v2707, %v2899
  %v2932 = vmul.f32 %v2708, %v2900
  %v2933 = vmul.f32 %v2709, %v2901
  %v2934 = vmul.f32 %v2710, %v2902
  %v2935 = vmul.f32 %v2903, 0.02
  %v2936 = vmul.f32 %v2904, 0.02
  %v2937 = vmul.f32 %v2905, 0.02
  %v2938 = vmul.f32 %v2906, 0.02
  %v2939 = vmul.f32 %v2907, 0.02
  %v2940 = vmul.f32 %v2908, 0.02
  %v2941 = vmul.f32 %v2909, 0.02
  %v2942 = vmul.f32 %v2910, 0.02
  %v2943 = vmul.f32 %v2911, 0.02
  %v2944 = vmul.f32 %v2912, 0.02
  %v2945 = vmul.f32 %v2913, 0.02
  %v2946 = vmul.f32 %v2914, 0.02
  %v2947 = vmul.f32 %v2915, 0.02
  %v2948 = vmul.f32 %v2916, 0.02
  %v2949 = vmul.f32 %v2917, 0.02
  %v2950 = vmul.f32 %v2918, 0.02
  %v2951 = vmul.f32 %v2919, 0.02
  %v2952 = vmul.f32 %v2920, 0.02
  %v2953 = vmul.f32 %v2921, 0.02
  %v2954 = vmul.f32 %v2922, 0.02
  %v2955 = vmul.f32 %v2923, 0.02
  %v2956 = vmul.f32 %v2924, 0.02
  %v2957 = vmul.f32 %v2925, 0.02
  %v2958 = vmul.f32 %v2926, 0.02
  %v2959 = vmul.f32 %v2927, 0.02
  %v2960 = vmul.f32 %v2928, 0.02
  %v2961 = vmul.f32 %v2929, 0.02
  %v2962 = vmul.f32 %v2930, 0.02
  %v2963 = vmul.f32 %v2931, 0.02
  %v2964 = vmul.f32 %v2932, 0.02
  %v2965 = vmul.f32 %v2933, 0.02
  %v2966 = vmul.f32 %v2934, 0.02
  %v2967 = vmax.f32 %v2903, %v2935
  %v2968 = vmax.f32 %v2904, %v2936
  %v2969 = vmax.f32 %v2905, %v2937
  %v2970 = vmax.f32 %v2906, %v2938
  %v2971 = vmax.f32 %v2907, %v2939
  %v2972 = vmax.f32 %v2908, %v2940
  %v2973 = vmax.f32 %v2909, %v2941
  %v2974 = vmax.f32 %v2910, %v2942
  %v2975 = vmax.f32 %v2911, %v2943
  %v2976 = vmax.f32 %v2912, %v2944
  %v2977 = vmax.f32 %v2913, %v2945
  %v2978 = vmax.f32 %v2914, %v2946
  %v2979 = vmax.f32 %v2915, %v2947
  %v2980 = vmax.f32 %v2916, %v2948
  %v2981 = vmax.f32 %v2917, %v2949
  %v2982 = vmax.f32 %v2918, %v2950
  %v2983 = vmax.f32 %v2919, %v2951
  %v2984 = vmax.f32 %v2920, %v2952
  %v2985 = vmax.f32 %v2921, %v2953
  %v2986 = vmax.f32 %v2922, %v2954
  %v2987 = vmax.f32 %v2923, %v2955
  %v2988 = vmax.f32 %v2924, %v2956
  %v2989 = vmax.f32 %v2925, %v2957
  %v2990 = vmax.f32 %v2926, %v2958
  %v2991 = vmax.f32 %v2927, %v2959
  %v2992 = vmax.f32 %v2928, %v2960
  %v2993 = vmax.f32 %v2929, %v2961
  %v2994 = vmax.f32 %v2930, %v2962
  %v2995 = vmax.f32 %v2931, %v2963
  %v2996 = vmax.f32 %v2932, %v2964
  %v2997 = vmax.f32 %v2933, %v2965
  %v2998 = vmax.f32 %v2934, %v2966
  %v2999 = vmax.f32 %v2967, %v2968
  %v3000 = vmax.f32 %v2999, %v2969
  %v3001 = vmax.f32 %v3000, %v2970
  %v3002 = vmax.f32 %v3001, %v2971
  %v3003 = vmax.f32 %v3002, %v2972
  %v3004 = vmax.f32 %v3003, %v2973
  %v3005 = vmax.f32 %v3004, %v2974
  %v3006 = vrot.slane %v3005, 4
  %v3007 = vmax.f32 %v3005, %v3006
  %v3008 = vrot.slane %v3007, 2
  %v3009 = vmax.f32 %v3007, %v3008
  %v3010 = vrot.slane %v3009, 1
  %v3011 = vmax.f32 %v3009, %v3010
  %v3012 = vmax.f32 %v2975, %v2976
  %v3013 = vmax.f32 %v3012, %v2977
  %v3014 = vmax.f32 %v3013, %v2978
  %v3015 = vmax.f32 %v3014, %v2979
  %v3016 = vmax.f32 %v3015, %v2980
  %v3017 = vmax.f32 %v3016, %v2981
  %v3018 = vmax.f32 %v3017, %v2982
  %v3019 = vrot.slane %v3018, 4
  %v3020 = vmax.f32 %v3018, %v3019
  %v3021 = vrot.slane %v3020, 2
  %v3022 = vmax.f32 %v3020, %v3021
  %v3023 = vrot.slane %v3022, 1
  %v3024 = vmax.f32 %v3022, %v3023
  %v3025 = vmax.f32 %v2983, %v2984
  %v3026 = vmax.f32 %v3025, %v2985
  %v3027 = vmax.f32 %v3026, %v2986
  %v3028 = vmax.f32 %v3027, %v2987
  %v3029 = vmax.f32 %v3028, %v2988
  %v3030 = vmax.f32 %v3029, %v2989
  %v3031 = vmax.f32 %v3030, %v2990
  %v3032 = vrot.slane %v3031, 4
  %v3033 = vmax.f32 %v3031, %v3032
  %v3034 = vrot.slane %v3033, 2
  %v3035 = vmax.f32 %v3033, %v3034
  %v3036 = vrot.slane %v3035, 1
  %v3037 = vmax.f32 %v3035, %v3036
  %v3038 = vmax.f32 %v2991, %v2992
  %v3039 = vmax.f32 %v3038, %v2993
  %v3040 = vmax.f32 %v3039, %v2994
  %v3041 = vmax.f32 %v3040, %v2995
  %v3042 = vmax.f32 %v3041, %v2996
  %v3043 = vmax.f32 %v3042, %v2997
  %v3044 = vmax.f32 %v3043, %v2998
  %v3045 = vrot.slane %v3044, 4
  %v3046 = vmax.f32 %v3044, %v3045
  %v3047 = vrot.slane %v3046, 2
  %v3048 = vmax.f32 %v3046, %v3047
  %v3049 = vrot.slane %v3048, 1
  %v3050 = vmax.f32 %v3048, %v3049
  %v3051 = vld [vmem:[%s4] sm:$0xff]
  %v3052 = vld [vmem:[%s4 + $0x8] sm:$0xff]
  %v3053 = vld [vmem:[%s4 + $0x10] sm:$0xff]
  %v3054 = vld [vmem:[%s4 + $0x18] sm:$0xff]
  %v3055 = vld [vmem:[%s4 + $0x20] sm:$0xff]
  %v3056 = vld [vmem:[%s4 + $0x28] sm:$0xff]
  %v3057 = vld [vmem:[%s4 + $0x30] sm:$0xff]
  %v3058 = vld [vmem:[%s4 + $0x38] sm:$0xff]
  %v3059 = vld [vmem:[%s4 + $0x40] sm:$0xff]
  %v3060 = vld [vmem:[%s4 + $0x48] sm:$0xff]
  %v3061 = vld [vmem:[%s4 + $0x50] sm:$0xff]
  %v3062 = vld [vmem:[%s4 + $0x58] sm:$0xff]
  %v3063 = vld [vmem:[%s4 + $0x60] sm:$0xff]
  %v3064 = vld [vmem:[%s4 + $0x68] sm:$0xff]
  %v3065 = vld [vmem:[%s4 + $0x70] sm:$0xff]
  %v3066 = vld [vmem:[%s4 + $0x78] sm:$0xff]
  %v3067 = vld [vmem:[%s5 + $0x2] sm:$0x1]
  %v3068 = vlaneseq
  %v3069 = vshrl.u32 %v3068, 7
  %v3070 = vsub.s32 0, %v3069
  %v3071 = vrot.slane %v3067, %v3070
  %vm3076 = vcmask 1041409
  %v3077 = vsel %vm3076, %v3024, %v3011
  %vm3078 = vcmask 1042434
  %v3079 = vsel %vm3078, %v3037, %v3077
  %vm3080 = vcmask 1043459
  %v3081 = vsel %vm3080, %v3050, %v3079
  %3083 = vmatprep.subr.mxu0 0.0
  %3084 = vmatpush1.msra.mxu0 %v3051
  %3085 = vmatprep.subr.mxu0 0.0
  %3086 = vmatpush1.msra.mxu0 %v3052
  %3087 = vmatprep.subr.mxu0 0.0
  %3088 = vmatpush1.msra.mxu0 %v3053
  %3089 = vmatprep.subr.mxu0 0.0
  %3090 = vmatpush1.msra.mxu0 %v3054
  %3091 = vmatprep.subr.mxu0 0.0
  %3092 = vmatpush1.msra.mxu0 %v3055
  %3093 = vmatprep.subr.mxu0 0.0
  %3094 = vmatpush1.msra.mxu0 %v3056
  %3095 = vmatprep.subr.mxu0 0.0
  %3096 = vmatpush1.msra.mxu0 %v3057
  %3097 = vmatprep.subr.mxu0 0.0
  %3098 = vmatpush1.msra.mxu0 %v3058
  %3099 = vmatprep.subr.mxu0 0.0
  %3100 = vmatpush1.msra.mxu0 %v3059
  %3101 = vmatprep.subr.mxu0 0.0
  %3102 = vmatpush1.msra.mxu0 %v3060
  %3103 = vmatprep.subr.mxu0 0.0
  %3104 = vmatpush1.msra.mxu0 %v3061
  %3105 = vmatprep.subr.mxu0 0.0
  %3106 = vmatpush1.msra.mxu0 %v3062
  %3107 = vmatprep.subr.mxu0 0.0
  %3108 = vmatpush1.msra.mxu0 %v3063
  %3109 = vmatprep.subr.mxu0 0.0
  %3110 = vmatpush1.msra.mxu0 %v3064
  %3111 = vmatprep.subr.mxu0 0.0
  %3112 = vmatpush1.msra.mxu0 %v3065
  %3113 = vmatprep.subr.mxu0 0.0
  %3114 = vmatpush1.msra.mxu0 %v3066
  %3115 = vmatprep.subr.mxu0 0.0
  %3116 = vmatpush1.msra.mxu0 0.0
  %3117 = vmatprep.subr.mxu0 0.0
  %3118 = vmatpush1.msra.mxu0 0.0
  %3119 = vmatprep.subr.mxu0 0.0
  %3120 = vmatpush1.msra.mxu0 0.0
  %3121 = vmatprep.subr.mxu0 0.0
  %3122 = vmatpush1.msra.mxu0 0.0
  %3123 = vmatprep.subr.mxu0 0.0
  %3124 = vmatpush1.msra.mxu0 0.0
  %3125 = vmatprep.subr.mxu0 0.0
  %3126 = vmatpush1.msra.mxu0 0.0
  %3127 = vmatprep.subr.mxu0 0.0
  %3128 = vmatpush1.msra.mxu0 0.0
  %3129 = vmatprep.subr.mxu0 0.0
  %3130 = vmatpush1.msra.mxu0 0.0
  %3131 = vmatprep.subr.mxu0 0.0
  %3132 = vmatpush1.msra.mxu0 0.0
  %3133 = vmatprep.subr.mxu0 0.0
  %3134 = vmatpush1.msra.mxu0 0.0
  %3135 = vmatprep.subr.mxu0 0.0
  %3136 = vmatpush1.msra.mxu0 0.0
  %3137 = vmatprep.subr.mxu0 0.0
  %3138 = vmatpush1.msra.mxu0 0.0
  %3139 = vmatprep.subr.mxu0 0.0
  %3140 = vmatpush1.msra.mxu0 0.0
  %3141 = vmatprep.subr.mxu0 0.0
  %3142 = vmatpush1.msra.mxu0 0.0
  %3143 = vmatprep.subr.mxu0 0.0
  %3144 = vmatpush1.msra.mxu0 0.0
  %3145 = vmatprep.subr.mxu0 0.0
  %3146 = vmatpush1.msra.mxu0 0.0
  %3147 = vmatprep.mubr.f32.mxu0 0.0
  %3148 = vmatmul.mubr.f32.gmra.mrb[0].mxu0 %v3081
  %v3149 = vpop.f32.mrb[0].mxu0
  %v3150 = vadd.f32 %v3071, %v3149
  %v3151 = vpop.f32.mrb[0].mxu0
  %3152 = vdwg.mxu0
  %vm3153 = vcmask 11264
  %v3154 = vsel %vm3153, %v3150, -inf
  %3155 = vmax.xlane.f32.xlu0 %v3154
  %v3156 = vpop.xlane.xlu0 %3155
  %v3157 = vsub.f32 %v3150, %v3156
  %v3158 = vmul.f32 %v3157, 1.442695
  %v3159 = vpow.pop %v3158
  %v3160 = vsel %vm3153, %v3159, 0.0
  %3161 = vadd.xlane.f32.xlu0 %v3160
  %v3162 = vpop.xlane.xlu0 %3161
  %v3163 = vlog2.pop %v3162
  %v3164 = vmul.f32 %v3163, 0.6931472
  %v3165 = vsub.f32 %v3157, %v3164
  %3166 = vst.msk [vmem:[%s6] sm:$0xf] %vm3153, %v3165
  // Predicated region
  $region26: #{tpu_custom_call.1} parent=0 // pred_check
    _
  $region27: #{tpu_custom_call.1} parent=0 // pred_check_branch
    %3168 = sbr.rel (0) target = $region29
  $region28: #{tpu_custom_call.1} parent=0 // pred_region
    _
  $region29: #{tpu_custom_call.1} parent=0 // pred_fallthru
    _
  // Predicated region
  $region30: #{tpu_custom_call.1} parent=0 // pred_check
    _
  $region31: #{tpu_custom_call.1} parent=0 // pred_check_branch
    %3170 = sbr.rel (0) target = $region33
  $region32: #{tpu_custom_call.1} parent=0 // pred_region
    _
  $region33: #{tpu_custom_call.1} parent=0 // pred_fallthru
    _

</llo_original>
